<compile_context>
chip_gen: v7x
topology: tpu7x:2x2x1
jax: 0.10.0
libtpu: 0.0.40
codegen_flags: <defaults>
</compile_context>

<pallas_src>
import functools
import math

import jax
import jax.numpy as jnp
from jax.experimental import pallas as pl
from jax.experimental.pallas import tpu as pltpu


# ----------------------------------------------------------------------------- helpers
def _layer_norm(x, g, b, eps=1e-5):
    mu = jnp.mean(x, axis=-1, keepdims=True)
    var = jnp.mean((x - mu) ** 2, axis=-1, keepdims=True)
    return (x - mu) * jax.lax.rsqrt(var + eps) * g + b


def _pick_f_chunk(F):
    """FFN hidden-dim chunk size: bounds the live h1 range at large F (v7x VMEM)."""
    if F <= 1024:
        return F
    for c in (1024, 896, 768, 640, 512, 448, 384, 320, 256, 192, 128):
        if F % c == 0:
            return c
    return F


def _vmem_limit_bytes(BT, BS, D, F, T, S, f_chunk):
    """Size the scoped-VMEM limit from actual block/intermediate bytes (not hard-coded)."""
    w_layer = 2 * (D * 2 * D + 4 * D * D + D * F + F * D)     # bf16 weight bytes / layer
    small_layer = 4 * (F + 16 * D)                            # f32 per-layer vectors
    weights = 2 * (w_layer + small_layer)                     # double-buffered stream
    consts = 2 * (4 * BT * D + 2 * BT * D + 2 * 2 * BS * D + 4 * 2 * D)
    resident = 2 * 4 * BT * D + 2 * BT * D                    # out block + attn scratch
    B_ = max(BT // max(T, 1), 1)
    interm = (4 * (6 * BT * D + 2 * BS * D)                   # f32 activations / residuals
              + 4 * 2 * B_ * T * max(T, S)                    # per-head score tensors
              + 6 * BT * f_chunk)                             # FFN hidden chunk
    est = weights + consts + resident + interm + (8 << 20)    # + headroom
    try:
        info = pltpu.get_tpu_info()
        cap = int(getattr(info, "vmem_capacity_bytes", 64 << 20))
    except Exception:
        cap = 64 << 20
    return int(max(16 << 20, min(est, int(cap * 0.9))))


# ----------------------------------------------------------------------------- fused kernel
def _fused_decoder_kernel(num_heads, Bb, T, S, f_chunk,
                          tgt_ref, qpos_ref, mem_ref, mempos_ref, fn_ref,
                          sa_wqk_ref, sa_wv_ref, sa_wo_ref,
                          ca_wq_ref, ca_wk_ref, ca_wv_ref, ca_wo_ref,
                          l1w_ref, l1b_ref, l2w_ref, vec_ref,
                          out_ref, attn_scr):
    """grid = (batch_blocks, num_layers); activations carried in the resident out block."""
    l = pl.program_id(1)
    last = pl.num_programs(1) - 1
    D = out_ref.shape[-1]
    H = num_heads
    hd = D // H
    bf16 = jnp.bfloat16
    F = l1w_ref.shape[-1]

    @pl.when(l == 0)
    def _():
        out_ref[...] = tgt_ref[...]

    x = out_ref[...]                 # (Bb*T, D) f32 residual stream, resident across layers
    qpos = qpos_ref[...]             # (Bb*T, D) bf16
    mem = mem_ref[...]               # (Bb*S, D) bf16
    mempos = mempos_ref[...]         # (Bb*S, D) bf16 == memory + pos (precomputed once)

    # Packed per-layer (1, D) vectors: biases + LayerNorm affine params.
    vecs = vec_ref[0]                # (16, D) f32
    sa_bv, sa_bo = vecs[0:1, :], vecs[1:2, :]
    ca_bq, ca_bk = vecs[2:3, :], vecs[3:4, :]
    ca_bv, ca_bo = vecs[4:5, :], vecs[5:6, :]
    l2b = vecs[6:7, :]
    n1g, n1b = vecs[7:8, :], vecs[8:9, :]
    n2g, n2b = vecs[9:10, :], vecs[10:11, :]
    n3g, n3b = vecs[11:12, :], vecs[12:13, :]
    sa_bq, sa_bk = vecs[13:14, :], vecs[14:15, :]

    def mm(a_bf, w_ref):
        # bf16 operands, f32 accumulation on the MXU; weights pre-transposed for a @ W.
        return jnp.dot(a_bf, w_ref[0], preferred_element_type=jnp.float32)

    def attn(q_bf, k_bf, v_bf, sk):
        # q: (Bb*T, D), k/v: (Bb*sk, D), all bf16.  Heads are statically unrolled; each
        # head's score / weighted-sum matmul is batched over Bb via leading-batch einsums.
        # Head outputs are written straight into the bf16 scratch (no list + concatenate).
        q3 = q_bf.reshape(Bb, T, D)
        k3 = k_bf.reshape(Bb, sk, D)
        v3 = v_bf.reshape(Bb, sk, D)
        for h in range(H):                       # static unroll, H small
            sl = slice(h * hd, (h + 1) * hd)
            s = jnp.einsum('btd,bsd->bts', q3[:, :, sl], k3[:, :, sl],
                           preferred_element_type=jnp.float32)
            s = s - jnp.max(s, axis=-1, keepdims=True)
            p = jnp.exp(s)
            p = p * pl.reciprocal(jnp.sum(p, axis=-1, keepdims=True), approx=True)
            o = jnp.einsum('bts,bsd->btd', p.astype(bf16), v3[:, :, sl],
                           preferred_element_type=jnp.float32)
            attn_scr[:, sl] = o.reshape(Bb * T, hd).astype(bf16)
        return attn_scr[...]                     # (Bb*T, D) bf16

    # ---- self-attention: q = k = x + query_pos, v = x (post-norm residual) ----
    x_bf = x.astype(bf16)                        # hoisted cast (one per stage)
    qk = mm(x_bf + qpos, sa_wqk_ref)             # packed Q|K projection (scale folded)
    q_bf = (qk[:, :D] + sa_bq).astype(bf16)
    k_bf = (qk[:, D:] + sa_bk).astype(bf16)
    v_bf = (mm(x_bf, sa_wv_ref) + sa_bv).astype(bf16)
    sa = mm(attn(q_bf, k_bf, v_bf, T), sa_wo_ref) + sa_bo
    x = _layer_norm(x + sa, n1g, n1b)

    # ---- cross-attention: q = x + query_pos, k = memory + pos, v = memory ----
    q_bf = (mm(x.astype(bf16) + qpos, ca_wq_ref) + ca_bq).astype(bf16)
    k_bf = (mm(mempos, ca_wk_ref) + ca_bk).astype(bf16)   # kept bf16 (large at ACT scale)
    v_bf = (mm(mem, ca_wv_ref) + ca_bv).astype(bf16)
    ca = mm(attn(q_bf, k_bf, v_bf, S), ca_wo_ref) + ca_bo
    x = _layer_norm(x + ca, n2g, n2b)

    # ---- feed-forward: linear1 -> ReLU -> linear2 (dropout = identity, eval mode),
    #      chunked along F so the bf16 hidden activation live range stays bounded ----
    x2_bf = x.astype(bf16)
    ff = None
    for c in range(F // f_chunk):                # static unroll
        cs = slice(c * f_chunk, (c + 1) * f_chunk)
        h1 = jnp.maximum(
            jnp.dot(x2_bf, l1w_ref[0, :, cs],
                    preferred_element_type=jnp.float32) + l1b_ref[0, :, cs],
            0.0).astype(bf16)
        part = jnp.dot(h1, l2w_ref[0, cs, :], preferred_element_type=jnp.float32)
        ff = part if ff is None else ff + part
    x = _layer_norm(x + ff + l2b, n3g, n3b)

    @pl.when(l != last)
    def _():
        out_ref[...] = x                          # carry in the resident output block

    @pl.when(l == last)                           # final LayerNorm, single HBM writeback
    def _():
        fn = fn_ref[...]
        out_ref[...] = _layer_norm(x, fn[0:1, :], fn[1:2, :])


# ----------------------------------------------------------------------------- wrapper
def _decoder_forward(tgt2, qpos2, mem2, mempos2, params, num_heads, B, T, S, nb):
    D = tgt2.shape[-1]
    F = params["l1w"].shape[-1]
    L = params["l1w"].shape[0]
    Bb = B // nb
    BT, BS = Bb * T, Bb * S
    f_chunk = _pick_f_chunk(F)

    def cspec(rows):      # per-batch-block input, constant across the layer axis
        return pl.BlockSpec((rows, D), lambda b, l: (b, 0))

    def gspec(shape):     # truly global (fetched once)
        return pl.BlockSpec(shape, lambda b, l: (0,) * len(shape))

    def lspec(shape2d):   # per-layer weight, streamed (double-buffered) along layer axis
        return pl.BlockSpec((1,) + shape2d, lambda b, l: (l, 0, 0))

    # TODO(synk): constant inputs are still double-buffered by the pipeline; a one-time
    #             DMA from pl.ANY would save ~(BT + 2*BS)*D bytes of VMEM on v7x.
    in_specs = [
        cspec(BT),             # tgt2      (f32)
        cspec(BT),             # qpos2     (bf16)
        cspec(BS),             # mem2      (bf16)
        cspec(BS),             # mempos2   (bf16)
        gspec((2, D)),         # final norm (g, b)
        lspec((D, 2 * D)),     # sa_wqk
        lspec((D, D)),         # sa_wv
        lspec((D, D)),         # sa_wo
        lspec((D, D)),         # ca_wq
        lspec((D, D)),         # ca_wk
        lspec((D, D)),         # ca_wv
        lspec((D, D)),         # ca_wo
        lspec((D, F)),         # l1w
        lspec((1, F)),         # l1b
        lspec((F, D)),         # l2w
        lspec((16, D)),        # packed per-layer bias / norm vectors
    ]

    kernel = functools.partial(_fused_decoder_kernel, num_heads, Bb, T, S, f_chunk)
    return pl.pallas_call(
        kernel,
        out_shape=jax.ShapeDtypeStruct((B * T, D), jnp.float32),
        grid=(nb, L),
        in_specs=in_specs,
        out_specs=pl.BlockSpec((BT, D), lambda b, l: (b, 0)),
        scratch_shapes=[pltpu.VMEM((BT, D), jnp.bfloat16)],   # per-head attn output slab
        compiler_params=pltpu.CompilerParams(
            dimension_semantics=("parallel", "arbitrary"),
            vmem_limit_bytes=_vmem_limit_bytes(BT, BS, D, F, T, S, f_chunk)),
    )(tgt2, qpos2, mem2, mempos2, params["fn"],
      params["sa_wqk"], params["sa_wv"], params["sa_wo"],
      params["ca_wq"], params["ca_wk"], params["ca_wv"], params["ca_wo"],
      params["l1w"], params["l1b"], params["l2w"], params["vecs"])


class TransformerDecoderPallas:
    """Mirrors robobase TransformerDecoder(decoder_layer, num_layers, norm=LayerNorm(d),
    return_intermediate=False) in eval mode (dropout = identity).
    Set batch_blocks=2 on v7x (2 TensorCores/chip) when B is even."""

    def __init__(self, d_model, num_heads, dim_feedforward, num_layers, key,
                 batch_blocks=1):
        assert d_model % num_heads == 0
        self.d_model = d_model
        self.num_heads = num_heads
        self.num_layers = num_layers
        self.batch_blocks = batch_blocks
        D, F = d_model, dim_feedforward
        hd = D // num_heads
        scale = 1.0 / math.sqrt(hd)
        s = 0.02
        keys = jax.random.split(key, num_layers)

        sa_wqk, sa_wv, sa_wo = [], [], []
        ca_wq, ca_wk, ca_wv, ca_wo = [], [], [], []
        l1w, l1b, l2w, vecs = [], [], [], []
        for li in range(num_layers):
            ks = jax.random.split(keys[li], 12)
            # Raw parameters in PyTorch layout (packed in_proj, out_proj, linear1/2).
            sa_in_w = jax.random.normal(ks[0], (3 * D, D), jnp.float32) * s
            sa_in_b = jax.random.normal(ks[1], (3 * D,), jnp.float32) * s
            sa_out_w = jax.random.normal(ks[2], (D, D), jnp.float32) * s
            sa_out_b = jax.random.normal(ks[3], (D,), jnp.float32) * s
            ca_in_w = jax.random.normal(ks[4], (3 * D, D), jnp.float32) * s
            ca_in_b = jax.random.normal(ks[5], (3 * D,), jnp.float32) * s
            ca_out_w = jax.random.normal(ks[6], (D, D), jnp.float32) * s
            ca_out_b = jax.random.normal(ks[7], (D,), jnp.float32) * s
            w1 = jax.random.normal(ks[8], (F, D), jnp.float32) * s
            b1 = jax.random.normal(ks[9], (F,), jnp.float32) * s
            w2 = jax.random.normal(ks[10], (D, F), jnp.float32) * s
            b2 = jax.random.normal(ks[11], (D,), jnp.float32) * s
            n1g_, n1b_ = jnp.ones((D,), jnp.float32), jnp.zeros((D,), jnp.float32)
            n2g_, n2b_ = jnp.ones((D,), jnp.float32), jnp.zeros((D,), jnp.float32)
            n3g_, n3b_ = jnp.ones((D,), jnp.float32), jnp.zeros((D,), jnp.float32)

            # Host-side preprocessing: split packed in_proj, transpose for x @ W,
            # fold the 1/sqrt(hd) softmax scale into the query projection.
            wq, wk, wv = sa_in_w[:D], sa_in_w[D:2 * D], sa_in_w[2 * D:]
            bq, bk, bv = sa_in_b[:D], sa_in_b[D:2 * D], sa_in_b[2 * D:]
            sa_wqk.append(jnp.concatenate([wq.T * scale, wk.T], axis=1))   # (D, 2D)
            sa_wv.append(wv.T)
            sa_wo.append(sa_out_w.T)

            cwq, cwk, cwv = ca_in_w[:D], ca_in_w[D:2 * D], ca_in_w[2 * D:]
            cbq, cbk, cbv = ca_in_b[:D], ca_in_b[D:2 * D], ca_in_b[2 * D:]
            ca_wq.append(cwq.T * scale)
            ca_wk.append(cwk.T)
            ca_wv.append(cwv.T)
            ca_wo.append(ca_out_w.T)

            l1w.append(w1.T)                # (D, F)
            l1b.append(b1[None, :])         # (1, F)
            l2w.append(w2.T)                # (F, D)

            zero = jnp.zeros((D,), jnp.float32)
            vecs.append(jnp.stack([bv, sa_out_b,
                                   cbq * scale, cbk, cbv, ca_out_b,
                                   b2,
                                   n1g_, n1b_, n2g_, n2b_, n3g_, n3b_,
                                   bq * scale, bk, zero], axis=0))          # (16, D)

        bf = jnp.bfloat16
        self.params = {
            "sa_wqk": jnp.stack(sa_wqk).astype(bf),   # (L, D, 2D)
            "sa_wv": jnp.stack(sa_wv).astype(bf),     # (L, D, D)
            "sa_wo": jnp.stack(sa_wo).astype(bf),
            "ca_wq": jnp.stack(ca_wq).astype(bf),
            "ca_wk": jnp.stack(ca_wk).astype(bf),
            "ca_wv": jnp.stack(ca_wv).astype(bf),
            "ca_wo": jnp.stack(ca_wo).astype(bf),
            "l1w": jnp.stack(l1w).astype(bf),         # (L, D, F)
            "l1b": jnp.stack(l1b),                    # (L, 1, F) f32
            "l2w": jnp.stack(l2w).astype(bf),         # (L, F, D)
            "vecs": jnp.stack(vecs),                  # (L, 16, D) f32
            "fn": jnp.stack([jnp.ones((D,), jnp.float32),
                             jnp.zeros((D,), jnp.float32)], axis=0),        # (2, D)
        }

    def __call__(self, tgt, memory, pos=None, query_pos=None):
        # tgt: (T, B, D), memory: (S, B, D) — PyTorch seq-major convention.
        # TODO(synk): tgt_mask / memory_mask / key-padding masks not implemented
        #             (the ACT decoder passes None for all of them).
        T, B, D = tgt.shape
        S = memory.shape[0]
        if pos is None:
            pos = jnp.zeros((S, B, D), jnp.float32)
        if query_pos is None:
            query_pos = jnp.zeros((T, B, D), jnp.float32)

        bf = jnp.bfloat16
        tgt2 = jnp.transpose(tgt, (1, 0, 2)).reshape(B * T, D)               # f32 residual
        mem_f = jnp.transpose(memory, (1, 0, 2)).reshape(B * S, D)
        qpos2 = jnp.transpose(query_pos, (1, 0, 2)).reshape(B * T, D).astype(bf)
        mempos2 = (mem_f + jnp.transpose(pos, (1, 0, 2)).reshape(B * S, D)).astype(bf)
        mem2 = mem_f.astype(bf)

        nb = self.batch_blocks
        if nb < 1 or B % nb != 0:
            nb = 1
        if nb > 1 and (((B // nb) * T) % 8 != 0 or ((B // nb) * S) % 8 != 0):
            nb = 1   # keep (8, 128)-legal blocks

        out2 = _decoder_forward(tgt2, qpos2, mem2, mempos2, self.params,
                                self.num_heads, B, T, S, nb)      # (B*T, D)
        out = out2.reshape(B, T, D).transpose(1, 0, 2)            # (T, B, D)
        return out[None]                                          # (1, T, B, D)


# ----------------------------------------------------------------------------- main
if __name__ == "__main__":
    key = jax.random.PRNGKey(0)
    T, S, B, D, H, F, L = 8, 16, 2, 32, 4, 64, 2

    k_tgt, k_mem, k_pos, k_qpos, k_params = jax.random.split(key, 5)
    tgt = jax.random.normal(k_tgt, (T, B, D), jnp.float32)
    memory = jax.random.normal(k_mem, (S, B, D), jnp.float32)
    pos = jax.random.normal(k_pos, (S, B, D), jnp.float32)
    query_pos = jax.random.normal(k_qpos, (T, B, D), jnp.float32)

    decoder = TransformerDecoderPallas(d_model=D, num_heads=H,
                                       dim_feedforward=F, num_layers=L, key=k_params)
    out = decoder(tgt, memory, pos=pos, query_pos=query_pos)
    out = jax.block_until_ready(out)
    assert out.shape == (1, T, B, D), out.shape
    assert bool(jnp.all(jnp.isfinite(out)))
    print("KERNEL_OK")
</pallas_src>

<mosaic_0001>
module attributes {stable_mosaic.version = 11 : i64} {
  func.func @_fused_decoder_kernel(%arg0: i32, %arg1: i32, %arg2: memref<16x32xf32, #tpu.memory_space<vmem>>, %arg3: memref<16x32xbf16, #tpu.memory_space<vmem>>, %arg4: memref<32x32xbf16, #tpu.memory_space<vmem>>, %arg5: memref<32x32xbf16, #tpu.memory_space<vmem>>, %arg6: memref<2x32xf32, #tpu.memory_space<vmem>>, %arg7: memref<1x32x64xbf16, #tpu.memory_space<vmem>>, %arg8: memref<1x32x32xbf16, #tpu.memory_space<vmem>>, %arg9: memref<1x32x32xbf16, #tpu.memory_space<vmem>>, %arg10: memref<1x32x32xbf16, #tpu.memory_space<vmem>>, %arg11: memref<1x32x32xbf16, #tpu.memory_space<vmem>>, %arg12: memref<1x32x32xbf16, #tpu.memory_space<vmem>>, %arg13: memref<1x32x32xbf16, #tpu.memory_space<vmem>>, %arg14: memref<1x32x64xbf16, #tpu.memory_space<vmem>>, %arg15: memref<1x1x64xf32, #tpu.memory_space<vmem>>, %arg16: memref<1x64x32xbf16, #tpu.memory_space<vmem>>, %arg17: memref<1x16x32xf32, #tpu.memory_space<vmem>>, %arg18: memref<16x32xf32, #tpu.memory_space<vmem>>, %arg19: memref<16x32xbf16, #tpu.memory_space<vmem>>) attributes {dimension_semantics = [#tpu.dimension_semantics<parallel>, #tpu.dimension_semantics<arbitrary>], iteration_bounds = array<i64: 1, 2>, scalar_prefetch = 0 : i64, scratch_operands = 1 : i64, tpu.core_type = #tpu.core_type<tc>, window_params = [{transform_indices = @transform_0, window_bounds = array<i64: 16, 32>}, {transform_indices = @transform_1, window_bounds = array<i64: 16, 32>}, {transform_indices = @transform_2, window_bounds = array<i64: 32, 32>}, {transform_indices = @transform_3, window_bounds = array<i64: 32, 32>}, {pipeline_mode = #tpu.pipeline_mode<synchronous>, transform_indices = @transform_4, window_bounds = array<i64: 2, 32>}, {transform_indices = @transform_5, window_bounds = array<i64: 1, 32, 64>}, {transform_indices = @transform_6, window_bounds = array<i64: 1, 32, 32>}, {transform_indices = @transform_7, window_bounds = array<i64: 1, 32, 32>}, {transform_indices = @transform_8, window_bounds = array<i64: 1, 32, 32>}, {transform_indices = @transform_9, window_bounds = array<i64: 1, 32, 32>}, {transform_indices = @transform_10, window_bounds = array<i64: 1, 32, 32>}, {transform_indices = @transform_11, window_bounds = array<i64: 1, 32, 32>}, {transform_indices = @transform_12, window_bounds = array<i64: 1, 32, 64>}, {transform_indices = @transform_13, window_bounds = array<i64: 1, 1, 64>}, {transform_indices = @transform_14, window_bounds = array<i64: 1, 64, 32>}, {transform_indices = @transform_15, window_bounds = array<i64: 1, 16, 32>}, {transform_indices = @transform_16, window_bounds = array<i64: 16, 32>}]} {
    %c0_i32 = arith.constant 0 : i32
    %0 = arith.cmpi eq, %arg1, %c0_i32 : i32
    %1 = arith.extui %0 : i1 to i32
    %c0_i32_0 = arith.constant 0 : i32
    %2 = arith.cmpi ne, %1, %c0_i32_0 : i32
    scf.if %2 {
      %c0_117 = arith.constant 0 : index
      %c0_118 = arith.constant 0 : index
      %324 = vector.load %arg2[%c0_117, %c0_118] : memref<16x32xf32, #tpu.memory_space<vmem>>, vector<16x32xf32>
      %c0_119 = arith.constant 0 : index
      %c0_120 = arith.constant 0 : index
      %325 = vector.load %arg18[%c0_119, %c0_120] : memref<16x32xf32, #tpu.memory_space<vmem>>, vector<16x32xf32>
      tpu.vector_store %arg18[%c0_119, %c0_120], %324 {strides = array<i32>} : memref<16x32xf32, #tpu.memory_space<vmem>>, vector<16x32xf32>,
    } else {
    }
    %c0 = arith.constant 0 : index
    %c0_1 = arith.constant 0 : index
    %3 = vector.load %arg18[%c0, %c0_1] : memref<16x32xf32, #tpu.memory_space<vmem>>, vector<16x32xf32>
    %c0_2 = arith.constant 0 : index
    %c0_3 = arith.constant 0 : index
    %4 = vector.load %arg3[%c0_2, %c0_3] : memref<16x32xbf16, #tpu.memory_space<vmem>>, vector<16x32xbf16>
    %c0_4 = arith.constant 0 : index
    %c0_5 = arith.constant 0 : index
    %5 = vector.load %arg4[%c0_4, %c0_5] : memref<32x32xbf16, #tpu.memory_space<vmem>>, vector<32x32xbf16>
    %c0_6 = arith.constant 0 : index
    %c0_7 = arith.constant 0 : index
    %6 = vector.load %arg5[%c0_6, %c0_7] : memref<32x32xbf16, #tpu.memory_space<vmem>>, vector<32x32xbf16>
    %c0_8 = arith.constant 0 : index
    %c0_9 = arith.constant 0 : index
    %c0_10 = arith.constant 0 : index
    %7 = vector.load %arg17[%c0_8, %c0_9, %c0_10] : memref<1x16x32xf32, #tpu.memory_space<vmem>>, vector<1x16x32xf32>
    %8 = vector.shape_cast %7 : vector<1x16x32xf32> to vector<16x32xf32>
    %9 = vector.extract_strided_slice %8 {offsets = [0, 0], sizes = [1, 32], strides = [1, 1]} : vector<16x32xf32> to vector<1x32xf32>
    %10 = vector.extract_strided_slice %8 {offsets = [1, 0], sizes = [1, 32], strides = [1, 1]} : vector<16x32xf32> to vector<1x32xf32>
    %11 = vector.extract_strided_slice %8 {offsets = [2, 0], sizes = [1, 32], strides = [1, 1]} : vector<16x32xf32> to vector<1x32xf32>
    %12 = vector.extract_strided_slice %8 {offsets = [3, 0], sizes = [1, 32], strides = [1, 1]} : vector<16x32xf32> to vector<1x32xf32>
    %13 = vector.extract_strided_slice %8 {offsets = [4, 0], sizes = [1, 32], strides = [1, 1]} : vector<16x32xf32> to vector<1x32xf32>
    %14 = vector.extract_strided_slice %8 {offsets = [5, 0], sizes = [1, 32], strides = [1, 1]} : vector<16x32xf32> to vector<1x32xf32>
    %15 = vector.extract_strided_slice %8 {offsets = [6, 0], sizes = [1, 32], strides = [1, 1]} : vector<16x32xf32> to vector<1x32xf32>
    %16 = vector.extract_strided_slice %8 {offsets = [7, 0], sizes = [1, 32], strides = [1, 1]} : vector<16x32xf32> to vector<1x32xf32>
    %17 = vector.extract_strided_slice %8 {offsets = [8, 0], sizes = [1, 32], strides = [1, 1]} : vector<16x32xf32> to vector<1x32xf32>
    %18 = vector.extract_strided_slice %8 {offsets = [9, 0], sizes = [1, 32], strides = [1, 1]} : vector<16x32xf32> to vector<1x32xf32>
    %19 = vector.extract_strided_slice %8 {offsets = [10, 0], sizes = [1, 32], strides = [1, 1]} : vector<16x32xf32> to vector<1x32xf32>
    %20 = vector.extract_strided_slice %8 {offsets = [11, 0], sizes = [1, 32], strides = [1, 1]} : vector<16x32xf32> to vector<1x32xf32>
    %21 = vector.extract_strided_slice %8 {offsets = [12, 0], sizes = [1, 32], strides = [1, 1]} : vector<16x32xf32> to vector<1x32xf32>
    %22 = vector.extract_strided_slice %8 {offsets = [13, 0], sizes = [1, 32], strides = [1, 1]} : vector<16x32xf32> to vector<1x32xf32>
    %23 = vector.extract_strided_slice %8 {offsets = [14, 0], sizes = [1, 32], strides = [1, 1]} : vector<16x32xf32> to vector<1x32xf32>
    %24 = arith.truncf %3 : vector<16x32xf32> to vector<16x32xbf16>
    %25 = arith.addf %24, %4 : vector<16x32xbf16>
    %c0_11 = arith.constant 0 : index
    %c0_12 = arith.constant 0 : index
    %c0_13 = arith.constant 0 : index
    %26 = vector.load %arg7[%c0_11, %c0_12, %c0_13] : memref<1x32x64xbf16, #tpu.memory_space<vmem>>, vector<1x32x64xbf16>
    %27 = vector.shape_cast %26 : vector<1x32x64xbf16> to vector<32x64xbf16>
    %cst = arith.constant dense<0.000000e+00> : vector<16x64xf32>
    %28 = tpu.matmul %25, %27, %cst {dimension_numbers = #tpu.dot_dimension_numbers<[1], [0], [0], [1], [0, 0, 1, 1], [], []>} : vector<16x32xbf16>, vector<32x64xbf16>, vector<16x64xf32> -> vector<16x64xf32>
    %29 = vector.extract_strided_slice %28 {offsets = [0, 0], sizes = [16, 32], strides = [1, 1]} : vector<16x64xf32> to vector<16x32xf32>
    %30 = vector.broadcast %22 : vector<1x32xf32> to vector<16x32xf32>
    %31 = arith.addf %29, %30 : vector<16x32xf32>
    %32 = arith.truncf %31 : vector<16x32xf32> to vector<16x32xbf16>
    %33 = vector.extract_strided_slice %28 {offsets = [0, 32], sizes = [16, 32], strides = [1, 1]} : vector<16x64xf32> to vector<16x32xf32>
    %34 = vector.broadcast %23 : vector<1x32xf32> to vector<16x32xf32>
    %35 = arith.addf %33, %34 : vector<16x32xf32>
    %36 = arith.truncf %35 : vector<16x32xf32> to vector<16x32xbf16>
    %c0_14 = arith.constant 0 : index
    %c0_15 = arith.constant 0 : index
    %c0_16 = arith.constant 0 : index
    %37 = vector.load %arg8[%c0_14, %c0_15, %c0_16] : memref<1x32x32xbf16, #tpu.memory_space<vmem>>, vector<1x32x32xbf16>
    %38 = vector.shape_cast %37 : vector<1x32x32xbf16> to vector<32x32xbf16>
    %cst_17 = arith.constant dense<0.000000e+00> : vector<16x32xf32>
    %39 = tpu.matmul %24, %38, %cst_17 {dimension_numbers = #tpu.dot_dimension_numbers<[1], [0], [0], [1], [0, 0, 1, 1], [], []>} : vector<16x32xbf16>, vector<32x32xbf16>, vector<16x32xf32> -> vector<16x32xf32>
    %40 = vector.broadcast %9 : vector<1x32xf32> to vector<16x32xf32>
    %41 = arith.addf %39, %40 : vector<16x32xf32>
    %42 = arith.truncf %41 : vector<16x32xf32> to vector<16x32xbf16>
    %43 = vector.shape_cast %32 : vector<16x32xbf16> to vector<2x8x32xbf16>
    %44 = vector.shape_cast %36 : vector<16x32xbf16> to vector<2x8x32xbf16>
    %45 = vector.shape_cast %42 : vector<16x32xbf16> to vector<2x8x32xbf16>
    %46 = vector.extract_strided_slice %43 {offsets = [0, 0, 0], sizes = [2, 8, 8], strides = [1, 1, 1]} : vector<2x8x32xbf16> to vector<2x8x8xbf16>
    %47 = vector.extract_strided_slice %44 {offsets = [0, 0, 0], sizes = [2, 8, 8], strides = [1, 1, 1]} : vector<2x8x32xbf16> to vector<2x8x8xbf16>
    "tpu.trace_start"() <{level = 10 : i32, message = "btd,bsd->bts"}> : () -> ()
    %cst_18 = arith.constant dense<0.000000e+00> : vector<2x8x8xf32>
    %48 = tpu.matmul %46, %47, %cst_18 {dimension_numbers = #tpu.dot_dimension_numbers<[2], [2], [1], [1], [0, 0, 0, 1, 1, 1], [0], [0]>} : vector<2x8x8xbf16>, vector<2x8x8xbf16>, vector<2x8x8xf32> -> vector<2x8x8xf32>
    "tpu.trace_stop"() : () -> ()
    %cst_19 = arith.constant dense<0xFF800000> : vector<2x8xf32>
    %49 = vector.multi_reduction <maximumf>, %48, %cst_19 [2] : vector<2x8x8xf32> to vector<2x8xf32>
    %50 = vector.shape_cast %49 : vector<2x8xf32> to vector<2x8x1xf32>
    %51 = vector.broadcast %50 : vector<2x8x1xf32> to vector<2x8x8xf32>
    %52 = arith.subf %48, %51 : vector<2x8x8xf32>
    %53 = math.exp %52 : vector<2x8x8xf32>
    %cst_20 = arith.constant dense<0.000000e+00> : vector<2x8xf32>
    %54 = vector.multi_reduction <add>, %53, %cst_20 [2] : vector<2x8x8xf32> to vector<2x8xf32>
    %55 = vector.shape_cast %54 : vector<2x8xf32> to vector<2x8x1xf32>
    %56 = tpu.reciprocal %55 {approx = true} : vector<2x8x1xf32> -> vector<2x8x1xf32>
    %57 = vector.broadcast %56 : vector<2x8x1xf32> to vector<2x8x8xf32>
    %58 = arith.mulf %53, %57 : vector<2x8x8xf32>
    %59 = arith.truncf %58 : vector<2x8x8xf32> to vector<2x8x8xbf16>
    %60 = vector.extract_strided_slice %45 {offsets = [0, 0, 0], sizes = [2, 8, 8], strides = [1, 1, 1]} : vector<2x8x32xbf16> to vector<2x8x8xbf16>
    "tpu.trace_start"() <{level = 10 : i32, message = "bts,bsd->btd"}> : () -> ()
    %cst_21 = arith.constant dense<0.000000e+00> : vector<2x8x8xf32>
    %61 = tpu.matmul %59, %60, %cst_21 {dimension_numbers = #tpu.dot_dimension_numbers<[2], [1], [1], [2], [0, 0, 0, 1, 1, 2], [0], [0]>} : vector<2x8x8xbf16>, vector<2x8x8xbf16>, vector<2x8x8xf32> -> vector<2x8x8xf32>
    "tpu.trace_stop"() : () -> ()
    %62 = vector.shape_cast %61 : vector<2x8x8xf32> to vector<16x8xf32>
    %63 = arith.truncf %62 : vector<16x8xf32> to vector<16x8xbf16>
    %c0_22 = arith.constant 0 : index
    %c0_23 = arith.constant 0 : index
    %64 = vector.load %arg19[%c0_22, %c0_23] : memref<16x32xbf16, #tpu.memory_space<vmem>>, vector<16x8xbf16>
    tpu.vector_store %arg19[%c0_22, %c0_23], %63 {strides = array<i32>} : memref<16x32xbf16, #tpu.memory_space<vmem>>, vector<16x8xbf16>,
    %65 = vector.extract_strided_slice %43 {offsets = [0, 0, 8], sizes = [2, 8, 8], strides = [1, 1, 1]} : vector<2x8x32xbf16> to vector<2x8x8xbf16>
    %66 = vector.extract_strided_slice %44 {offsets = [0, 0, 8], sizes = [2, 8, 8], strides = [1, 1, 1]} : vector<2x8x32xbf16> to vector<2x8x8xbf16>
    "tpu.trace_start"() <{level = 10 : i32, message = "btd,bsd->bts"}> : () -> ()
    %cst_24 = arith.constant dense<0.000000e+00> : vector<2x8x8xf32>
    %67 = tpu.matmul %65, %66, %cst_24 {dimension_numbers = #tpu.dot_dimension_numbers<[2], [2], [1], [1], [0, 0, 0, 1, 1, 1], [0], [0]>} : vector<2x8x8xbf16>, vector<2x8x8xbf16>, vector<2x8x8xf32> -> vector<2x8x8xf32>
    "tpu.trace_stop"() : () -> ()
    %cst_25 = arith.constant dense<0xFF800000> : vector<2x8xf32>
    %68 = vector.multi_reduction <maximumf>, %67, %cst_25 [2] : vector<2x8x8xf32> to vector<2x8xf32>
    %69 = vector.shape_cast %68 : vector<2x8xf32> to vector<2x8x1xf32>
    %70 = vector.broadcast %69 : vector<2x8x1xf32> to vector<2x8x8xf32>
    %71 = arith.subf %67, %70 : vector<2x8x8xf32>
    %72 = math.exp %71 : vector<2x8x8xf32>
    %cst_26 = arith.constant dense<0.000000e+00> : vector<2x8xf32>
    %73 = vector.multi_reduction <add>, %72, %cst_26 [2] : vector<2x8x8xf32> to vector<2x8xf32>
    %74 = vector.shape_cast %73 : vector<2x8xf32> to vector<2x8x1xf32>
    %75 = tpu.reciprocal %74 {approx = true} : vector<2x8x1xf32> -> vector<2x8x1xf32>
    %76 = vector.broadcast %75 : vector<2x8x1xf32> to vector<2x8x8xf32>
    %77 = arith.mulf %72, %76 : vector<2x8x8xf32>
    %78 = arith.truncf %77 : vector<2x8x8xf32> to vector<2x8x8xbf16>
    %79 = vector.extract_strided_slice %45 {offsets = [0, 0, 8], sizes = [2, 8, 8], strides = [1, 1, 1]} : vector<2x8x32xbf16> to vector<2x8x8xbf16>
    "tpu.trace_start"() <{level = 10 : i32, message = "bts,bsd->btd"}> : () -> ()
    %cst_27 = arith.constant dense<0.000000e+00> : vector<2x8x8xf32>
    %80 = tpu.matmul %78, %79, %cst_27 {dimension_numbers = #tpu.dot_dimension_numbers<[2], [1], [1], [2], [0, 0, 0, 1, 1, 2], [0], [0]>} : vector<2x8x8xbf16>, vector<2x8x8xbf16>, vector<2x8x8xf32> -> vector<2x8x8xf32>
    "tpu.trace_stop"() : () -> ()
    %81 = vector.shape_cast %80 : vector<2x8x8xf32> to vector<16x8xf32>
    %82 = arith.truncf %81 : vector<16x8xf32> to vector<16x8xbf16>
    %c0_28 = arith.constant 0 : index
    %c8 = arith.constant 8 : index
    %83 = vector.load %arg19[%c0_28, %c8] : memref<16x32xbf16, #tpu.memory_space<vmem>>, vector<16x8xbf16>
    tpu.vector_store %arg19[%c0_28, %c8], %82 {strides = array<i32>} : memref<16x32xbf16, #tpu.memory_space<vmem>>, vector<16x8xbf16>,
    %84 = vector.extract_strided_slice %43 {offsets = [0, 0, 16], sizes = [2, 8, 8], strides = [1, 1, 1]} : vector<2x8x32xbf16> to vector<2x8x8xbf16>
    %85 = vector.extract_strided_slice %44 {offsets = [0, 0, 16], sizes = [2, 8, 8], strides = [1, 1, 1]} : vector<2x8x32xbf16> to vector<2x8x8xbf16>
    "tpu.trace_start"() <{level = 10 : i32, message = "btd,bsd->bts"}> : () -> ()
    %cst_29 = arith.constant dense<0.000000e+00> : vector<2x8x8xf32>
    %86 = tpu.matmul %84, %85, %cst_29 {dimension_numbers = #tpu.dot_dimension_numbers<[2], [2], [1], [1], [0, 0, 0, 1, 1, 1], [0], [0]>} : vector<2x8x8xbf16>, vector<2x8x8xbf16>, vector<2x8x8xf32> -> vector<2x8x8xf32>
    "tpu.trace_stop"() : () -> ()
    %cst_30 = arith.constant dense<0xFF800000> : vector<2x8xf32>
    %87 = vector.multi_reduction <maximumf>, %86, %cst_30 [2] : vector<2x8x8xf32> to vector<2x8xf32>
    %88 = vector.shape_cast %87 : vector<2x8xf32> to vector<2x8x1xf32>
    %89 = vector.broadcast %88 : vector<2x8x1xf32> to vector<2x8x8xf32>
    %90 = arith.subf %86, %89 : vector<2x8x8xf32>
    %91 = math.exp %90 : vector<2x8x8xf32>
    %cst_31 = arith.constant dense<0.000000e+00> : vector<2x8xf32>
    %92 = vector.multi_reduction <add>, %91, %cst_31 [2] : vector<2x8x8xf32> to vector<2x8xf32>
    %93 = vector.shape_cast %92 : vector<2x8xf32> to vector<2x8x1xf32>
    %94 = tpu.reciprocal %93 {approx = true} : vector<2x8x1xf32> -> vector<2x8x1xf32>
    %95 = vector.broadcast %94 : vector<2x8x1xf32> to vector<2x8x8xf32>
    %96 = arith.mulf %91, %95 : vector<2x8x8xf32>
    %97 = arith.truncf %96 : vector<2x8x8xf32> to vector<2x8x8xbf16>
    %98 = vector.extract_strided_slice %45 {offsets = [0, 0, 16], sizes = [2, 8, 8], strides = [1, 1, 1]} : vector<2x8x32xbf16> to vector<2x8x8xbf16>
    "tpu.trace_start"() <{level = 10 : i32, message = "bts,bsd->btd"}> : () -> ()
    %cst_32 = arith.constant dense<0.000000e+00> : vector<2x8x8xf32>
    %99 = tpu.matmul %97, %98, %cst_32 {dimension_numbers = #tpu.dot_dimension_numbers<[2], [1], [1], [2], [0, 0, 0, 1, 1, 2], [0], [0]>} : vector<2x8x8xbf16>, vector<2x8x8xbf16>, vector<2x8x8xf32> -> vector<2x8x8xf32>
    "tpu.trace_stop"() : () -> ()
    %100 = vector.shape_cast %99 : vector<2x8x8xf32> to vector<16x8xf32>
    %101 = arith.truncf %100 : vector<16x8xf32> to vector<16x8xbf16>
    %c0_33 = arith.constant 0 : index
    %c16 = arith.constant 16 : index
    %102 = vector.load %arg19[%c0_33, %c16] : memref<16x32xbf16, #tpu.memory_space<vmem>>, vector<16x8xbf16>
    tpu.vector_store %arg19[%c0_33, %c16], %101 {strides = array<i32>} : memref<16x32xbf16, #tpu.memory_space<vmem>>, vector<16x8xbf16>,
    %103 = vector.extract_strided_slice %43 {offsets = [0, 0, 24], sizes = [2, 8, 8], strides = [1, 1, 1]} : vector<2x8x32xbf16> to vector<2x8x8xbf16>
    %104 = vector.extract_strided_slice %44 {offsets = [0, 0, 24], sizes = [2, 8, 8], strides = [1, 1, 1]} : vector<2x8x32xbf16> to vector<2x8x8xbf16>
    "tpu.trace_start"() <{level = 10 : i32, message = "btd,bsd->bts"}> : () -> ()
    %cst_34 = arith.constant dense<0.000000e+00> : vector<2x8x8xf32>
    %105 = tpu.matmul %103, %104, %cst_34 {dimension_numbers = #tpu.dot_dimension_numbers<[2], [2], [1], [1], [0, 0, 0, 1, 1, 1], [0], [0]>} : vector<2x8x8xbf16>, vector<2x8x8xbf16>, vector<2x8x8xf32> -> vector<2x8x8xf32>
    "tpu.trace_stop"() : () -> ()
    %cst_35 = arith.constant dense<0xFF800000> : vector<2x8xf32>
    %106 = vector.multi_reduction <maximumf>, %105, %cst_35 [2] : vector<2x8x8xf32> to vector<2x8xf32>
    %107 = vector.shape_cast %106 : vector<2x8xf32> to vector<2x8x1xf32>
    %108 = vector.broadcast %107 : vector<2x8x1xf32> to vector<2x8x8xf32>
    %109 = arith.subf %105, %108 : vector<2x8x8xf32>
    %110 = math.exp %109 : vector<2x8x8xf32>
    %cst_36 = arith.constant dense<0.000000e+00> : vector<2x8xf32>
    %111 = vector.multi_reduction <add>, %110, %cst_36 [2] : vector<2x8x8xf32> to vector<2x8xf32>
    %112 = vector.shape_cast %111 : vector<2x8xf32> to vector<2x8x1xf32>
    %113 = tpu.reciprocal %112 {approx = true} : vector<2x8x1xf32> -> vector<2x8x1xf32>
    %114 = vector.broadcast %113 : vector<2x8x1xf32> to vector<2x8x8xf32>
    %115 = arith.mulf %110, %114 : vector<2x8x8xf32>
    %116 = arith.truncf %115 : vector<2x8x8xf32> to vector<2x8x8xbf16>
    %117 = vector.extract_strided_slice %45 {offsets = [0, 0, 24], sizes = [2, 8, 8], strides = [1, 1, 1]} : vector<2x8x32xbf16> to vector<2x8x8xbf16>
    "tpu.trace_start"() <{level = 10 : i32, message = "bts,bsd->btd"}> : () -> ()
    %cst_37 = arith.constant dense<0.000000e+00> : vector<2x8x8xf32>
    %118 = tpu.matmul %116, %117, %cst_37 {dimension_numbers = #tpu.dot_dimension_numbers<[2], [1], [1], [2], [0, 0, 0, 1, 1, 2], [0], [0]>} : vector<2x8x8xbf16>, vector<2x8x8xbf16>, vector<2x8x8xf32> -> vector<2x8x8xf32>
    "tpu.trace_stop"() : () -> ()
    %119 = vector.shape_cast %118 : vector<2x8x8xf32> to vector<16x8xf32>
    %120 = arith.truncf %119 : vector<16x8xf32> to vector<16x8xbf16>
    %c0_38 = arith.constant 0 : index
    %c24 = arith.constant 24 : index
    %121 = vector.load %arg19[%c0_38, %c24] : memref<16x32xbf16, #tpu.memory_space<vmem>>, vector<16x8xbf16>
    tpu.vector_store %arg19[%c0_38, %c24], %120 {strides = array<i32>} : memref<16x32xbf16, #tpu.memory_space<vmem>>, vector<16x8xbf16>,
    %c0_39 = arith.constant 0 : index
    %c0_40 = arith.constant 0 : index
    %122 = vector.load %arg19[%c0_39, %c0_40] : memref<16x32xbf16, #tpu.memory_space<vmem>>, vector<16x32xbf16>
    %c0_41 = arith.constant 0 : index
    %c0_42 = arith.constant 0 : index
    %c0_43 = arith.constant 0 : index
    %123 = vector.load %arg9[%c0_41, %c0_42, %c0_43] : memref<1x32x32xbf16, #tpu.memory_space<vmem>>, vector<1x32x32xbf16>
    %124 = vector.shape_cast %123 : vector<1x32x32xbf16> to vector<32x32xbf16>
    %cst_44 = arith.constant dense<0.000000e+00> : vector<16x32xf32>
    %125 = tpu.matmul %122, %124, %cst_44 {dimension_numbers = #tpu.dot_dimension_numbers<[1], [0], [0], [1], [0, 0, 1, 1], [], []>} : vector<16x32xbf16>, vector<32x32xbf16>, vector<16x32xf32> -> vector<16x32xf32>
    %126 = vector.broadcast %10 : vector<1x32xf32> to vector<16x32xf32>
    %127 = arith.addf %125, %126 : vector<16x32xf32>
    %128 = arith.addf %3, %127 : vector<16x32xf32>
    %cst_45 = arith.constant dense<0.000000e+00> : vector<16xf32>
    %129 = vector.multi_reduction <add>, %128, %cst_45 [1] : vector<16x32xf32> to vector<16xf32>
    %130 = vector.shape_cast %129 : vector<16xf32> to vector<16x1xf32>
    %cst_46 = arith.constant 3.200000e+01 : f32
    %131 = vector.broadcast %cst_46 : f32 to vector<16x1xf32>
    %132 = arith.divf %130, %131 : vector<16x1xf32>
    %133 = vector.broadcast %132 : vector<16x1xf32> to vector<16x32xf32>
    %134 = arith.subf %128, %133 : vector<16x32xf32>
    %135 = arith.mulf %134, %134 : vector<16x32xf32>
    %cst_47 = arith.constant dense<0.000000e+00> : vector<16xf32>
    %136 = vector.multi_reduction <add>, %135, %cst_47 [1] : vector<16x32xf32> to vector<16xf32>
    %137 = vector.shape_cast %136 : vector<16xf32> to vector<16x1xf32>
    %cst_48 = arith.constant 3.200000e+01 : f32
    %138 = vector.broadcast %cst_48 : f32 to vector<16x1xf32>
    %139 = arith.divf %137, %138 : vector<16x1xf32>
    %140 = vector.broadcast %132 : vector<16x1xf32> to vector<16x32xf32>
    %141 = arith.subf %128, %140 : vector<16x32xf32>
    %cst_49 = arith.constant 9.99999974E-6 : f32
    %142 = vector.broadcast %cst_49 : f32 to vector<16x1xf32>
    %143 = arith.addf %139, %142 : vector<16x1xf32>
    %144 = math.rsqrt %143 : vector<16x1xf32>
    %145 = vector.broadcast %144 : vector<16x1xf32> to vector<16x32xf32>
    %146 = arith.mulf %141, %145 : vector<16x32xf32>
    %147 = vector.broadcast %16 : vector<1x32xf32> to vector<16x32xf32>
    %148 = arith.mulf %146, %147 : vector<16x32xf32>
    %149 = vector.broadcast %17 : vector<1x32xf32> to vector<16x32xf32>
    %150 = arith.addf %148, %149 : vector<16x32xf32>
    %151 = arith.truncf %150 : vector<16x32xf32> to vector<16x32xbf16>
    %152 = arith.addf %151, %4 : vector<16x32xbf16>
    %c0_50 = arith.constant 0 : index
    %c0_51 = arith.constant 0 : index
    %c0_52 = arith.constant 0 : index
    %153 = vector.load %arg10[%c0_50, %c0_51, %c0_52] : memref<1x32x32xbf16, #tpu.memory_space<vmem>>, vector<1x32x32xbf16>
    %154 = vector.shape_cast %153 : vector<1x32x32xbf16> to vector<32x32xbf16>
    %cst_53 = arith.constant dense<0.000000e+00> : vector<16x32xf32>
    %155 = tpu.matmul %152, %154, %cst_53 {dimension_numbers = #tpu.dot_dimension_numbers<[1], [0], [0], [1], [0, 0, 1, 1], [], []>} : vector<16x32xbf16>, vector<32x32xbf16>, vector<16x32xf32> -> vector<16x32xf32>
    %156 = vector.broadcast %11 : vector<1x32xf32> to vector<16x32xf32>
    %157 = arith.addf %155, %156 : vector<16x32xf32>
    %158 = arith.truncf %157 : vector<16x32xf32> to vector<16x32xbf16>
    %c0_54 = arith.constant 0 : index
    %c0_55 = arith.constant 0 : index
    %c0_56 = arith.constant 0 : index
    %159 = vector.load %arg11[%c0_54, %c0_55, %c0_56] : memref<1x32x32xbf16, #tpu.memory_space<vmem>>, vector<1x32x32xbf16>
    %160 = vector.shape_cast %159 : vector<1x32x32xbf16> to vector<32x32xbf16>
    %cst_57 = arith.constant dense<0.000000e+00> : vector<32x32xf32>
    %161 = tpu.matmul %6, %160, %cst_57 {dimension_numbers = #tpu.dot_dimension_numbers<[1], [0], [0], [1], [0, 0, 1, 1], [], []>} : vector<32x32xbf16>, vector<32x32xbf16>, vector<32x32xf32> -> vector<32x32xf32>
    %162 = vector.broadcast %12 : vector<1x32xf32> to vector<32x32xf32>
    %163 = arith.addf %161, %162 : vector<32x32xf32>
    %164 = arith.truncf %163 : vector<32x32xf32> to vector<32x32xbf16>
    %c0_58 = arith.constant 0 : index
    %c0_59 = arith.constant 0 : index
    %c0_60 = arith.constant 0 : index
    %165 = vector.load %arg12[%c0_58, %c0_59, %c0_60] : memref<1x32x32xbf16, #tpu.memory_space<vmem>>, vector<1x32x32xbf16>
    %166 = vector.shape_cast %165 : vector<1x32x32xbf16> to vector<32x32xbf16>
    %cst_61 = arith.constant dense<0.000000e+00> : vector<32x32xf32>
    %167 = tpu.matmul %5, %166, %cst_61 {dimension_numbers = #tpu.dot_dimension_numbers<[1], [0], [0], [1], [0, 0, 1, 1], [], []>} : vector<32x32xbf16>, vector<32x32xbf16>, vector<32x32xf32> -> vector<32x32xf32>
    %168 = vector.broadcast %13 : vector<1x32xf32> to vector<32x32xf32>
    %169 = arith.addf %167, %168 : vector<32x32xf32>
    %170 = arith.truncf %169 : vector<32x32xf32> to vector<32x32xbf16>
    %171 = vector.shape_cast %158 : vector<16x32xbf16> to vector<2x8x32xbf16>
    %172 = vector.shape_cast %164 : vector<32x32xbf16> to vector<2x16x32xbf16>
    %173 = vector.shape_cast %170 : vector<32x32xbf16> to vector<2x16x32xbf16>
    %174 = vector.extract_strided_slice %171 {offsets = [0, 0, 0], sizes = [2, 8, 8], strides = [1, 1, 1]} : vector<2x8x32xbf16> to vector<2x8x8xbf16>
    %175 = vector.extract_strided_slice %172 {offsets = [0, 0, 0], sizes = [2, 16, 8], strides = [1, 1, 1]} : vector<2x16x32xbf16> to vector<2x16x8xbf16>
    "tpu.trace_start"() <{level = 10 : i32, message = "btd,bsd->bts"}> : () -> ()
    %cst_62 = arith.constant dense<0.000000e+00> : vector<2x8x16xf32>
    %176 = tpu.matmul %174, %175, %cst_62 {dimension_numbers = #tpu.dot_dimension_numbers<[2], [2], [1], [1], [0, 0, 0, 1, 1, 1], [0], [0]>} : vector<2x8x8xbf16>, vector<2x16x8xbf16>, vector<2x8x16xf32> -> vector<2x8x16xf32>
    "tpu.trace_stop"() : () -> ()
    %cst_63 = arith.constant dense<0xFF800000> : vector<2x8xf32>
    %177 = vector.multi_reduction <maximumf>, %176, %cst_63 [2] : vector<2x8x16xf32> to vector<2x8xf32>
    %178 = vector.shape_cast %177 : vector<2x8xf32> to vector<2x8x1xf32>
    %179 = vector.broadcast %178 : vector<2x8x1xf32> to vector<2x8x16xf32>
    %180 = arith.subf %176, %179 : vector<2x8x16xf32>
    %181 = math.exp %180 : vector<2x8x16xf32>
    %cst_64 = arith.constant dense<0.000000e+00> : vector<2x8xf32>
    %182 = vector.multi_reduction <add>, %181, %cst_64 [2] : vector<2x8x16xf32> to vector<2x8xf32>
    %183 = vector.shape_cast %182 : vector<2x8xf32> to vector<2x8x1xf32>
    %184 = tpu.reciprocal %183 {approx = true} : vector<2x8x1xf32> -> vector<2x8x1xf32>
    %185 = vector.broadcast %184 : vector<2x8x1xf32> to vector<2x8x16xf32>
    %186 = arith.mulf %181, %185 : vector<2x8x16xf32>
    %187 = arith.truncf %186 : vector<2x8x16xf32> to vector<2x8x16xbf16>
    %188 = vector.extract_strided_slice %173 {offsets = [0, 0, 0], sizes = [2, 16, 8], strides = [1, 1, 1]} : vector<2x16x32xbf16> to vector<2x16x8xbf16>
    "tpu.trace_start"() <{level = 10 : i32, message = "bts,bsd->btd"}> : () -> ()
    %cst_65 = arith.constant dense<0.000000e+00> : vector<2x8x8xf32>
    %189 = tpu.matmul %187, %188, %cst_65 {dimension_numbers = #tpu.dot_dimension_numbers<[2], [1], [1], [2], [0, 0, 0, 1, 1, 2], [0], [0]>} : vector<2x8x16xbf16>, vector<2x16x8xbf16>, vector<2x8x8xf32> -> vector<2x8x8xf32>
    "tpu.trace_stop"() : () -> ()
    %190 = vector.shape_cast %189 : vector<2x8x8xf32> to vector<16x8xf32>
    %191 = arith.truncf %190 : vector<16x8xf32> to vector<16x8xbf16>
    %c0_66 = arith.constant 0 : index
    %c0_67 = arith.constant 0 : index
    %192 = vector.load %arg19[%c0_66, %c0_67] : memref<16x32xbf16, #tpu.memory_space<vmem>>, vector<16x8xbf16>
    tpu.vector_store %arg19[%c0_66, %c0_67], %191 {strides = array<i32>} : memref<16x32xbf16, #tpu.memory_space<vmem>>, vector<16x8xbf16>,
    %193 = vector.extract_strided_slice %171 {offsets = [0, 0, 8], sizes = [2, 8, 8], strides = [1, 1, 1]} : vector<2x8x32xbf16> to vector<2x8x8xbf16>
    %194 = vector.extract_strided_slice %172 {offsets = [0, 0, 8], sizes = [2, 16, 8], strides = [1, 1, 1]} : vector<2x16x32xbf16> to vector<2x16x8xbf16>
    "tpu.trace_start"() <{level = 10 : i32, message = "btd,bsd->bts"}> : () -> ()
    %cst_68 = arith.constant dense<0.000000e+00> : vector<2x8x16xf32>
    %195 = tpu.matmul %193, %194, %cst_68 {dimension_numbers = #tpu.dot_dimension_numbers<[2], [2], [1], [1], [0, 0, 0, 1, 1, 1], [0], [0]>} : vector<2x8x8xbf16>, vector<2x16x8xbf16>, vector<2x8x16xf32> -> vector<2x8x16xf32>
    "tpu.trace_stop"() : () -> ()
    %cst_69 = arith.constant dense<0xFF800000> : vector<2x8xf32>
    %196 = vector.multi_reduction <maximumf>, %195, %cst_69 [2] : vector<2x8x16xf32> to vector<2x8xf32>
    %197 = vector.shape_cast %196 : vector<2x8xf32> to vector<2x8x1xf32>
    %198 = vector.broadcast %197 : vector<2x8x1xf32> to vector<2x8x16xf32>
    %199 = arith.subf %195, %198 : vector<2x8x16xf32>
    %200 = math.exp %199 : vector<2x8x16xf32>
    %cst_70 = arith.constant dense<0.000000e+00> : vector<2x8xf32>
    %201 = vector.multi_reduction <add>, %200, %cst_70 [2] : vector<2x8x16xf32> to vector<2x8xf32>
    %202 = vector.shape_cast %201 : vector<2x8xf32> to vector<2x8x1xf32>
    %203 = tpu.reciprocal %202 {approx = true} : vector<2x8x1xf32> -> vector<2x8x1xf32>
    %204 = vector.broadcast %203 : vector<2x8x1xf32> to vector<2x8x16xf32>
    %205 = arith.mulf %200, %204 : vector<2x8x16xf32>
    %206 = arith.truncf %205 : vector<2x8x16xf32> to vector<2x8x16xbf16>
    %207 = vector.extract_strided_slice %173 {offsets = [0, 0, 8], sizes = [2, 16, 8], strides = [1, 1, 1]} : vector<2x16x32xbf16> to vector<2x16x8xbf16>
    "tpu.trace_start"() <{level = 10 : i32, message = "bts,bsd->btd"}> : () -> ()
    %cst_71 = arith.constant dense<0.000000e+00> : vector<2x8x8xf32>
    %208 = tpu.matmul %206, %207, %cst_71 {dimension_numbers = #tpu.dot_dimension_numbers<[2], [1], [1], [2], [0, 0, 0, 1, 1, 2], [0], [0]>} : vector<2x8x16xbf16>, vector<2x16x8xbf16>, vector<2x8x8xf32> -> vector<2x8x8xf32>
    "tpu.trace_stop"() : () -> ()
    %209 = vector.shape_cast %208 : vector<2x8x8xf32> to vector<16x8xf32>
    %210 = arith.truncf %209 : vector<16x8xf32> to vector<16x8xbf16>
    %c0_72 = arith.constant 0 : index
    %c8_73 = arith.constant 8 : index
    %211 = vector.load %arg19[%c0_72, %c8_73] : memref<16x32xbf16, #tpu.memory_space<vmem>>, vector<16x8xbf16>
    tpu.vector_store %arg19[%c0_72, %c8_73], %210 {strides = array<i32>} : memref<16x32xbf16, #tpu.memory_space<vmem>>, vector<16x8xbf16>,
    %212 = vector.extract_strided_slice %171 {offsets = [0, 0, 16], sizes = [2, 8, 8], strides = [1, 1, 1]} : vector<2x8x32xbf16> to vector<2x8x8xbf16>
    %213 = vector.extract_strided_slice %172 {offsets = [0, 0, 16], sizes = [2, 16, 8], strides = [1, 1, 1]} : vector<2x16x32xbf16> to vector<2x16x8xbf16>
    "tpu.trace_start"() <{level = 10 : i32, message = "btd,bsd->bts"}> : () -> ()
    %cst_74 = arith.constant dense<0.000000e+00> : vector<2x8x16xf32>
    %214 = tpu.matmul %212, %213, %cst_74 {dimension_numbers = #tpu.dot_dimension_numbers<[2], [2], [1], [1], [0, 0, 0, 1, 1, 1], [0], [0]>} : vector<2x8x8xbf16>, vector<2x16x8xbf16>, vector<2x8x16xf32> -> vector<2x8x16xf32>
    "tpu.trace_stop"() : () -> ()
    %cst_75 = arith.constant dense<0xFF800000> : vector<2x8xf32>
    %215 = vector.multi_reduction <maximumf>, %214, %cst_75 [2] : vector<2x8x16xf32> to vector<2x8xf32>
    %216 = vector.shape_cast %215 : vector<2x8xf32> to vector<2x8x1xf32>
    %217 = vector.broadcast %216 : vector<2x8x1xf32> to vector<2x8x16xf32>
    %218 = arith.subf %214, %217 : vector<2x8x16xf32>
    %219 = math.exp %218 : vector<2x8x16xf32>
    %cst_76 = arith.constant dense<0.000000e+00> : vector<2x8xf32>
    %220 = vector.multi_reduction <add>, %219, %cst_76 [2] : vector<2x8x16xf32> to vector<2x8xf32>
    %221 = vector.shape_cast %220 : vector<2x8xf32> to vector<2x8x1xf32>
    %222 = tpu.reciprocal %221 {approx = true} : vector<2x8x1xf32> -> vector<2x8x1xf32>
    %223 = vector.broadcast %222 : vector<2x8x1xf32> to vector<2x8x16xf32>
    %224 = arith.mulf %219, %223 : vector<2x8x16xf32>
    %225 = arith.truncf %224 : vector<2x8x16xf32> to vector<2x8x16xbf16>
    %226 = vector.extract_strided_slice %173 {offsets = [0, 0, 16], sizes = [2, 16, 8], strides = [1, 1, 1]} : vector<2x16x32xbf16> to vector<2x16x8xbf16>
    "tpu.trace_start"() <{level = 10 : i32, message = "bts,bsd->btd"}> : () -> ()
    %cst_77 = arith.constant dense<0.000000e+00> : vector<2x8x8xf32>
    %227 = tpu.matmul %225, %226, %cst_77 {dimension_numbers = #tpu.dot_dimension_numbers<[2], [1], [1], [2], [0, 0, 0, 1, 1, 2], [0], [0]>} : vector<2x8x16xbf16>, vector<2x16x8xbf16>, vector<2x8x8xf32> -> vector<2x8x8xf32>
    "tpu.trace_stop"() : () -> ()
    %228 = vector.shape_cast %227 : vector<2x8x8xf32> to vector<16x8xf32>
    %229 = arith.truncf %228 : vector<16x8xf32> to vector<16x8xbf16>
    %c0_78 = arith.constant 0 : index
    %c16_79 = arith.constant 16 : index
    %230 = vector.load %arg19[%c0_78, %c16_79] : memref<16x32xbf16, #tpu.memory_space<vmem>>, vector<16x8xbf16>
    tpu.vector_store %arg19[%c0_78, %c16_79], %229 {strides = array<i32>} : memref<16x32xbf16, #tpu.memory_space<vmem>>, vector<16x8xbf16>,
    %231 = vector.extract_strided_slice %171 {offsets = [0, 0, 24], sizes = [2, 8, 8], strides = [1, 1, 1]} : vector<2x8x32xbf16> to vector<2x8x8xbf16>
    %232 = vector.extract_strided_slice %172 {offsets = [0, 0, 24], sizes = [2, 16, 8], strides = [1, 1, 1]} : vector<2x16x32xbf16> to vector<2x16x8xbf16>
    "tpu.trace_start"() <{level = 10 : i32, message = "btd,bsd->bts"}> : () -> ()
    %cst_80 = arith.constant dense<0.000000e+00> : vector<2x8x16xf32>
    %233 = tpu.matmul %231, %232, %cst_80 {dimension_numbers = #tpu.dot_dimension_numbers<[2], [2], [1], [1], [0, 0, 0, 1, 1, 1], [0], [0]>} : vector<2x8x8xbf16>, vector<2x16x8xbf16>, vector<2x8x16xf32> -> vector<2x8x16xf32>
    "tpu.trace_stop"() : () -> ()
    %cst_81 = arith.constant dense<0xFF800000> : vector<2x8xf32>
    %234 = vector.multi_reduction <maximumf>, %233, %cst_81 [2] : vector<2x8x16xf32> to vector<2x8xf32>
    %235 = vector.shape_cast %234 : vector<2x8xf32> to vector<2x8x1xf32>
    %236 = vector.broadcast %235 : vector<2x8x1xf32> to vector<2x8x16xf32>
    %237 = arith.subf %233, %236 : vector<2x8x16xf32>
    %238 = math.exp %237 : vector<2x8x16xf32>
    %cst_82 = arith.constant dense<0.000000e+00> : vector<2x8xf32>
    %239 = vector.multi_reduction <add>, %238, %cst_82 [2] : vector<2x8x16xf32> to vector<2x8xf32>
    %240 = vector.shape_cast %239 : vector<2x8xf32> to vector<2x8x1xf32>
    %241 = tpu.reciprocal %240 {approx = true} : vector<2x8x1xf32> -> vector<2x8x1xf32>
    %242 = vector.broadcast %241 : vector<2x8x1xf32> to vector<2x8x16xf32>
    %243 = arith.mulf %238, %242 : vector<2x8x16xf32>
    %244 = arith.truncf %243 : vector<2x8x16xf32> to vector<2x8x16xbf16>
    %245 = vector.extract_strided_slice %173 {offsets = [0, 0, 24], sizes = [2, 16, 8], strides = [1, 1, 1]} : vector<2x16x32xbf16> to vector<2x16x8xbf16>
    "tpu.trace_start"() <{level = 10 : i32, message = "bts,bsd->btd"}> : () -> ()
    %cst_83 = arith.constant dense<0.000000e+00> : vector<2x8x8xf32>
    %246 = tpu.matmul %244, %245, %cst_83 {dimension_numbers = #tpu.dot_dimension_numbers<[2], [1], [1], [2], [0, 0, 0, 1, 1, 2], [0], [0]>} : vector<2x8x16xbf16>, vector<2x16x8xbf16>, vector<2x8x8xf32> -> vector<2x8x8xf32>
    "tpu.trace_stop"() : () -> ()
    %247 = vector.shape_cast %246 : vector<2x8x8xf32> to vector<16x8xf32>
    %248 = arith.truncf %247 : vector<16x8xf32> to vector<16x8xbf16>
    %c0_84 = arith.constant 0 : index
    %c24_85 = arith.constant 24 : index
    %249 = vector.load %arg19[%c0_84, %c24_85] : memref<16x32xbf16, #tpu.memory_space<vmem>>, vector<16x8xbf16>
    tpu.vector_store %arg19[%c0_84, %c24_85], %248 {strides = array<i32>} : memref<16x32xbf16, #tpu.memory_space<vmem>>, vector<16x8xbf16>,
    %c0_86 = arith.constant 0 : index
    %c0_87 = arith.constant 0 : index
    %250 = vector.load %arg19[%c0_86, %c0_87] : memref<16x32xbf16, #tpu.memory_space<vmem>>, vector<16x32xbf16>
    %c0_88 = arith.constant 0 : index
    %c0_89 = arith.constant 0 : index
    %c0_90 = arith.constant 0 : index
    %251 = vector.load %arg13[%c0_88, %c0_89, %c0_90] : memref<1x32x32xbf16, #tpu.memory_space<vmem>>, vector<1x32x32xbf16>
    %252 = vector.shape_cast %251 : vector<1x32x32xbf16> to vector<32x32xbf16>
    %cst_91 = arith.constant dense<0.000000e+00> : vector<16x32xf32>
    %253 = tpu.matmul %250, %252, %cst_91 {dimension_numbers = #tpu.dot_dimension_numbers<[1], [0], [0], [1], [0, 0, 1, 1], [], []>} : vector<16x32xbf16>, vector<32x32xbf16>, vector<16x32xf32> -> vector<16x32xf32>
    %254 = vector.broadcast %14 : vector<1x32xf32> to vector<16x32xf32>
    %255 = arith.addf %253, %254 : vector<16x32xf32>
    %256 = arith.addf %150, %255 : vector<16x32xf32>
    %cst_92 = arith.constant dense<0.000000e+00> : vector<16xf32>
    %257 = vector.multi_reduction <add>, %256, %cst_92 [1] : vector<16x32xf32> to vector<16xf32>
    %258 = vector.shape_cast %257 : vector<16xf32> to vector<16x1xf32>
    %cst_93 = arith.constant 3.200000e+01 : f32
    %259 = vector.broadcast %cst_93 : f32 to vector<16x1xf32>
    %260 = arith.divf %258, %259 : vector<16x1xf32>
    %261 = vector.broadcast %260 : vector<16x1xf32> to vector<16x32xf32>
    %262 = arith.subf %256, %261 : vector<16x32xf32>
    %263 = arith.mulf %262, %262 : vector<16x32xf32>
    %cst_94 = arith.constant dense<0.000000e+00> : vector<16xf32>
    %264 = vector.multi_reduction <add>, %263, %cst_94 [1] : vector<16x32xf32> to vector<16xf32>
    %265 = vector.shape_cast %264 : vector<16xf32> to vector<16x1xf32>
    %cst_95 = arith.constant 3.200000e+01 : f32
    %266 = vector.broadcast %cst_95 : f32 to vector<16x1xf32>
    %267 = arith.divf %265, %266 : vector<16x1xf32>
    %268 = vector.broadcast %260 : vector<16x1xf32> to vector<16x32xf32>
    %269 = arith.subf %256, %268 : vector<16x32xf32>
    %cst_96 = arith.constant 9.99999974E-6 : f32
    %270 = vector.broadcast %cst_96 : f32 to vector<16x1xf32>
    %271 = arith.addf %267, %270 : vector<16x1xf32>
    %272 = math.rsqrt %271 : vector<16x1xf32>
    %273 = vector.broadcast %272 : vector<16x1xf32> to vector<16x32xf32>
    %274 = arith.mulf %269, %273 : vector<16x32xf32>
    %275 = vector.broadcast %18 : vector<1x32xf32> to vector<16x32xf32>
    %276 = arith.mulf %274, %275 : vector<16x32xf32>
    %277 = vector.broadcast %19 : vector<1x32xf32> to vector<16x32xf32>
    %278 = arith.addf %276, %277 : vector<16x32xf32>
    %279 = arith.truncf %278 : vector<16x32xf32> to vector<16x32xbf16>
    %c0_97 = arith.constant 0 : index
    %c0_98 = arith.constant 0 : index
    %c0_99 = arith.constant 0 : index
    %280 = vector.load %arg14[%c0_97, %c0_98, %c0_99] : memref<1x32x64xbf16, #tpu.memory_space<vmem>>, vector<1x32x64xbf16>
    %281 = vector.shape_cast %280 : vector<1x32x64xbf16> to vector<32x64xbf16>
    %cst_100 = arith.constant dense<0.000000e+00> : vector<16x64xf32>
    %282 = tpu.matmul %279, %281, %cst_100 {dimension_numbers = #tpu.dot_dimension_numbers<[1], [0], [0], [1], [0, 0, 1, 1], [], []>} : vector<16x32xbf16>, vector<32x64xbf16>, vector<16x64xf32> -> vector<16x64xf32>
    %c0_101 = arith.constant 0 : index
    %c0_102 = arith.constant 0 : index
    %c0_103 = arith.constant 0 : index
    %283 = vector.load %arg15[%c0_101, %c0_102, %c0_103] : memref<1x1x64xf32, #tpu.memory_space<vmem>>, vector<1x1x64xf32>
    %284 = vector.shape_cast %283 : vector<1x1x64xf32> to vector<1x64xf32>
    %285 = vector.broadcast %284 : vector<1x64xf32> to vector<16x64xf32>
    %286 = arith.addf %282, %285 : vector<16x64xf32>
    %cst_104 = arith.constant 0.000000e+00 : f32
    %287 = vector.broadcast %cst_104 : f32 to vector<16x64xf32>
    %288 = arith.maximumf %286, %287 : vector<16x64xf32>
    %289 = arith.truncf %288 : vector<16x64xf32> to vector<16x64xbf16>
    %c0_105 = arith.constant 0 : index
    %c0_106 = arith.constant 0 : index
    %c0_107 = arith.constant 0 : index
    %290 = vector.load %arg16[%c0_105, %c0_106, %c0_107] : memref<1x64x32xbf16, #tpu.memory_space<vmem>>, vector<1x64x32xbf16>
    %291 = vector.shape_cast %290 : vector<1x64x32xbf16> to vector<64x32xbf16>
    %cst_108 = arith.constant dense<0.000000e+00> : vector<16x32xf32>
    %292 = tpu.matmul %289, %291, %cst_108 {dimension_numbers = #tpu.dot_dimension_numbers<[1], [0], [0], [1], [0, 0, 1, 1], [], []>} : vector<16x64xbf16>, vector<64x32xbf16>, vector<16x32xf32> -> vector<16x32xf32>
    %293 = arith.addf %278, %292 : vector<16x32xf32>
    %294 = vector.broadcast %15 : vector<1x32xf32> to vector<16x32xf32>
    %295 = arith.addf %293, %294 : vector<16x32xf32>
    %cst_109 = arith.constant dense<0.000000e+00> : vector<16xf32>
    %296 = vector.multi_reduction <add>, %295, %cst_109 [1] : vector<16x32xf32> to vector<16xf32>
    %297 = vector.shape_cast %296 : vector<16xf32> to vector<16x1xf32>
    %cst_110 = arith.constant 3.200000e+01 : f32
    %298 = vector.broadcast %cst_110 : f32 to vector<16x1xf32>
    %299 = arith.divf %297, %298 : vector<16x1xf32>
    %300 = vector.broadcast %299 : vector<16x1xf32> to vector<16x32xf32>
    %301 = arith.subf %295, %300 : vector<16x32xf32>
    %302 = arith.mulf %301, %301 : vector<16x32xf32>
    %cst_111 = arith.constant dense<0.000000e+00> : vector<16xf32>
    %303 = vector.multi_reduction <add>, %302, %cst_111 [1] : vector<16x32xf32> to vector<16xf32>
    %304 = vector.shape_cast %303 : vector<16xf32> to vector<16x1xf32>
    %cst_112 = arith.constant 3.200000e+01 : f32
    %305 = vector.broadcast %cst_112 : f32 to vector<16x1xf32>
    %306 = arith.divf %304, %305 : vector<16x1xf32>
    %307 = vector.broadcast %299 : vector<16x1xf32> to vector<16x32xf32>
    %308 = arith.subf %295, %307 : vector<16x32xf32>
    %cst_113 = arith.constant 9.99999974E-6 : f32
    %309 = vector.broadcast %cst_113 : f32 to vector<16x1xf32>
    %310 = arith.addf %306, %309 : vector<16x1xf32>
    %311 = math.rsqrt %310 : vector<16x1xf32>
    %312 = vector.broadcast %311 : vector<16x1xf32> to vector<16x32xf32>
    %313 = arith.mulf %308, %312 : vector<16x32xf32>
    %314 = vector.broadcast %20 : vector<1x32xf32> to vector<16x32xf32>
    %315 = arith.mulf %313, %314 : vector<16x32xf32>
    %316 = vector.broadcast %21 : vector<1x32xf32> to vector<16x32xf32>
    %317 = arith.addf %315, %316 : vector<16x32xf32>
    %c1_i32 = arith.constant 1 : i32
    %318 = arith.cmpi ne, %arg1, %c1_i32 : i32
    %319 = arith.extui %318 : i1 to i32
    %c0_i32_114 = arith.constant 0 : i32
    %320 = arith.cmpi ne, %319, %c0_i32_114 : i32
    scf.if %320 {
      %c0_117 = arith.constant 0 : index
      %c0_118 = arith.constant 0 : index
      %324 = vector.load %arg18[%c0_117, %c0_118] : memref<16x32xf32, #tpu.memory_space<vmem>>, vector<16x32xf32>
      tpu.vector_store %arg18[%c0_117, %c0_118], %317 {strides = array<i32>} : memref<16x32xf32, #tpu.memory_space<vmem>>, vector<16x32xf32>,
    } else {
    }
    %c1_i32_115 = arith.constant 1 : i32
    %321 = arith.cmpi eq, %arg1, %c1_i32_115 : i32
    %322 = arith.extui %321 : i1 to i32
    %c0_i32_116 = arith.constant 0 : i32
    %323 = arith.cmpi ne, %322, %c0_i32_116 : i32
    scf.if %323 {
      %c0_117 = arith.constant 0 : index
      %c0_118 = arith.constant 0 : index
      %324 = vector.load %arg6[%c0_117, %c0_118] : memref<2x32xf32, #tpu.memory_space<vmem>>, vector<2x32xf32>
      %325 = vector.extract_strided_slice %324 {offsets = [0, 0], sizes = [1, 32], strides = [1, 1]} : vector<2x32xf32> to vector<1x32xf32>
      %326 = vector.extract_strided_slice %324 {offsets = [1, 0], sizes = [1, 32], strides = [1, 1]} : vector<2x32xf32> to vector<1x32xf32>
      %cst_119 = arith.constant dense<0.000000e+00> : vector<16xf32>
      %327 = vector.multi_reduction <add>, %317, %cst_119 [1] : vector<16x32xf32> to vector<16xf32>
      %328 = vector.shape_cast %327 : vector<16xf32> to vector<16x1xf32>
      %cst_120 = arith.constant 3.200000e+01 : f32
      %329 = vector.broadcast %cst_120 : f32 to vector<16x1xf32>
      %330 = arith.divf %328, %329 : vector<16x1xf32>
      %331 = vector.broadcast %330 : vector<16x1xf32> to vector<16x32xf32>
      %332 = arith.subf %317, %331 : vector<16x32xf32>
      %333 = arith.mulf %332, %332 : vector<16x32xf32>
      %cst_121 = arith.constant dense<0.000000e+00> : vector<16xf32>
      %334 = vector.multi_reduction <add>, %333, %cst_121 [1] : vector<16x32xf32> to vector<16xf32>
      %335 = vector.shape_cast %334 : vector<16xf32> to vector<16x1xf32>
      %cst_122 = arith.constant 3.200000e+01 : f32
      %336 = vector.broadcast %cst_122 : f32 to vector<16x1xf32>
      %337 = arith.divf %335, %336 : vector<16x1xf32>
      %338 = vector.broadcast %330 : vector<16x1xf32> to vector<16x32xf32>
      %339 = arith.subf %317, %338 : vector<16x32xf32>
      %cst_123 = arith.constant 9.99999974E-6 : f32
      %340 = vector.broadcast %cst_123 : f32 to vector<16x1xf32>
      %341 = arith.addf %337, %340 : vector<16x1xf32>
      %342 = math.rsqrt %341 : vector<16x1xf32>
      %343 = vector.broadcast %342 : vector<16x1xf32> to vector<16x32xf32>
      %344 = arith.mulf %339, %343 : vector<16x32xf32>
      %345 = vector.broadcast %325 : vector<1x32xf32> to vector<16x32xf32>
      %346 = arith.mulf %344, %345 : vector<16x32xf32>
      %347 = vector.broadcast %326 : vector<1x32xf32> to vector<16x32xf32>
      %348 = arith.addf %346, %347 : vector<16x32xf32>
      %c0_124 = arith.constant 0 : index
      %c0_125 = arith.constant 0 : index
      %349 = vector.load %arg18[%c0_124, %c0_125] : memref<16x32xf32, #tpu.memory_space<vmem>>, vector<16x32xf32>
      tpu.vector_store %arg18[%c0_124, %c0_125], %348 {strides = array<i32>} : memref<16x32xf32, #tpu.memory_space<vmem>>, vector<16x32xf32>,
    } else {
    }
    return
  }
  func.func @transform_0(%arg0: i32, %arg1: i32) -> (i32, i32) {
    %c0_i32 = arith.constant 0 : i32
    %c0_i32_0 = arith.constant 0 : i32
    return %arg0, %c0_i32 : i32, i32
  }
  func.func @transform_1(%arg0: i32, %arg1: i32) -> (i32, i32) {
    %c0_i32 = arith.constant 0 : i32
    %c0_i32_0 = arith.constant 0 : i32
    return %arg0, %c0_i32 : i32, i32
  }
  func.func @transform_2(%arg0: i32, %arg1: i32) -> (i32, i32) {
    %c0_i32 = arith.constant 0 : i32
    %c0_i32_0 = arith.constant 0 : i32
    return %arg0, %c0_i32 : i32, i32
  }
  func.func @transform_3(%arg0: i32, %arg1: i32) -> (i32, i32) {
    %c0_i32 = arith.constant 0 : i32
    %c0_i32_0 = arith.constant 0 : i32
    return %arg0, %c0_i32 : i32, i32
  }
  func.func @transform_4(%arg0: i32, %arg1: i32) -> (i32, i32) {
    %c0_i32 = arith.constant 0 : i32
    %c0_i32_0 = arith.constant 0 : i32
    %c0_i32_1 = arith.constant 0 : i32
    return %c0_i32, %c0_i32_0 : i32, i32
  }
  func.func @transform_5(%arg0: i32, %arg1: i32) -> (i32, i32, i32) {
    %c0_i32 = arith.constant 0 : i32
    %c0_i32_0 = arith.constant 0 : i32
    %c0_i32_1 = arith.constant 0 : i32
    return %arg1, %c0_i32, %c0_i32_0 : i32, i32, i32
  }
  func.func @transform_6(%arg0: i32, %arg1: i32) -> (i32, i32, i32) {
    %c0_i32 = arith.constant 0 : i32
    %c0_i32_0 = arith.constant 0 : i32
    %c0_i32_1 = arith.constant 0 : i32
    return %arg1, %c0_i32, %c0_i32_0 : i32, i32, i32
  }
  func.func @transform_7(%arg0: i32, %arg1: i32) -> (i32, i32, i32) {
    %c0_i32 = arith.constant 0 : i32
    %c0_i32_0 = arith.constant 0 : i32
    %c0_i32_1 = arith.constant 0 : i32
    return %arg1, %c0_i32, %c0_i32_0 : i32, i32, i32
  }
  func.func @transform_8(%arg0: i32, %arg1: i32) -> (i32, i32, i32) {
    %c0_i32 = arith.constant 0 : i32
    %c0_i32_0 = arith.constant 0 : i32
    %c0_i32_1 = arith.constant 0 : i32
    return %arg1, %c0_i32, %c0_i32_0 : i32, i32, i32
  }
  func.func @transform_9(%arg0: i32, %arg1: i32) -> (i32, i32, i32) {
    %c0_i32 = arith.constant 0 : i32
    %c0_i32_0 = arith.constant 0 : i32
    %c0_i32_1 = arith.constant 0 : i32
    return %arg1, %c0_i32, %c0_i32_0 : i32, i32, i32
  }
  func.func @transform_10(%arg0: i32, %arg1: i32) -> (i32, i32, i32) {
    %c0_i32 = arith.constant 0 : i32
    %c0_i32_0 = arith.constant 0 : i32
    %c0_i32_1 = arith.constant 0 : i32
    return %arg1, %c0_i32, %c0_i32_0 : i32, i32, i32
  }
  func.func @transform_11(%arg0: i32, %arg1: i32) -> (i32, i32, i32) {
    %c0_i32 = arith.constant 0 : i32
    %c0_i32_0 = arith.constant 0 : i32
    %c0_i32_1 = arith.constant 0 : i32
    return %arg1, %c0_i32, %c0_i32_0 : i32, i32, i32
  }
  func.func @transform_12(%arg0: i32, %arg1: i32) -> (i32, i32, i32) {
    %c0_i32 = arith.constant 0 : i32
    %c0_i32_0 = arith.constant 0 : i32
    %c0_i32_1 = arith.constant 0 : i32
    return %arg1, %c0_i32, %c0_i32_0 : i32, i32, i32
  }
  func.func @transform_13(%arg0: i32, %arg1: i32) -> (i32, i32, i32) {
    %c0_i32 = arith.constant 0 : i32
    %c0_i32_0 = arith.constant 0 : i32
    %c0_i32_1 = arith.constant 0 : i32
    return %arg1, %c0_i32, %c0_i32_0 : i32, i32, i32
  }
  func.func @transform_14(%arg0: i32, %arg1: i32) -> (i32, i32, i32) {
    %c0_i32 = arith.constant 0 : i32
    %c0_i32_0 = arith.constant 0 : i32
    %c0_i32_1 = arith.constant 0 : i32
    return %arg1, %c0_i32, %c0_i32_0 : i32, i32, i32
  }
  func.func @transform_15(%arg0: i32, %arg1: i32) -> (i32, i32, i32) {
    %c0_i32 = arith.constant 0 : i32
    %c0_i32_0 = arith.constant 0 : i32
    %c0_i32_1 = arith.constant 0 : i32
    return %arg1, %c0_i32, %c0_i32_0 : i32, i32, i32
  }
  func.func @transform_16(%arg0: i32, %arg1: i32) -> (i32, i32) {
    %c0_i32 = arith.constant 0 : i32
    %c0_i32_0 = arith.constant 0 : i32
    return %arg0, %c0_i32 : i32, i32
  }
}

</mosaic_0001>

<llo_original>
// kernel: tpu_custom_call.1
$region0: #{tpu_custom_call.1}
  #allocation0 [shape = 'u32[]', space=smem, size = 0x4, offset = 0x4, fixed_abs, tag = 'smem constant byte address 0x4 - core index']
  #allocation1 [shape = 'u32[144,128]{1,0:T(1,128)}', space=vmem, size = 0x12000, scoped, tag = 'internal scratch']
  #allocation2 [shape = 'bf16[16,32]{1,0:T(16,128)(2,1)}', space=vmem, size = 0x1000, scoped, tag = 'scratch operand']
  %s0 = inlined_call_operand.hbm [shape: f32[16,32], index: 0, kind: input, shape index: {}]
  %s1 = inlined_call_operand.hbm [shape: bf16[16,32], index: 1, kind: input, shape index: {}]
  %s2 = inlined_call_operand.hbm [shape: bf16[32,32], index: 2, kind: input, shape index: {}]
  %s3 = inlined_call_operand.hbm [shape: bf16[32,32], index: 3, kind: input, shape index: {}]
  %s4 = inlined_call_operand.vmem [shape: f32[2,32], index: 4, kind: input, shape index: {}]
  %s5 = inlined_call_operand.vmem [shape: bf16[2,32,64], index: 5, kind: input, shape index: {}]
  %s6 = inlined_call_operand.vmem [shape: bf16[2,32,32], index: 6, kind: input, shape index: {}]
  %s7 = inlined_call_operand.vmem [shape: bf16[2,32,32], index: 7, kind: input, shape index: {}]
  %s8 = inlined_call_operand.hbm [shape: bf16[2,32,32], index: 8, kind: input, shape index: {}]
  %s9 = inlined_call_operand.hbm [shape: bf16[2,32,32], index: 9, kind: input, shape index: {}]
  %s10 = inlined_call_operand.hbm [shape: bf16[2,32,32], index: 10, kind: input, shape index: {}]
  %s11 = inlined_call_operand.hbm [shape: bf16[2,32,32], index: 11, kind: input, shape index: {}]
  %s12 = inlined_call_operand.hbm [shape: bf16[2,32,64], index: 12, kind: input, shape index: {}]
  %s13 = inlined_call_operand.vmem [shape: f32[2,1,64], index: 13, kind: input, shape index: {}]
  %s14 = inlined_call_operand.vmem [shape: bf16[2,64,32], index: 14, kind: input, shape index: {}]
  %s15 = inlined_call_operand.hbm [shape: f32[2,16,32], index: 15, kind: input, shape index: {}]
  %s16 = inlined_call_operand.hbm [shape: f32[16,32], index: 16, kind: output, shape index: {}]
  %s17 = sld [smem:[#allocation0]]
  $region149: #{tpu_custom_call.1} parent=0
    _
  %s19 = ssub.s32 1, %s17
  %s20 = scalar_select 0, %s19, %s17
  $region1: #{tpu_custom_call.1} parent=0
    #allocation3 [shape = 'u8[8192]{0}', space=vmem, size = 0x2000, scoped, tag = 'input window, operand 0, single buffered']
    #allocation4 [shape = 's32[2]{0}', space=sflag, size = 0x8, scoped, tag = 'scoped memory for tpu_custom_call.1']
    #allocation5 [shape = 's32[2]{0}', space=sflag, size = 0x8, scoped, tag = 'scoped memory for tpu_custom_call.1']
    #allocation6 [shape = 'u8[4096]{0}', space=vmem, size = 0x1000, scoped, tag = 'input window, operand 1, single buffered']
    #allocation7 [shape = 's32[1]{0}', space=sflag, size = 0x4, scoped, tag = 'scoped memory for tpu_custom_call.1']
    #allocation8 [shape = 'u8[8192]{0}', space=vmem, size = 0x2000, scoped, tag = 'input window, operand 2, single buffered']
    #allocation9 [shape = 'u8[8192]{0}', space=vmem, size = 0x2000, scoped, tag = 'input window, operand 3, single buffered']
    #allocation10 [shape = 's32[1]{0}', space=sflag, size = 0x4, scoped, tag = 'scoped memory for tpu_custom_call.1']
    #allocation11 [shape = 'u8[16384]{0}', space=vmem, size = 0x4000, scoped, tag = 'input window, operand 8']
    #allocation12 [shape = 'u8[16384]{0}', space=vmem, size = 0x4000, scoped, tag = 'input window, operand 9']
    #allocation13 [shape = 'u8[16384]{0}', space=vmem, size = 0x4000, scoped, tag = 'input window, operand 10']
    #allocation14 [shape = 'u8[16384]{0}', space=vmem, size = 0x4000, scoped, tag = 'input window, operand 11']
    #allocation15 [shape = 'u8[16384]{0}', space=vmem, size = 0x4000, scoped, tag = 'input window, operand 12']
    #allocation16 [shape = 'u8[16384]{0}', space=vmem, size = 0x4000, scoped, tag = 'input window, operand 15']
    #allocation17 [shape = 'u8[8192]{0}', space=vmem, size = 0x2000, scoped, tag = 'output window, operand 0, single buffered']
    %21 = vsyncpa [#allocation4], 0
    %22 = vsyncpa [#allocation7], 0
    %23 = vsyncpa [#allocation10], 0
    %24 = vsyncpa [#allocation5], 0
    loop: start=0, step=1, limit=4
    $region2: #{tpu_custom_call.1} parent=1 // loop_pre_header
      _
    $region3: #{tpu_custom_call.1} parent=1 // loop_header
      %s26 = sphi 0, %s30
      %p27 = scmp.ge.s32.totalorder %s26, 4
      %s33 = sphi 0, %s45
      %s34 = sphi 0, %s41
      %s35 = sphi 0, %s33
      %s36 = sphi 0, %s34
      %s37 = sphi 0, %s35
      %s38 = sphi 0, %s36
      %s48 = sphi 0, %s50
      %s51 = sphi 0, %s48
      %s52 = sphi 0, %s51
      %s68 = sphi 0, %s52
      %s74 = sphi 0, %s76
      %s77 = sphi 0, %s74
      %s78 = sphi 0, %s77
      %s94 = sphi 0, %s78
      %s100 = sphi 0, %s102
      %s103 = sphi 0, %s100
      %s104 = sphi 0, %s103
      %s120 = sphi 0, %s104
      %s126 = sphi 0, %s128
      %s129 = sphi 0, %s126
      %s130 = sphi 0, %s129
      %s146 = sphi 0, %s130
      %s150 = sphi 0, %s150
      %s152 = sphi 0, %s150
      %s153 = sphi 0, %s152
      %s167 = sphi 0, %s153
      %s173 = sphi 0, %s175
      %s176 = sphi 0, %s173
      %s177 = sphi 0, %s176
      %s193 = sphi 0, %s177
      %s199 = sphi 0, %s201
      %s202 = sphi 0, %s199
      %s203 = sphi 0, %s202
      %s219 = sphi 0, %s203
      %s225 = sphi 0, %s227
      %s228 = sphi 0, %s225
      %s229 = sphi 0, %s228
      %s245 = sphi 0, %s229
      %s251 = sphi 0, %s253
      %s254 = sphi 0, %s251
      %s255 = sphi 0, %s254
      %s271 = sphi 0, %s255
      %s277 = sphi 0, %s279
      %s280 = sphi 0, %s277
      %s281 = sphi 0, %s280
      %s297 = sphi 0, %s281
      %s303 = sphi 0, %s305
      %s306 = sphi 0, %s303
      %s307 = sphi 0, %s306
      %s323 = sphi 0, %s307
      %s329 = sphi 0, %s331
      %s332 = sphi 0, %s329
      %s333 = sphi 0, %s332
      %s349 = sphi 0, %s333
      %s355 = sphi 0, %s357
      %s358 = sphi 0, %s355
      %s359 = sphi 0, %s358
      %s375 = sphi 0, %s359
      %s381 = sphi 0, %s383
      %s384 = sphi 0, %s381
      %s385 = sphi 0, %s384
      %s401 = sphi 0, %s385
      %s407 = sphi 0, %s409
      %s410 = sphi 0, %s407
      %s411 = sphi 0, %s410
      %s427 = sphi 0, %s411
      %s433 = sphi 0, %s435
      %s436 = sphi 0, %s433
      %s437 = sphi 0, %s436
      %s453 = sphi 0, %s437
      %s459 = sphi 0, %s461
      %s462 = sphi 0, %s459
      %s463 = sphi 0, %s462
      %s479 = sphi 0, %s463
    $region4: #{tpu_custom_call.1} parent=1 // loop_header_branch
      %29 = sbr.rel (%p27) target = $region8
    $region5: #{tpu_custom_call.1} parent=1 // loop_body
      %s31 = ssub.s32 %s26, 1
      %s32 = ssub.s32 %s26, 2
      %s39 = sadd.s32 1, %s34
      %p40 = scmp.ge.s32.totalorder %s39, 2
      %s41 = scalar_select %p40, 0, %s39
      %s42 = sadd.s32 1, %s33
      %s43 = scalar_select %p40, %s42, %s33
      %p44 = scmp.ge.s32.totalorder %s43, 1
      %s45 = scalar_select %p44, 0, %s43
      %s46 = ssub.s32 %s33, %s45
      %p47 = scmp.eq.s32.totalorder %s46, 0
      %s49 = sadd.s32 %s48, 1
      %s50 = scalar_select %p47, %s48, %s49
      %p53 = pneg %p47
      %p54 = scmp.eq.s32.totalorder %s26, 1
      %p55 = por %p53, %p54
      %p56 = scmp.ne.s32.totalorder %s48, %s51
      %p57 = scmp.eq.s32.totalorder %s26, 0
      %p58 = por %p56, %p57
      %p59 = scmp.ne.s32.totalorder %s48, %s51
      %p60 = scmp.eq.s32.totalorder %s31, 1
      %p61 = por %p59, %p60
      %p62 = scmp.ne.s32.totalorder %s51, %s52
      %p63 = scmp.eq.s32.totalorder %s31, 0
      %p64 = por %p62, %p63
      %p65 = scmp.ne.s32.totalorder %s51, %s52
      %p66 = scmp.eq.s32.totalorder %s32, 1
      %p67 = por %p65, %p66
      %p69 = scmp.ne.s32.totalorder %s52, %s68
      %p70 = scmp.eq.s32.totalorder %s32, 0
      %p71 = por %p69, %p70
      %s72 = ssub.s32 %s33, %s45
      %p73 = scmp.eq.s32.totalorder %s72, 0
      %s75 = sadd.s32 %s74, 1
      %s76 = scalar_select %p73, %s74, %s75
      %p79 = pneg %p73
      %p80 = scmp.eq.s32.totalorder %s26, 1
      %p81 = por %p79, %p80
      %p82 = scmp.ne.s32.totalorder %s74, %s77
      %p83 = scmp.eq.s32.totalorder %s26, 0
      %p84 = por %p82, %p83
      %p85 = scmp.ne.s32.totalorder %s74, %s77
      %p86 = scmp.eq.s32.totalorder %s31, 1
      %p87 = por %p85, %p86
      %p88 = scmp.ne.s32.totalorder %s77, %s78
      %p89 = scmp.eq.s32.totalorder %s31, 0
      %p90 = por %p88, %p89
      %p91 = scmp.ne.s32.totalorder %s77, %s78
      %p92 = scmp.eq.s32.totalorder %s32, 1
      %p93 = por %p91, %p92
      %p95 = scmp.ne.s32.totalorder %s78, %s94
      %p96 = scmp.eq.s32.totalorder %s32, 0
      %p97 = por %p95, %p96
      %s98 = ssub.s32 %s33, %s45
      %p99 = scmp.eq.s32.totalorder %s98, 0
      %s101 = sadd.s32 %s100, 1
      %s102 = scalar_select %p99, %s100, %s101
      %p105 = pneg %p99
      %p106 = scmp.eq.s32.totalorder %s26, 1
      %p107 = por %p105, %p106
      %p108 = scmp.ne.s32.totalorder %s100, %s103
      %p109 = scmp.eq.s32.totalorder %s26, 0
      %p110 = por %p108, %p109
      %p111 = scmp.ne.s32.totalorder %s100, %s103
      %p112 = scmp.eq.s32.totalorder %s31, 1
      %p113 = por %p111, %p112
      %p114 = scmp.ne.s32.totalorder %s103, %s104
      %p115 = scmp.eq.s32.totalorder %s31, 0
      %p116 = por %p114, %p115
      %p117 = scmp.ne.s32.totalorder %s103, %s104
      %p118 = scmp.eq.s32.totalorder %s32, 1
      %p119 = por %p117, %p118
      %p121 = scmp.ne.s32.totalorder %s104, %s120
      %p122 = scmp.eq.s32.totalorder %s32, 0
      %p123 = por %p121, %p122
      %s124 = ssub.s32 %s33, %s45
      %p125 = scmp.eq.s32.totalorder %s124, 0
      %s127 = sadd.s32 %s126, 1
      %s128 = scalar_select %p125, %s126, %s127
      %p131 = pneg %p125
      %p132 = scmp.eq.s32.totalorder %s26, 1
      %p133 = por %p131, %p132
      %p134 = scmp.ne.s32.totalorder %s126, %s129
      %p135 = scmp.eq.s32.totalorder %s26, 0
      %p136 = por %p134, %p135
      %p137 = scmp.ne.s32.totalorder %s126, %s129
      %p138 = scmp.eq.s32.totalorder %s31, 1
      %p139 = por %p137, %p138
      %p140 = scmp.ne.s32.totalorder %s129, %s130
      %p141 = scmp.eq.s32.totalorder %s31, 0
      %p142 = por %p140, %p141
      %p143 = scmp.ne.s32.totalorder %s129, %s130
      %p144 = scmp.eq.s32.totalorder %s32, 1
      %p145 = por %p143, %p144
      %p147 = scmp.ne.s32.totalorder %s130, %s146
      %p148 = scmp.eq.s32.totalorder %s32, 0
      %p149 = por %p147, %p148
      %s151 = sadd.s32 %s150, 1
      %p154 = scmp.eq.s32.totalorder %s26, 1
      %p155 = scmp.ne.s32.totalorder %s150, %s152
      %p156 = scmp.eq.s32.totalorder %s26, 0
      %p157 = por %p155, %p156
      %p158 = scmp.ne.s32.totalorder %s150, %s152
      %p159 = scmp.eq.s32.totalorder %s31, 1
      %p160 = por %p158, %p159
      %p161 = scmp.ne.s32.totalorder %s152, %s153
      %p162 = scmp.eq.s32.totalorder %s31, 0
      %p163 = por %p161, %p162
      %p164 = scmp.ne.s32.totalorder %s152, %s153
      %p165 = scmp.eq.s32.totalorder %s32, 1
      %p166 = por %p164, %p165
      %p168 = scmp.ne.s32.totalorder %s153, %s167
      %p169 = scmp.eq.s32.totalorder %s32, 0
      %p170 = por %p168, %p169
      %s171 = ssub.s32 %s34, %s41
      %p172 = scmp.eq.s32.totalorder %s171, 0
      %s174 = sadd.s32 %s173, 1
      %s175 = scalar_select %p172, %s173, %s174
      %p178 = pneg %p172
      %p179 = scmp.eq.s32.totalorder %s26, 1
      %p180 = por %p178, %p179
      %p181 = scmp.ne.s32.totalorder %s173, %s176
      %p182 = scmp.eq.s32.totalorder %s26, 0
      %p183 = por %p181, %p182
      %p184 = scmp.ne.s32.totalorder %s173, %s176
      %p185 = scmp.eq.s32.totalorder %s31, 1
      %p186 = por %p184, %p185
      %p187 = scmp.ne.s32.totalorder %s176, %s177
      %p188 = scmp.eq.s32.totalorder %s31, 0
      %p189 = por %p187, %p188
      %p190 = scmp.ne.s32.totalorder %s176, %s177
      %p191 = scmp.eq.s32.totalorder %s32, 1
      %p192 = por %p190, %p191
      %p194 = scmp.ne.s32.totalorder %s177, %s193
      %p195 = scmp.eq.s32.totalorder %s32, 0
      %p196 = por %p194, %p195
      %s197 = ssub.s32 %s34, %s41
      %p198 = scmp.eq.s32.totalorder %s197, 0
      %s200 = sadd.s32 %s199, 1
      %s201 = scalar_select %p198, %s199, %s200
      %p204 = pneg %p198
      %p205 = scmp.eq.s32.totalorder %s26, 1
      %p206 = por %p204, %p205
      %p207 = scmp.ne.s32.totalorder %s199, %s202
      %p208 = scmp.eq.s32.totalorder %s26, 0
      %p209 = por %p207, %p208
      %p210 = scmp.ne.s32.totalorder %s199, %s202
      %p211 = scmp.eq.s32.totalorder %s31, 1
      %p212 = por %p210, %p211
      %p213 = scmp.ne.s32.totalorder %s202, %s203
      %p214 = scmp.eq.s32.totalorder %s31, 0
      %p215 = por %p213, %p214
      %p216 = scmp.ne.s32.totalorder %s202, %s203
      %p217 = scmp.eq.s32.totalorder %s32, 1
      %p218 = por %p216, %p217
      %p220 = scmp.ne.s32.totalorder %s203, %s219
      %p221 = scmp.eq.s32.totalorder %s32, 0
      %p222 = por %p220, %p221
      %s223 = ssub.s32 %s34, %s41
      %p224 = scmp.eq.s32.totalorder %s223, 0
      %s226 = sadd.s32 %s225, 1
      %s227 = scalar_select %p224, %s225, %s226
      %p230 = pneg %p224
      %p231 = scmp.eq.s32.totalorder %s26, 1
      %p232 = por %p230, %p231
      %p233 = scmp.ne.s32.totalorder %s225, %s228
      %p234 = scmp.eq.s32.totalorder %s26, 0
      %p235 = por %p233, %p234
      %p236 = scmp.ne.s32.totalorder %s225, %s228
      %p237 = scmp.eq.s32.totalorder %s31, 1
      %p238 = por %p236, %p237
      %p239 = scmp.ne.s32.totalorder %s228, %s229
      %p240 = scmp.eq.s32.totalorder %s31, 0
      %p241 = por %p239, %p240
      %p242 = scmp.ne.s32.totalorder %s228, %s229
      %p243 = scmp.eq.s32.totalorder %s32, 1
      %p244 = por %p242, %p243
      %p246 = scmp.ne.s32.totalorder %s229, %s245
      %p247 = scmp.eq.s32.totalorder %s32, 0
      %p248 = por %p246, %p247
      %s249 = ssub.s32 %s34, %s41
      %p250 = scmp.eq.s32.totalorder %s249, 0
      %s252 = sadd.s32 %s251, 1
      %s253 = scalar_select %p250, %s251, %s252
      %p256 = pneg %p250
      %p257 = scmp.eq.s32.totalorder %s26, 1
      %p258 = por %p256, %p257
      %p259 = scmp.ne.s32.totalorder %s251, %s254
      %p260 = scmp.eq.s32.totalorder %s26, 0
      %p261 = por %p259, %p260
      %p262 = scmp.ne.s32.totalorder %s251, %s254
      %p263 = scmp.eq.s32.totalorder %s31, 1
      %p264 = por %p262, %p263
      %p265 = scmp.ne.s32.totalorder %s254, %s255
      %p266 = scmp.eq.s32.totalorder %s31, 0
      %p267 = por %p265, %p266
      %p268 = scmp.ne.s32.totalorder %s254, %s255
      %p269 = scmp.eq.s32.totalorder %s32, 1
      %p270 = por %p268, %p269
      %p272 = scmp.ne.s32.totalorder %s255, %s271
      %p273 = scmp.eq.s32.totalorder %s32, 0
      %p274 = por %p272, %p273
      %s275 = ssub.s32 %s34, %s41
      %p276 = scmp.eq.s32.totalorder %s275, 0
      %s278 = sadd.s32 %s277, 1
      %s279 = scalar_select %p276, %s277, %s278
      %p282 = pneg %p276
      %p283 = scmp.eq.s32.totalorder %s26, 1
      %p284 = por %p282, %p283
      %p285 = scmp.ne.s32.totalorder %s277, %s280
      %p286 = scmp.eq.s32.totalorder %s26, 0
      %p287 = por %p285, %p286
      %p288 = scmp.ne.s32.totalorder %s277, %s280
      %p289 = scmp.eq.s32.totalorder %s31, 1
      %p290 = por %p288, %p289
      %p291 = scmp.ne.s32.totalorder %s280, %s281
      %p292 = scmp.eq.s32.totalorder %s31, 0
      %p293 = por %p291, %p292
      %p294 = scmp.ne.s32.totalorder %s280, %s281
      %p295 = scmp.eq.s32.totalorder %s32, 1
      %p296 = por %p294, %p295
      %p298 = scmp.ne.s32.totalorder %s281, %s297
      %p299 = scmp.eq.s32.totalorder %s32, 0
      %p300 = por %p298, %p299
      %s301 = ssub.s32 %s34, %s41
      %p302 = scmp.eq.s32.totalorder %s301, 0
      %s304 = sadd.s32 %s303, 1
      %s305 = scalar_select %p302, %s303, %s304
      %p308 = pneg %p302
      %p309 = scmp.eq.s32.totalorder %s26, 1
      %p310 = por %p308, %p309
      %p311 = scmp.ne.s32.totalorder %s303, %s306
      %p312 = scmp.eq.s32.totalorder %s26, 0
      %p313 = por %p311, %p312
      %p314 = scmp.ne.s32.totalorder %s303, %s306
      %p315 = scmp.eq.s32.totalorder %s31, 1
      %p316 = por %p314, %p315
      %p317 = scmp.ne.s32.totalorder %s306, %s307
      %p318 = scmp.eq.s32.totalorder %s31, 0
      %p319 = por %p317, %p318
      %p320 = scmp.ne.s32.totalorder %s306, %s307
      %p321 = scmp.eq.s32.totalorder %s32, 1
      %p322 = por %p320, %p321
      %p324 = scmp.ne.s32.totalorder %s307, %s323
      %p325 = scmp.eq.s32.totalorder %s32, 0
      %p326 = por %p324, %p325
      %s327 = ssub.s32 %s34, %s41
      %p328 = scmp.eq.s32.totalorder %s327, 0
      %s330 = sadd.s32 %s329, 1
      %s331 = scalar_select %p328, %s329, %s330
      %p334 = pneg %p328
      %p335 = scmp.eq.s32.totalorder %s26, 1
      %p336 = por %p334, %p335
      %p337 = scmp.ne.s32.totalorder %s329, %s332
      %p338 = scmp.eq.s32.totalorder %s26, 0
      %p339 = por %p337, %p338
      %p340 = scmp.ne.s32.totalorder %s329, %s332
      %p341 = scmp.eq.s32.totalorder %s31, 1
      %p342 = por %p340, %p341
      %p343 = scmp.ne.s32.totalorder %s332, %s333
      %p344 = scmp.eq.s32.totalorder %s31, 0
      %p345 = por %p343, %p344
      %p346 = scmp.ne.s32.totalorder %s332, %s333
      %p347 = scmp.eq.s32.totalorder %s32, 1
      %p348 = por %p346, %p347
      %p350 = scmp.ne.s32.totalorder %s333, %s349
      %p351 = scmp.eq.s32.totalorder %s32, 0
      %p352 = por %p350, %p351
      %s353 = ssub.s32 %s34, %s41
      %p354 = scmp.eq.s32.totalorder %s353, 0
      %s356 = sadd.s32 %s355, 1
      %s357 = scalar_select %p354, %s355, %s356
      %p360 = pneg %p354
      %p361 = scmp.eq.s32.totalorder %s26, 1
      %p362 = por %p360, %p361
      %p363 = scmp.ne.s32.totalorder %s355, %s358
      %p364 = scmp.eq.s32.totalorder %s26, 0
      %p365 = por %p363, %p364
      %p366 = scmp.ne.s32.totalorder %s355, %s358
      %p367 = scmp.eq.s32.totalorder %s31, 1
      %p368 = por %p366, %p367
      %p369 = scmp.ne.s32.totalorder %s358, %s359
      %p370 = scmp.eq.s32.totalorder %s31, 0
      %p371 = por %p369, %p370
      %p372 = scmp.ne.s32.totalorder %s358, %s359
      %p373 = scmp.eq.s32.totalorder %s32, 1
      %p374 = por %p372, %p373
      %p376 = scmp.ne.s32.totalorder %s359, %s375
      %p377 = scmp.eq.s32.totalorder %s32, 0
      %p378 = por %p376, %p377
      %s379 = ssub.s32 %s34, %s41
      %p380 = scmp.eq.s32.totalorder %s379, 0
      %s382 = sadd.s32 %s381, 1
      %s383 = scalar_select %p380, %s381, %s382
      %p386 = pneg %p380
      %p387 = scmp.eq.s32.totalorder %s26, 1
      %p388 = por %p386, %p387
      %p389 = scmp.ne.s32.totalorder %s381, %s384
      %p390 = scmp.eq.s32.totalorder %s26, 0
      %p391 = por %p389, %p390
      %p392 = scmp.ne.s32.totalorder %s381, %s384
      %p393 = scmp.eq.s32.totalorder %s31, 1
      %p394 = por %p392, %p393
      %p395 = scmp.ne.s32.totalorder %s384, %s385
      %p396 = scmp.eq.s32.totalorder %s31, 0
      %p397 = por %p395, %p396
      %p398 = scmp.ne.s32.totalorder %s384, %s385
      %p399 = scmp.eq.s32.totalorder %s32, 1
      %p400 = por %p398, %p399
      %p402 = scmp.ne.s32.totalorder %s385, %s401
      %p403 = scmp.eq.s32.totalorder %s32, 0
      %p404 = por %p402, %p403
      %s405 = ssub.s32 %s34, %s41
      %p406 = scmp.eq.s32.totalorder %s405, 0
      %s408 = sadd.s32 %s407, 1
      %s409 = scalar_select %p406, %s407, %s408
      %p412 = pneg %p406
      %p413 = scmp.eq.s32.totalorder %s26, 1
      %p414 = por %p412, %p413
      %p415 = scmp.ne.s32.totalorder %s407, %s410
      %p416 = scmp.eq.s32.totalorder %s26, 0
      %p417 = por %p415, %p416
      %p418 = scmp.ne.s32.totalorder %s407, %s410
      %p419 = scmp.eq.s32.totalorder %s31, 1
      %p420 = por %p418, %p419
      %p421 = scmp.ne.s32.totalorder %s410, %s411
      %p422 = scmp.eq.s32.totalorder %s31, 0
      %p423 = por %p421, %p422
      %p424 = scmp.ne.s32.totalorder %s410, %s411
      %p425 = scmp.eq.s32.totalorder %s32, 1
      %p426 = por %p424, %p425
      %p428 = scmp.ne.s32.totalorder %s411, %s427
      %p429 = scmp.eq.s32.totalorder %s32, 0
      %p430 = por %p428, %p429
      %s431 = ssub.s32 %s34, %s41
      %p432 = scmp.eq.s32.totalorder %s431, 0
      %s434 = sadd.s32 %s433, 1
      %s435 = scalar_select %p432, %s433, %s434
      %p438 = pneg %p432
      %p439 = scmp.eq.s32.totalorder %s26, 1
      %p440 = por %p438, %p439
      %p441 = scmp.ne.s32.totalorder %s433, %s436
      %p442 = scmp.eq.s32.totalorder %s26, 0
      %p443 = por %p441, %p442
      %p444 = scmp.ne.s32.totalorder %s433, %s436
      %p445 = scmp.eq.s32.totalorder %s31, 1
      %p446 = por %p444, %p445
      %p447 = scmp.ne.s32.totalorder %s436, %s437
      %p448 = scmp.eq.s32.totalorder %s31, 0
      %p449 = por %p447, %p448
      %p450 = scmp.ne.s32.totalorder %s436, %s437
      %p451 = scmp.eq.s32.totalorder %s32, 1
      %p452 = por %p450, %p451
      %p454 = scmp.ne.s32.totalorder %s437, %s453
      %p455 = scmp.eq.s32.totalorder %s32, 0
      %p456 = por %p454, %p455
      %s457 = ssub.s32 %s33, %s45
      %p458 = scmp.eq.s32.totalorder %s457, 0
      %s460 = sadd.s32 %s459, 1
      %s461 = scalar_select %p458, %s459, %s460
      %p464 = pneg %p458
      %p465 = scmp.eq.s32.totalorder %s26, 1
      %p466 = por %p464, %p465
      %p467 = scmp.ne.s32.totalorder %s459, %s462
      %p468 = scmp.eq.s32.totalorder %s26, 0
      %p469 = por %p467, %p468
      %p470 = scmp.ne.s32.totalorder %s459, %s462
      %p471 = scmp.eq.s32.totalorder %s31, 1
      %p472 = por %p470, %p471
      %p473 = scmp.ne.s32.totalorder %s462, %s463
      %p474 = scmp.eq.s32.totalorder %s31, 0
      %p475 = por %p473, %p474
      %p476 = scmp.ne.s32.totalorder %s462, %s463
      %p477 = scmp.eq.s32.totalorder %s32, 1
      %p478 = por %p476, %p477
      %p480 = scmp.ne.s32.totalorder %s463, %s479
      %p481 = scmp.eq.s32.totalorder %s32, 0
      %p482 = por %p480, %p481
      %p483 = scmp.le.s32.totalorder 1, %s26
      %p484 = scmp.lt.s32.totalorder %s26, 3
      %p485 = pnand %p483, %p484
      %p486 = pneg %p485
      // Predicated region
      $region9: #{tpu_custom_call.1} parent=5 // pred_check
        _
      $region10: #{tpu_custom_call.1} parent=5 // pred_check_branch
        %488 = sbr.rel (%p485) target = $region12
      $region11: #{tpu_custom_call.1} parent=5 // pred_region
        %s489 = ssub.s32 %s26, 1
        // Predicated region
        $region13: #{tpu_custom_call.1} parent=11 // pred_check
          %p490 = pneg %p64
        $region14: #{tpu_custom_call.1} parent=11 // pred_check_branch
          %492 = sbr.rel (%p490) target = $region16
        $region15: #{tpu_custom_call.1} parent=11 // pred_region
          %s493 = smul.u32 2, %s35
          %s495 = ssub.s32 256, 256
          %496 = vsyncadd [#allocation4], %s495
          %s497 = smul.addr %s493, 128
          %s498 = scalar_lea.hbm %s0, %s497
          %s499 = sshll.u32 [#allocation3], 4
          %s500 = int_to_ptr.vmem [resolvable:$true] %s499
          %505 = dma.hbm_to_vmem [thread:$0]  %s498, 256, %s500, [#allocation4], 128, 128, 8
        $region16: #{tpu_custom_call.1} parent=11 // pred_fallthru
          _
        // Predicated region
        $region17: #{tpu_custom_call.1} parent=11 // pred_check
          %p506 = pneg %p90
        $region18: #{tpu_custom_call.1} parent=11 // pred_check_branch
          %508 = sbr.rel (%p506) target = $region20
        $region19: #{tpu_custom_call.1} parent=11 // pred_region
          %s509 = smul.u32 2, %s35
          %s511 = ssub.s32 128, 128
          %512 = vsyncadd [#allocation7], %s511
          %s513 = smul.addr %s509, 64
          %s514 = scalar_lea.hbm %s1, %s513
          %s515 = sshll.u32 [#allocation6], 4
          %s516 = int_to_ptr.vmem [resolvable:$true] %s515
          %521 = dma.hbm_to_vmem [thread:$0]  %s514, 128, %s516, [#allocation7], 64, 64, 4
        $region20: #{tpu_custom_call.1} parent=11 // pred_fallthru
          _
        // Predicated region
        $region21: #{tpu_custom_call.1} parent=11 // pred_check
          %p522 = pneg %p116
        $region22: #{tpu_custom_call.1} parent=11 // pred_check_branch
          %524 = sbr.rel (%p522) target = $region24
        $region23: #{tpu_custom_call.1} parent=11 // pred_region
          %s525 = smul.u32 4, %s35
          %s527 = ssub.s32 256, 256
          %528 = vsyncadd [#allocation7], %s527
          %s529 = smul.addr %s525, 64
          %s530 = scalar_lea.hbm %s2, %s529
          %s531 = sshll.u32 [#allocation8], 4
          %s532 = int_to_ptr.vmem [resolvable:$true] %s531
          %537 = dma.hbm_to_vmem [thread:$0]  %s530, 256, %s532, [#allocation7], 64, 64, 4
        $region24: #{tpu_custom_call.1} parent=11 // pred_fallthru
          _
        // Predicated region
        $region25: #{tpu_custom_call.1} parent=11 // pred_check
          %p538 = pneg %p142
        $region26: #{tpu_custom_call.1} parent=11 // pred_check_branch
          %540 = sbr.rel (%p538) target = $region28
        $region27: #{tpu_custom_call.1} parent=11 // pred_region
          %s541 = smul.u32 4, %s35
          %s543 = ssub.s32 256, 256
          %544 = vsyncadd [#allocation10], %s543
          %s545 = smul.addr %s541, 64
          %s546 = scalar_lea.hbm %s3, %s545
          %s547 = sshll.u32 [#allocation9], 4
          %s548 = int_to_ptr.vmem [resolvable:$true] %s547
          %553 = dma.hbm_to_vmem [thread:$0]  %s546, 256, %s548, [#allocation10], 64, 64, 4
        $region28: #{tpu_custom_call.1} parent=11 // pred_fallthru
          _
        // Predicated region
        $region29: #{tpu_custom_call.1} parent=11 // pred_check
          %p554 = pneg %p163
        $region30: #{tpu_custom_call.1} parent=11 // pred_check_branch
          %556 = sbr.rel (%p554) target = $region32
        $region31: #{tpu_custom_call.1} parent=11 // pred_region
          _
        $region32: #{tpu_custom_call.1} parent=11 // pred_fallthru
          _
      $region12: #{tpu_custom_call.1} parent=5 // pred_fallthru
        _
      %p557 = scmp.lt.s32.totalorder %s26, 2
      // Predicated region
      $region33: #{tpu_custom_call.1} parent=5 // pred_check
        %p558 = pneg %p557
      $region34: #{tpu_custom_call.1} parent=5 // pred_check_branch
        %560 = sbr.rel (%p558) target = $region36
      $region35: #{tpu_custom_call.1} parent=5 // pred_region
        // Predicated region
        $region37: #{tpu_custom_call.1} parent=35 // pred_check
          %p561 = pneg %p183
        $region38: #{tpu_custom_call.1} parent=35 // pred_check_branch
          %563 = sbr.rel (%p561) target = $region40
        $region39: #{tpu_custom_call.1} parent=35 // pred_region
          %p564 = scmp.lt.s32.totalorder %s34, 1
          %s565 = scalar_select %p564, %s34, 1
          %s566 = smul.addr %s565, 4
          %s567 = smul.addr %s566, 4
          %s568 = scalar_lea.vmem %s5, %s567
        $region40: #{tpu_custom_call.1} parent=35 // pred_fallthru
          _
        // Predicated region
        $region41: #{tpu_custom_call.1} parent=35 // pred_check
          %p569 = pneg %p209
        $region42: #{tpu_custom_call.1} parent=35 // pred_check_branch
          %571 = sbr.rel (%p569) target = $region44
        $region43: #{tpu_custom_call.1} parent=35 // pred_region
          %p572 = scmp.lt.s32.totalorder %s34, 1
          %s573 = scalar_select %p572, %s34, 1
          %s574 = smul.addr %s573, 4
          %s575 = smul.addr %s574, 4
          %s576 = scalar_lea.vmem %s6, %s575
        $region44: #{tpu_custom_call.1} parent=35 // pred_fallthru
          _
        // Predicated region
        $region45: #{tpu_custom_call.1} parent=35 // pred_check
          %p577 = pneg %p235
        $region46: #{tpu_custom_call.1} parent=35 // pred_check_branch
          %579 = sbr.rel (%p577) target = $region48
        $region47: #{tpu_custom_call.1} parent=35 // pred_region
          %p580 = scmp.lt.s32.totalorder %s34, 1
          %s581 = scalar_select %p580, %s34, 1
          %s582 = smul.addr %s581, 4
          %s583 = smul.addr %s582, 4
          %s584 = scalar_lea.vmem %s7, %s583
        $region48: #{tpu_custom_call.1} parent=35 // pred_fallthru
          _
        // Predicated region
        $region49: #{tpu_custom_call.1} parent=35 // pred_check
          %p585 = pneg %p261
        $region50: #{tpu_custom_call.1} parent=35 // pred_check_branch
          %587 = sbr.rel (%p585) target = $region52
        $region51: #{tpu_custom_call.1} parent=35 // pred_region
          %s588 = sand.u32 %s26, 1
          %s589 = scalar_lea.sflag [#allocation4], %s588
          %s590 = sand.u32 %s251, 1
          %s591 = smul.addr %s590, 16
          %s592 = scalar_lea.vmem [#allocation11], %s591
          %s594 = ssub.s32 256, 256
          %595 = vsyncadd %s589, %s594
          %s596 = smul.addr %s34, 4
          %s597 = smul.addr %s596, 64
          %s598 = scalar_lea.hbm %s8, %s597
          %s599 = sshll.u32 %s592, 4
          %s600 = int_to_ptr.vmem [resolvable:$true] %s599
          %605 = dma.hbm_to_vmem [thread:$0]  %s598, 256, %s600, %s589, 64, 64, 4
        $region52: #{tpu_custom_call.1} parent=35 // pred_fallthru
          _
        // Predicated region
        $region53: #{tpu_custom_call.1} parent=35 // pred_check
          %p606 = pneg %p287
        $region54: #{tpu_custom_call.1} parent=35 // pred_check_branch
          %608 = sbr.rel (%p606) target = $region56
        $region55: #{tpu_custom_call.1} parent=35 // pred_region
          %s609 = sand.u32 %s26, 1
          %s610 = scalar_lea.sflag [#allocation4], %s609
          %s611 = sand.u32 %s277, 1
          %s612 = smul.addr %s611, 16
          %s613 = scalar_lea.vmem [#allocation12], %s612
          %s615 = ssub.s32 256, 256
          %616 = vsyncadd %s610, %s615
          %s617 = smul.addr %s34, 4
          %s618 = smul.addr %s617, 64
          %s619 = scalar_lea.hbm %s9, %s618
          %s620 = sshll.u32 %s613, 4
          %s621 = int_to_ptr.vmem [resolvable:$true] %s620
          %626 = dma.hbm_to_vmem [thread:$0]  %s619, 256, %s621, %s610, 64, 64, 4
        $region56: #{tpu_custom_call.1} parent=35 // pred_fallthru
          _
        // Predicated region
        $region57: #{tpu_custom_call.1} parent=35 // pred_check
          %p627 = pneg %p313
        $region58: #{tpu_custom_call.1} parent=35 // pred_check_branch
          %629 = sbr.rel (%p627) target = $region60
        $region59: #{tpu_custom_call.1} parent=35 // pred_region
          %s630 = sand.u32 %s26, 1
          %s631 = scalar_lea.sflag [#allocation4], %s630
          %s632 = sand.u32 %s303, 1
          %s633 = smul.addr %s632, 16
          %s634 = scalar_lea.vmem [#allocation13], %s633
          %s636 = ssub.s32 256, 256
          %637 = vsyncadd %s631, %s636
          %s638 = smul.addr %s34, 4
          %s639 = smul.addr %s638, 64
          %s640 = scalar_lea.hbm %s10, %s639
          %s641 = sshll.u32 %s634, 4
          %s642 = int_to_ptr.vmem [resolvable:$true] %s641
          %647 = dma.hbm_to_vmem [thread:$0]  %s640, 256, %s642, %s631, 64, 64, 4
        $region60: #{tpu_custom_call.1} parent=35 // pred_fallthru
          _
        // Predicated region
        $region61: #{tpu_custom_call.1} parent=35 // pred_check
          %p648 = pneg %p339
        $region62: #{tpu_custom_call.1} parent=35 // pred_check_branch
          %650 = sbr.rel (%p648) target = $region64
        $region63: #{tpu_custom_call.1} parent=35 // pred_region
          %s651 = sand.u32 %s26, 1
          %s652 = scalar_lea.sflag [#allocation4], %s651
          %s653 = sand.u32 %s329, 1
          %s654 = smul.addr %s653, 16
          %s655 = scalar_lea.vmem [#allocation14], %s654
          %s657 = ssub.s32 256, 256
          %658 = vsyncadd %s652, %s657
          %s659 = smul.addr %s34, 4
          %s660 = smul.addr %s659, 64
          %s661 = scalar_lea.hbm %s11, %s660
          %s662 = sshll.u32 %s655, 4
          %s663 = int_to_ptr.vmem [resolvable:$true] %s662
          %668 = dma.hbm_to_vmem [thread:$0]  %s661, 256, %s663, %s652, 64, 64, 4
        $region64: #{tpu_custom_call.1} parent=35 // pred_fallthru
          _
        // Predicated region
        $region65: #{tpu_custom_call.1} parent=35 // pred_check
          %p669 = pneg %p365
        $region66: #{tpu_custom_call.1} parent=35 // pred_check_branch
          %671 = sbr.rel (%p669) target = $region68
        $region67: #{tpu_custom_call.1} parent=35 // pred_region
          %s672 = sand.u32 %s26, 1
          %s673 = scalar_lea.sflag [#allocation4], %s672
          %s674 = sand.u32 %s355, 1
          %s675 = smul.addr %s674, 16
          %s676 = scalar_lea.vmem [#allocation15], %s675
          %s678 = ssub.s32 256, 256
          %679 = vsyncadd %s673, %s678
          %s680 = smul.addr %s34, 4
          %s681 = smul.addr %s680, 64
          %s682 = scalar_lea.hbm %s12, %s681
          %s683 = sshll.u32 %s676, 4
          %s684 = int_to_ptr.vmem [resolvable:$true] %s683
          %689 = dma.hbm_to_vmem [thread:$0]  %s682, 256, %s684, %s673, 64, 64, 4
        $region68: #{tpu_custom_call.1} parent=35 // pred_fallthru
          _
        // Predicated region
        $region69: #{tpu_custom_call.1} parent=35 // pred_check
          %p690 = pneg %p391
        $region70: #{tpu_custom_call.1} parent=35 // pred_check_branch
          %692 = sbr.rel (%p690) target = $region72
        $region71: #{tpu_custom_call.1} parent=35 // pred_region
          %p693 = scmp.lt.s32.totalorder %s34, 1
          %s694 = scalar_select %p693, %s34, 1
          %s695 = scalar_lea.vmem %s13, %s694
        $region72: #{tpu_custom_call.1} parent=35 // pred_fallthru
          _
        // Predicated region
        $region73: #{tpu_custom_call.1} parent=35 // pred_check
          %p696 = pneg %p417
        $region74: #{tpu_custom_call.1} parent=35 // pred_check_branch
          %698 = sbr.rel (%p696) target = $region76
        $region75: #{tpu_custom_call.1} parent=35 // pred_region
          %p699 = scmp.lt.s32.totalorder %s34, 1
          %s700 = scalar_select %p699, %s34, 1
          %s701 = smul.addr %s700, 8
          %s702 = smul.addr %s701, 4
          %s703 = scalar_lea.vmem %s14, %s702
        $region76: #{tpu_custom_call.1} parent=35 // pred_fallthru
          _
        // Predicated region
        $region77: #{tpu_custom_call.1} parent=35 // pred_check
          %p704 = pneg %p443
        $region78: #{tpu_custom_call.1} parent=35 // pred_check_branch
          %706 = sbr.rel (%p704) target = $region80
        $region79: #{tpu_custom_call.1} parent=35 // pred_region
          %s707 = sand.u32 %s26, 1
          %s708 = scalar_lea.sflag [#allocation4], %s707
          %s709 = sand.u32 %s433, 1
          %s710 = smul.addr %s709, 16
          %s711 = scalar_lea.vmem [#allocation16], %s710
          %s713 = ssub.s32 256, 256
          %714 = vsyncadd %s708, %s713
          %s715 = smul.addr %s34, 2
          %s716 = smul.addr %s715, 128
          %s717 = scalar_lea.hbm %s15, %s716
          %s718 = sshll.u32 %s711, 4
          %s719 = int_to_ptr.vmem [resolvable:$true] %s718
          %724 = dma.hbm_to_vmem [thread:$0]  %s717, 256, %s719, %s708, 128, 128, 8
        $region80: #{tpu_custom_call.1} parent=35 // pred_fallthru
          _
      $region36: #{tpu_custom_call.1} parent=5 // pred_fallthru
        _
      %p725 = scmp.le.s32.totalorder 1, %s26
      %p726 = scmp.lt.s32.totalorder %s26, 3
      %p727 = pnand %p725, %p726
      %p728 = pneg %p727
      // Predicated region
      $region81: #{tpu_custom_call.1} parent=5 // pred_check
        _
      $region82: #{tpu_custom_call.1} parent=5 // pred_check_branch
        %730 = sbr.rel (%p727) target = $region84
      $region83: #{tpu_custom_call.1} parent=5 // pred_region
        %s731 = ssub.s32 %s26, 1
        // Predicated region
        $region85: #{tpu_custom_call.1} parent=83 // pred_check
          %p732 = pneg %p64
        $region86: #{tpu_custom_call.1} parent=83 // pred_check_branch
          %734 = sbr.rel (%p732) target = $region88
        $region87: #{tpu_custom_call.1} parent=83 // pred_region
          %735 = dma.done [#allocation4], 256
        $region88: #{tpu_custom_call.1} parent=83 // pred_fallthru
          _
        // Predicated region
        $region89: #{tpu_custom_call.1} parent=83 // pred_check
          %p736 = pneg %p90
        $region90: #{tpu_custom_call.1} parent=83 // pred_check_branch
          %738 = sbr.rel (%p736) target = $region92
        $region91: #{tpu_custom_call.1} parent=83 // pred_region
          %739 = dma.done [#allocation7], 128
        $region92: #{tpu_custom_call.1} parent=83 // pred_fallthru
          _
        // Predicated region
        $region93: #{tpu_custom_call.1} parent=83 // pred_check
          %p740 = pneg %p116
        $region94: #{tpu_custom_call.1} parent=83 // pred_check_branch
          %742 = sbr.rel (%p740) target = $region96
        $region95: #{tpu_custom_call.1} parent=83 // pred_region
          %743 = dma.done [#allocation7], 256
        $region96: #{tpu_custom_call.1} parent=83 // pred_fallthru
          _
        // Predicated region
        $region97: #{tpu_custom_call.1} parent=83 // pred_check
          %p744 = pneg %p142
        $region98: #{tpu_custom_call.1} parent=83 // pred_check_branch
          %746 = sbr.rel (%p744) target = $region100
        $region99: #{tpu_custom_call.1} parent=83 // pred_region
          %747 = dma.done [#allocation10], 256
        $region100: #{tpu_custom_call.1} parent=83 // pred_fallthru
          _
        %s748 = sand.u32 %s31, 1
        %s749 = scalar_lea.sflag [#allocation4], %s748
        %s750 = sand.u32 %s254, 1
        %s751 = smul.addr %s750, 16
        %s752 = scalar_lea.vmem [#allocation11], %s751
        // Predicated region
        $region101: #{tpu_custom_call.1} parent=83 // pred_check
          %p753 = pneg %p267
        $region102: #{tpu_custom_call.1} parent=83 // pred_check_branch
          %755 = sbr.rel (%p753) target = $region104
        $region103: #{tpu_custom_call.1} parent=83 // pred_region
          %756 = dma.done %s749, 256
        $region104: #{tpu_custom_call.1} parent=83 // pred_fallthru
          _
        %s757 = sand.u32 %s31, 1
        %s758 = scalar_lea.sflag [#allocation4], %s757
        %s759 = sand.u32 %s280, 1
        %s760 = smul.addr %s759, 16
        %s761 = scalar_lea.vmem [#allocation12], %s760
        // Predicated region
        $region105: #{tpu_custom_call.1} parent=83 // pred_check
          %p762 = pneg %p293
        $region106: #{tpu_custom_call.1} parent=83 // pred_check_branch
          %764 = sbr.rel (%p762) target = $region108
        $region107: #{tpu_custom_call.1} parent=83 // pred_region
          %765 = dma.done %s758, 256
        $region108: #{tpu_custom_call.1} parent=83 // pred_fallthru
          _
        %s766 = sand.u32 %s31, 1
        %s767 = scalar_lea.sflag [#allocation4], %s766
        %s768 = sand.u32 %s306, 1
        %s769 = smul.addr %s768, 16
        %s770 = scalar_lea.vmem [#allocation13], %s769
        // Predicated region
        $region109: #{tpu_custom_call.1} parent=83 // pred_check
          %p771 = pneg %p319
        $region110: #{tpu_custom_call.1} parent=83 // pred_check_branch
          %773 = sbr.rel (%p771) target = $region112
        $region111: #{tpu_custom_call.1} parent=83 // pred_region
          %774 = dma.done %s767, 256
        $region112: #{tpu_custom_call.1} parent=83 // pred_fallthru
          _
        %s775 = sand.u32 %s31, 1
        %s776 = scalar_lea.sflag [#allocation4], %s775
        %s777 = sand.u32 %s332, 1
        %s778 = smul.addr %s777, 16
        %s779 = scalar_lea.vmem [#allocation14], %s778
        // Predicated region
        $region113: #{tpu_custom_call.1} parent=83 // pred_check
          %p780 = pneg %p345
        $region114: #{tpu_custom_call.1} parent=83 // pred_check_branch
          %782 = sbr.rel (%p780) target = $region116
        $region115: #{tpu_custom_call.1} parent=83 // pred_region
          %783 = dma.done %s776, 256
        $region116: #{tpu_custom_call.1} parent=83 // pred_fallthru
          _
        %s784 = sand.u32 %s31, 1
        %s785 = scalar_lea.sflag [#allocation4], %s784
        %s786 = sand.u32 %s358, 1
        %s787 = smul.addr %s786, 16
        %s788 = scalar_lea.vmem [#allocation15], %s787
        // Predicated region
        $region117: #{tpu_custom_call.1} parent=83 // pred_check
          %p789 = pneg %p371
        $region118: #{tpu_custom_call.1} parent=83 // pred_check_branch
          %791 = sbr.rel (%p789) target = $region120
        $region119: #{tpu_custom_call.1} parent=83 // pred_region
          %792 = dma.done %s785, 256
        $region120: #{tpu_custom_call.1} parent=83 // pred_fallthru
          _
        %s793 = sand.u32 %s31, 1
        %s794 = scalar_lea.sflag [#allocation4], %s793
        %s795 = sand.u32 %s436, 1
        %s796 = smul.addr %s795, 16
        %s797 = scalar_lea.vmem [#allocation16], %s796
        // Predicated region
        $region121: #{tpu_custom_call.1} parent=83 // pred_check
          %p798 = pneg %p449
        $region122: #{tpu_custom_call.1} parent=83 // pred_check_branch
          %800 = sbr.rel (%p798) target = $region124
        $region123: #{tpu_custom_call.1} parent=83 // pred_region
          %801 = dma.done %s794, 256
        $region124: #{tpu_custom_call.1} parent=83 // pred_fallthru
          _
        %p802 = pneg %p64
        %p803 = pneg %p61
        %p804 = pneg %p90
        %p805 = pneg %p87
        %p806 = pneg %p116
        %p807 = pneg %p113
        %p808 = pneg %p142
        %p809 = pneg %p139
        %p810 = pneg %p163
        %p811 = pneg %p160
        %p812 = scmp.lt.s32.totalorder %s36, 1
        %s813 = scalar_select %p812, %s36, 1
        %s814 = smul.addr %s813, 4
        %s815 = smul.addr %s814, 4
        %s816 = scalar_lea.vmem %s5, %s815
        %p817 = pneg %p189
        %p818 = pneg %p186
        %p819 = scmp.lt.s32.totalorder %s36, 1
        %s820 = scalar_select %p819, %s36, 1
        %s821 = smul.addr %s820, 4
        %s822 = smul.addr %s821, 4
        %s823 = scalar_lea.vmem %s6, %s822
        %p824 = pneg %p215
        %p825 = pneg %p212
        %p826 = scmp.lt.s32.totalorder %s36, 1
        %s827 = scalar_select %p826, %s36, 1
        %s828 = smul.addr %s827, 4
        %s829 = smul.addr %s828, 4
        %s830 = scalar_lea.vmem %s7, %s829
        %p831 = pneg %p241
        %p832 = pneg %p238
        %s833 = sand.u32 %s31, 1
        %s834 = scalar_lea.sflag [#allocation4], %s833
        %s835 = sand.u32 %s254, 1
        %s836 = smul.addr %s835, 16
        %s837 = scalar_lea.vmem [#allocation11], %s836
        %p838 = pneg %p267
        %p839 = pneg %p264
        %s840 = sand.u32 %s31, 1
        %s841 = scalar_lea.sflag [#allocation4], %s840
        %s842 = sand.u32 %s280, 1
        %s843 = smul.addr %s842, 16
        %s844 = scalar_lea.vmem [#allocation12], %s843
        %p845 = pneg %p293
        %p846 = pneg %p290
        %s847 = sand.u32 %s31, 1
        %s848 = scalar_lea.sflag [#allocation4], %s847
        %s849 = sand.u32 %s306, 1
        %s850 = smul.addr %s849, 16
        %s851 = scalar_lea.vmem [#allocation13], %s850
        %p852 = pneg %p319
        %p853 = pneg %p316
        %s854 = sand.u32 %s31, 1
        %s855 = scalar_lea.sflag [#allocation4], %s854
        %s856 = sand.u32 %s332, 1
        %s857 = smul.addr %s856, 16
        %s858 = scalar_lea.vmem [#allocation14], %s857
        %p859 = pneg %p345
        %p860 = pneg %p342
        %s861 = sand.u32 %s31, 1
        %s862 = scalar_lea.sflag [#allocation4], %s861
        %s863 = sand.u32 %s358, 1
        %s864 = smul.addr %s863, 16
        %s865 = scalar_lea.vmem [#allocation15], %s864
        %p866 = pneg %p371
        %p867 = pneg %p368
        %p868 = scmp.lt.s32.totalorder %s36, 1
        %s869 = scalar_select %p868, %s36, 1
        %s870 = scalar_lea.vmem %s13, %s869
        %p871 = pneg %p397
        %p872 = pneg %p394
        %p873 = scmp.lt.s32.totalorder %s36, 1
        %s874 = scalar_select %p873, %s36, 1
        %s875 = smul.addr %s874, 8
        %s876 = smul.addr %s875, 4
        %s877 = scalar_lea.vmem %s14, %s876
        %p878 = pneg %p423
        %p879 = pneg %p420
        %s880 = sand.u32 %s31, 1
        %s881 = scalar_lea.sflag [#allocation4], %s880
        %s882 = sand.u32 %s436, 1
        %s883 = smul.addr %s882, 16
        %s884 = scalar_lea.vmem [#allocation16], %s883
        %p885 = pneg %p449
        %p886 = pneg %p446
        %p887 = pneg %p475
        %p888 = pneg %p472
        %s889 = smul.u32 2, %s35
        %s890 = smul.u32 2, %s35
        %s891 = smul.u32 4, %s35
        %s892 = smul.u32 4, %s35
        %p893 = scmp.lt.s32.totalorder %s36, 1
        %s894 = scalar_select %p893, %s36, 1
        %s895 = smul.addr %s894, 4
        %s896 = smul.addr %s895, 4
        %s897 = scalar_lea.vmem %s5, %s896
        %p898 = scmp.lt.s32.totalorder %s36, 1
        %s899 = scalar_select %p898, %s36, 1
        %s900 = smul.addr %s899, 4
        %s901 = smul.addr %s900, 4
        %s902 = scalar_lea.vmem %s6, %s901
        %p903 = scmp.lt.s32.totalorder %s36, 1
        %s904 = scalar_select %p903, %s36, 1
        %s905 = smul.addr %s904, 4
        %s906 = smul.addr %s905, 4
        %s907 = scalar_lea.vmem %s7, %s906
        %p908 = scmp.lt.s32.totalorder %s36, 1
        %s909 = scalar_select %p908, %s36, 1
        %s910 = scalar_lea.vmem %s13, %s909
        %p911 = scmp.lt.s32.totalorder %s36, 1
        %s912 = scalar_select %p911, %s36, 1
        %s913 = smul.addr %s912, 8
        %s914 = smul.addr %s913, 4
        %s915 = scalar_lea.vmem %s14, %s914
        %s916 = smul.u32 2, %s35
        %p918 = scmp.eq.s32.totalorder %s36, 0
        // Predicated region
        $region125: #{tpu_custom_call.1} parent=83 // pred_check
          %p919 = pneg %p918
        $region126: #{tpu_custom_call.1} parent=83 // pred_check_branch
          %921 = sbr.rel (%p919) target = $region128
        $region127: #{tpu_custom_call.1} parent=83 // pred_region
          %v922 = vld [vmem:[#allocation3] sm:$0xff]
          %v923 = vld [vmem:[#allocation3 + $0x8] sm:$0xff]
          %vm924 = vcmask 261120
          %925 = vst.msk [vmem:[#allocation17] sm:$0xff] %vm924, %v922
          %926 = vst.msk [vmem:[#allocation17 + $0x8] sm:$0xff] %vm924, %v923
        $region128: #{tpu_custom_call.1} parent=83 // pred_fallthru
          _
        %v927 = vld [vmem:[#allocation17] sm:$0xff]
        %v928 = vld [vmem:[#allocation17 + $0x8] sm:$0xff]
        %v929 = vld [vmem:[#allocation6] sm:$0xf]
        %v930 = vld [vmem:[#allocation6 + $0x4] sm:$0xf]
        %v931 = vld [vmem:[#allocation8] sm:$0xf]
        %v932 = vld [vmem:[#allocation8 + $0x4] sm:$0xf]
        %v933 = vld [vmem:[#allocation8 + $0x8] sm:$0xf]
        %v934 = vld [vmem:[#allocation8 + $0xc] sm:$0xf]
        %v935 = vld [vmem:[#allocation9] sm:$0xf]
        %v936 = vld [vmem:[#allocation9 + $0x4] sm:$0xf]
        %v937 = vld [vmem:[#allocation9 + $0x8] sm:$0xf]
        %v938 = vld [vmem:[#allocation9 + $0xc] sm:$0xf]
        %v939 = vld [vmem:[%s797] sm:$0xff]
        %v940 = vld [vmem:[%s797 + $0x8] sm:$0xff]
        %v941 = vpack.c.bf16 %v928, %v927
        %v944 = vunpack.c.l.b16 %v929
        %v945 = vunpack.c.l.b16 %v930
        %v946 = vpack.c.b16 %v945, %v944
        %v948 = vadd.bf16 %v941, %v946
        %v949 = vld [vmem:[%s897] sm:$0xf]
        %v950 = vld [vmem:[%s897 + $0x4] sm:$0xf]
        %v951 = vld [vmem:[%s897 + $0x8] sm:$0xf]
        %v952 = vld [vmem:[%s897 + $0xc] sm:$0xf]
        %v957 = vunpack.c.l.b16 %v949
        %v958 = vunpack.c.l.b16 %v950
        %v959 = vunpack.c.l.b16 %v951
        %v960 = vunpack.c.l.b16 %v952
        %v961 = vpack.c.b16 %v958, %v957
        %v962 = vpack.c.b16 %v960, %v959
        %vm965 = vcmask 261120
        %v967 = vsel %vm965, %v948, 0
        %969 = vmatprep.subr.bf16.mxu0 0
        %970 = vmatpush1.bf16.msra.mxu0 %v961
        %971 = vmatprep.subr.bf16.mxu0 0
        %972 = vmatpush1.bf16.msra.mxu0 %v962
        %973 = vmatprep.subr.bf16.mxu0 0
        %974 = vmatpush1.bf16.msra.mxu0 0
        %975 = vmatprep.subr.bf16.mxu0 0
        %976 = vmatpush1.bf16.msra.mxu0 0
        %977 = vmatprep.subr.bf16.mxu0 0
        %978 = vmatpush1.bf16.msra.mxu0 0
        %979 = vmatprep.subr.bf16.mxu0 0
        %980 = vmatpush1.bf16.msra.mxu0 0
        %981 = vmatprep.subr.bf16.mxu0 0
        %982 = vmatpush1.bf16.msra.mxu0 0
        %983 = vmatprep.subr.bf16.mxu0 0
        %984 = vmatpush1.bf16.msra.mxu0 0
        %985 = vmatprep.subr.bf16.mxu0 0
        %986 = vmatpush1.bf16.msra.mxu0 0
        %987 = vmatprep.subr.bf16.mxu0 0
        %988 = vmatpush1.bf16.msra.mxu0 0
        %989 = vmatprep.subr.bf16.mxu0 0
        %990 = vmatpush1.bf16.msra.mxu0 0
        %991 = vmatprep.subr.bf16.mxu0 0
        %992 = vmatpush1.bf16.msra.mxu0 0
        %993 = vmatprep.subr.bf16.mxu0 0
        %994 = vmatpush1.bf16.msra.mxu0 0
        %995 = vmatprep.subr.bf16.mxu0 0
        %996 = vmatpush1.bf16.msra.mxu0 0
        %997 = vmatprep.subr.bf16.mxu0 0
        %998 = vmatpush1.bf16.msra.mxu0 0
        %999 = vmatprep.subr.bf16.mxu0 0
        %1000 = vmatpush1.bf16.msra.mxu0 0
        %1001 = vmatprep.mubr.bf16.mxu0 0
        %1002 = vmatmul.mubr.bf16.gmra.mrb[0].mxu0 %v967
        %v1003 = vpop.f32.mrb[0].mxu0
        %v1004 = vadd.f32 0.0, %v1003
        %v1005 = vpop.f32.mrb[0].mxu0
        %v1006 = vpop.f32.mrb[0].mxu0
        %v1007 = vadd.f32 0.0, %v1006
        %v1008 = vpop.f32.mrb[0].mxu0
        %1009 = vdwg.mxu0
        %v1010 = vlaneseq
        %v1011 = vshrl.u32 %v1010, 7
        %v1012 = vsub.s32 5, %v1011
        %v1013 = vrot.slane %v940, %v1012
        %v1014 = vadd.f32 %v1004, %v1013
        %v1015 = vadd.f32 %v1007, %v1013
        %v1016 = vpack.c.bf16 %v1015, %v1014
        %v1017 = vlaneseq
        %v1018 = vshrl.u32 %v1017, 7
        %v1019 = vsub.s32 6, %v1018
        %v1020 = vrot.slane %v940, %v1019
        %1022 = vrot.lane.b32.xlu0 %v1020, 32
        %v1023 = vpop.permute.xlu0 %1022
        %v1025 = vadd.f32 %v1004, %v1023
        %v1026 = vadd.f32 %v1007, %v1023
        %v1027 = vpack.c.bf16 %v1026, %v1025
        %v1028 = vld [vmem:[%s902] sm:$0xf]
        %v1029 = vld [vmem:[%s902 + $0x4] sm:$0xf]
        %v1030 = vld [vmem:[%s902 + $0x8] sm:$0xf]
        %v1031 = vld [vmem:[%s902 + $0xc] sm:$0xf]
        %v1032 = vlaneseq
        %v1033 = vshrl.u32 %v1032, 7
        %v1034 = vsub.s32 0, %v1033
        %v1035 = vrot.slane %v939, %v1034
        %v1040 = vunpack.c.l.b16 %v1028
        %v1041 = vunpack.c.l.b16 %v1029
        %v1042 = vunpack.c.l.b16 %v1030
        %v1043 = vunpack.c.l.b16 %v1031
        %v1044 = vpack.c.b16 %v1041, %v1040
        %v1045 = vpack.c.b16 %v1043, %v1042
        %v1049 = vsel %vm965, %v941, 0
        %1051 = vmatprep.subr.bf16.mxu0 0
        %1052 = vmatpush1.bf16.msra.mxu0 %v1044
        %1053 = vmatprep.subr.bf16.mxu0 0
        %1054 = vmatpush1.bf16.msra.mxu0 %v1045
        %1055 = vmatprep.subr.bf16.mxu0 0
        %1056 = vmatpush1.bf16.msra.mxu0 0
        %1057 = vmatprep.subr.bf16.mxu0 0
        %1058 = vmatpush1.bf16.msra.mxu0 0
        %1059 = vmatprep.subr.bf16.mxu0 0
        %1060 = vmatpush1.bf16.msra.mxu0 0
        %1061 = vmatprep.subr.bf16.mxu0 0
        %1062 = vmatpush1.bf16.msra.mxu0 0
        %1063 = vmatprep.subr.bf16.mxu0 0
        %1064 = vmatpush1.bf16.msra.mxu0 0
        %1065 = vmatprep.subr.bf16.mxu0 0
        %1066 = vmatpush1.bf16.msra.mxu0 0
        %1067 = vmatprep.subr.bf16.mxu0 0
        %1068 = vmatpush1.bf16.msra.mxu0 0
        %1069 = vmatprep.subr.bf16.mxu0 0
        %1070 = vmatpush1.bf16.msra.mxu0 0
        %1071 = vmatprep.subr.bf16.mxu0 0
        %1072 = vmatpush1.bf16.msra.mxu0 0
        %1073 = vmatprep.subr.bf16.mxu0 0
        %1074 = vmatpush1.bf16.msra.mxu0 0
        %1075 = vmatprep.subr.bf16.mxu0 0
        %1076 = vmatpush1.bf16.msra.mxu0 0
        %1077 = vmatprep.subr.bf16.mxu0 0
        %1078 = vmatpush1.bf16.msra.mxu0 0
        %1079 = vmatprep.subr.bf16.mxu0 0
        %1080 = vmatpush1.bf16.msra.mxu0 0
        %1081 = vmatprep.subr.bf16.mxu0 0
        %1082 = vmatpush1.bf16.msra.mxu0 0
        %1083 = vmatprep.mubr.bf16.mxu0 0
        %1084 = vmatmul.mubr.bf16.gmra.mrb[0].mxu0 %v1049
        %v1085 = vpop.f32.mrb[0].mxu0
        %v1086 = vadd.f32 %v1035, %v1085
        %v1087 = vpop.f32.mrb[0].mxu0
        %v1088 = vpop.f32.mrb[0].mxu0
        %v1089 = vadd.f32 %v1035, %v1088
        %v1090 = vpop.f32.mrb[0].mxu0
        %1091 = vdwg.mxu0
        %v1092 = vpack.c.bf16 %v1089, %v1086
        %v1094 = vunpack.c.l.b16 %v1016
        %v1095 = vunpack.c.h.b16 %v1016
        %v1096 = vpack.c.b16 %v1094, %v1094
        %v1097 = vpack.c.b16 %v1095, %v1095
        %v1099 = vunpack.c.l.b16 %v1027
        %v1100 = vunpack.c.h.b16 %v1027
        %v1102 = vunpack.c.l.b16 %v1092
        %v1103 = vunpack.c.h.b16 %v1092
        %v1104 = vpack.c.b16 %v1102, %v1102
        %v1105 = vpack.c.b16 %v1103, %v1103
        %v1106 = vpack.c.b16 %v1099, %v1099
        %1107 = vrot.lane.b32.xlu0 %v1106, 96
        %v1108 = vpop.permute.xlu0 %1107
        %vm1109 = vcmask 64512
        %v1111 = vsel %vm1109, %v1096, 0
        %v1114 = vsel %vm1109, %v1108, 0
        %1116 = vmatprep.subr.bf16.mxu0 0
        %1117 = vmatpush1.bf16.xpose.msra.mxu0 %v1114
        %1118 = vmatprep.subr.bf16.mxu0 0
        %1119 = vmatpush1.bf16.xpose.msra.mxu0 0
        %1120 = vmatprep.subr.bf16.mxu0 0
        %1121 = vmatpush1.bf16.xpose.msra.mxu0 0
        %1122 = vmatprep.subr.bf16.mxu0 0
        %1123 = vmatpush1.bf16.xpose.msra.mxu0 0
        %1124 = vmatprep.subr.bf16.mxu0 0
        %1125 = vmatpush1.bf16.xpose.msra.mxu0 0
        %1126 = vmatprep.subr.bf16.mxu0 0
        %1127 = vmatpush1.bf16.xpose.msra.mxu0 0
        %1128 = vmatprep.subr.bf16.mxu0 0
        %1129 = vmatpush1.bf16.xpose.msra.mxu0 0
        %1130 = vmatprep.subr.bf16.mxu0 0
        %1131 = vmatpush1.bf16.xpose.msra.mxu0 0
        %1132 = vmatprep.subr.bf16.mxu0 0
        %1133 = vmatpush1.bf16.xpose.msra.mxu0 0
        %1134 = vmatprep.subr.bf16.mxu0 0
        %1135 = vmatpush1.bf16.xpose.msra.mxu0 0
        %1136 = vmatprep.subr.bf16.mxu0 0
        %1137 = vmatpush1.bf16.xpose.msra.mxu0 0
        %1138 = vmatprep.subr.bf16.mxu0 0
        %1139 = vmatpush1.bf16.xpose.msra.mxu0 0
        %1140 = vmatprep.subr.bf16.mxu0 0
        %1141 = vmatpush1.bf16.xpose.msra.mxu0 0
        %1142 = vmatprep.subr.bf16.mxu0 0
        %1143 = vmatpush1.bf16.xpose.msra.mxu0 0
        %1144 = vmatprep.subr.bf16.mxu0 0
        %1145 = vmatpush1.bf16.xpose.msra.mxu0 0
        %1146 = vmatprep.subr.bf16.mxu0 0
        %1147 = vmatpush1.bf16.xpose.msra.mxu0 0
        %1148 = vmatprep.mubr.bf16.mxu0 0
        %1149 = vmatmul.mubr.bf16.gmra.mrb[0].mxu0 %v1111
        %v1150 = vpop.f32.mrb[0].mxu0
        %v1151 = vadd.f32 0.0, %v1150
        %v1152 = vpop.f32.mrb[0].mxu0
        %v1153 = vpop.f32.mrb[0].mxu0
        %v1154 = vpop.f32.mrb[0].mxu0
        %1155 = vdwg.mxu0
        %v1156 = vpack.c.b16 %v1100, %v1100
        %1157 = vrot.lane.b32.xlu0 %v1156, 96
        %v1158 = vpop.permute.xlu0 %1157
        %v1160 = vsel %vm1109, %v1097, 0
        %v1163 = vsel %vm1109, %v1158, 0
        %1165 = vmatprep.subr.bf16.mxu0 0
        %1166 = vmatpush1.bf16.xpose.msra.mxu0 %v1163
        %1167 = vmatprep.subr.bf16.mxu0 0
        %1168 = vmatpush1.bf16.xpose.msra.mxu0 0
        %1169 = vmatprep.subr.bf16.mxu0 0
        %1170 = vmatpush1.bf16.xpose.msra.mxu0 0
        %1171 = vmatprep.subr.bf16.mxu0 0
        %1172 = vmatpush1.bf16.xpose.msra.mxu0 0
        %1173 = vmatprep.subr.bf16.mxu0 0
        %1174 = vmatpush1.bf16.xpose.msra.mxu0 0
        %1175 = vmatprep.subr.bf16.mxu0 0
        %1176 = vmatpush1.bf16.xpose.msra.mxu0 0
        %1177 = vmatprep.subr.bf16.mxu0 0
        %1178 = vmatpush1.bf16.xpose.msra.mxu0 0
        %1179 = vmatprep.subr.bf16.mxu0 0
        %1180 = vmatpush1.bf16.xpose.msra.mxu0 0
        %1181 = vmatprep.subr.bf16.mxu0 0
        %1182 = vmatpush1.bf16.xpose.msra.mxu0 0
        %1183 = vmatprep.subr.bf16.mxu0 0
        %1184 = vmatpush1.bf16.xpose.msra.mxu0 0
        %1185 = vmatprep.subr.bf16.mxu0 0
        %1186 = vmatpush1.bf16.xpose.msra.mxu0 0
        %1187 = vmatprep.subr.bf16.mxu0 0
        %1188 = vmatpush1.bf16.xpose.msra.mxu0 0
        %1189 = vmatprep.subr.bf16.mxu0 0
        %1190 = vmatpush1.bf16.xpose.msra.mxu0 0
        %1191 = vmatprep.subr.bf16.mxu0 0
        %1192 = vmatpush1.bf16.xpose.msra.mxu0 0
        %1193 = vmatprep.subr.bf16.mxu0 0
        %1194 = vmatpush1.bf16.xpose.msra.mxu0 0
        %1195 = vmatprep.subr.bf16.mxu0 0
        %1196 = vmatpush1.bf16.xpose.msra.mxu0 0
        %1197 = vmatprep.mubr.bf16.mxu0 0
        %1198 = vmatmul.mubr.bf16.gmra.mrb[0].mxu0 %v1160
        %v1199 = vpop.f32.mrb[0].mxu0
        %v1200 = vadd.f32 0.0, %v1199
        %v1201 = vpop.f32.mrb[0].mxu0
        %v1202 = vpop.f32.mrb[0].mxu0
        %v1203 = vpop.f32.mrb[0].mxu0
        %1204 = vdwg.mxu0
        %v1205 = vsel %vm1109, %v1151, -inf
        %1206 = vmax.xlane.f32.xlu0 %v1205
        %v1207 = vpop.xlane.xlu0 %1206
        %v1208 = vsel %vm1109, %v1200, -inf
        %1209 = vmax.xlane.f32.xlu0 %v1208
        %v1210 = vpop.xlane.xlu0 %1209
        %v1211 = vsub.f32 %v1151, %v1207
        %v1212 = vsub.f32 %v1200, %v1210
        %v1213 = vmul.f32 %v1211, 1.442695
        %v1214 = vpow.pop %v1213
        %v1215 = vmul.f32 %v1212, 1.442695
        %v1216 = vpow.pop %v1215
        %v1217 = vsel %vm1109, %v1214, 0.0
        %1218 = vadd.xlane.f32.xlu0 %v1217
        %v1219 = vpop.xlane.xlu0 %1218
        %v1220 = vsel %vm1109, %v1216, 0.0
        %1221 = vadd.xlane.f32.xlu0 %v1220
        %v1222 = vpop.xlane.xlu0 %1221
        %v1223 = vrcp.pop %v1219
        %v1224 = vrcp.pop %v1222
        %v1225 = vmul.f32 %v1214, %v1223
        %v1226 = vmul.f32 %v1216, %v1224
        %v1227 = vpack.c.bf16 %v1225, %v1225
        %v1228 = vpack.c.bf16 %v1226, %v1226
        %v1230 = vsel %vm1109, %v1227, 0
        %vm1232 = vcmask 1043456
        %v1234 = vsel %vm1232, %v1104, 0
        %1236 = vmatprep.subr.bf16.mxu0 0
        %1237 = vmatpush1.bf16.msra.mxu0 %v1234
        %1238 = vmatprep.subr.bf16.mxu0 0
        %1239 = vmatpush1.bf16.msra.mxu0 0
        %1240 = vmatprep.subr.bf16.mxu0 0
        %1241 = vmatpush1.bf16.msra.mxu0 0
        %1242 = vmatprep.subr.bf16.mxu0 0
        %1243 = vmatpush1.bf16.msra.mxu0 0
        %1244 = vmatprep.subr.bf16.mxu0 0
        %1245 = vmatpush1.bf16.msra.mxu0 0
        %1246 = vmatprep.subr.bf16.mxu0 0
        %1247 = vmatpush1.bf16.msra.mxu0 0
        %1248 = vmatprep.subr.bf16.mxu0 0
        %1249 = vmatpush1.bf16.msra.mxu0 0
        %1250 = vmatprep.subr.bf16.mxu0 0
        %1251 = vmatpush1.bf16.msra.mxu0 0
        %1252 = vmatprep.subr.bf16.mxu0 0
        %1253 = vmatpush1.bf16.msra.mxu0 0
        %1254 = vmatprep.subr.bf16.mxu0 0
        %1255 = vmatpush1.bf16.msra.mxu0 0
        %1256 = vmatprep.subr.bf16.mxu0 0
        %1257 = vmatpush1.bf16.msra.mxu0 0
        %1258 = vmatprep.subr.bf16.mxu0 0
        %1259 = vmatpush1.bf16.msra.mxu0 0
        %1260 = vmatprep.subr.bf16.mxu0 0
        %1261 = vmatpush1.bf16.msra.mxu0 0
        %1262 = vmatprep.subr.bf16.mxu0 0
        %1263 = vmatpush1.bf16.msra.mxu0 0
        %1264 = vmatprep.subr.bf16.mxu0 0
        %1265 = vmatpush1.bf16.msra.mxu0 0
        %1266 = vmatprep.subr.bf16.mxu0 0
        %1267 = vmatpush1.bf16.msra.mxu0 0
        %1268 = vmatprep.mubr.bf16.mxu0 0
        %1269 = vmatmul.mubr.bf16.gmra.mrb[0].mxu0 %v1230
        %v1270 = vpop.f32.mrb[0].mxu0
        %v1271 = vadd.f32 0.0, %v1270
        %v1272 = vpop.f32.mrb[0].mxu0
        %v1273 = vpop.f32.mrb[0].mxu0
        %v1274 = vpop.f32.mrb[0].mxu0
        %1275 = vdwg.mxu0
        %v1277 = vsel %vm1109, %v1228, 0
        %v1280 = vsel %vm1232, %v1105, 0
        %1282 = vmatprep.subr.bf16.mxu0 0
        %1283 = vmatpush1.bf16.msra.mxu0 %v1280
        %1284 = vmatprep.subr.bf16.mxu0 0
        %1285 = vmatpush1.bf16.msra.mxu0 0
        %1286 = vmatprep.subr.bf16.mxu0 0
        %1287 = vmatpush1.bf16.msra.mxu0 0
        %1288 = vmatprep.subr.bf16.mxu0 0
        %1289 = vmatpush1.bf16.msra.mxu0 0
        %1290 = vmatprep.subr.bf16.mxu0 0
        %1291 = vmatpush1.bf16.msra.mxu0 0
        %1292 = vmatprep.subr.bf16.mxu0 0
        %1293 = vmatpush1.bf16.msra.mxu0 0
        %1294 = vmatprep.subr.bf16.mxu0 0
        %1295 = vmatpush1.bf16.msra.mxu0 0
        %1296 = vmatprep.subr.bf16.mxu0 0
        %1297 = vmatpush1.bf16.msra.mxu0 0
        %1298 = vmatprep.subr.bf16.mxu0 0
        %1299 = vmatpush1.bf16.msra.mxu0 0
        %1300 = vmatprep.subr.bf16.mxu0 0
        %1301 = vmatpush1.bf16.msra.mxu0 0
        %1302 = vmatprep.subr.bf16.mxu0 0
        %1303 = vmatpush1.bf16.msra.mxu0 0
        %1304 = vmatprep.subr.bf16.mxu0 0
        %1305 = vmatpush1.bf16.msra.mxu0 0
        %1306 = vmatprep.subr.bf16.mxu0 0
        %1307 = vmatpush1.bf16.msra.mxu0 0
        %1308 = vmatprep.subr.bf16.mxu0 0
        %1309 = vmatpush1.bf16.msra.mxu0 0
        %1310 = vmatprep.subr.bf16.mxu0 0
        %1311 = vmatpush1.bf16.msra.mxu0 0
        %1312 = vmatprep.subr.bf16.mxu0 0
        %1313 = vmatpush1.bf16.msra.mxu0 0
        %1314 = vmatprep.mubr.bf16.mxu0 0
        %1315 = vmatmul.mubr.bf16.gmra.mrb[0].mxu0 %v1277
        %v1316 = vpop.f32.mrb[0].mxu0
        %v1317 = vadd.f32 0.0, %v1316
        %v1318 = vpop.f32.mrb[0].mxu0
        %v1319 = vpop.f32.mrb[0].mxu0
        %v1320 = vpop.f32.mrb[0].mxu0
        %1321 = vdwg.mxu0
        %v1322 = vpack.c.bf16 %v1317, %v1271
        %1323 = vst.msk [vmem:[#allocation2] sm:$0xff] %vm1109, %v1322
        %1324 = vrot.lane.b32.xlu0 %v1096, 120
        %v1325 = vpop.permute.xlu0 %1324
        %1326 = vrot.lane.b32.xlu0 %v1106, 88
        %v1327 = vpop.permute.xlu0 %1326
        %v1329 = vsel %vm1109, %v1325, 0
        %v1332 = vsel %vm1109, %v1327, 0
        %1334 = vmatprep.subr.bf16.mxu0 0
        %1335 = vmatpush1.bf16.xpose.msra.mxu0 %v1332
        %1336 = vmatprep.subr.bf16.mxu0 0
        %1337 = vmatpush1.bf16.xpose.msra.mxu0 0
        %1338 = vmatprep.subr.bf16.mxu0 0
        %1339 = vmatpush1.bf16.xpose.msra.mxu0 0
        %1340 = vmatprep.subr.bf16.mxu0 0
        %1341 = vmatpush1.bf16.xpose.msra.mxu0 0
        %1342 = vmatprep.subr.bf16.mxu0 0
        %1343 = vmatpush1.bf16.xpose.msra.mxu0 0
        %1344 = vmatprep.subr.bf16.mxu0 0
        %1345 = vmatpush1.bf16.xpose.msra.mxu0 0
        %1346 = vmatprep.subr.bf16.mxu0 0
        %1347 = vmatpush1.bf16.xpose.msra.mxu0 0
        %1348 = vmatprep.subr.bf16.mxu0 0
        %1349 = vmatpush1.bf16.xpose.msra.mxu0 0
        %1350 = vmatprep.subr.bf16.mxu0 0
        %1351 = vmatpush1.bf16.xpose.msra.mxu0 0
        %1352 = vmatprep.subr.bf16.mxu0 0
        %1353 = vmatpush1.bf16.xpose.msra.mxu0 0
        %1354 = vmatprep.subr.bf16.mxu0 0
        %1355 = vmatpush1.bf16.xpose.msra.mxu0 0
        %1356 = vmatprep.subr.bf16.mxu0 0
        %1357 = vmatpush1.bf16.xpose.msra.mxu0 0
        %1358 = vmatprep.subr.bf16.mxu0 0
        %1359 = vmatpush1.bf16.xpose.msra.mxu0 0
        %1360 = vmatprep.subr.bf16.mxu0 0
        %1361 = vmatpush1.bf16.xpose.msra.mxu0 0
        %1362 = vmatprep.subr.bf16.mxu0 0
        %1363 = vmatpush1.bf16.xpose.msra.mxu0 0
        %1364 = vmatprep.subr.bf16.mxu0 0
        %1365 = vmatpush1.bf16.xpose.msra.mxu0 0
        %1366 = vmatprep.mubr.bf16.mxu0 0
        %1367 = vmatmul.mubr.bf16.gmra.mrb[0].mxu0 %v1329
        %v1368 = vpop.f32.mrb[0].mxu0
        %v1369 = vadd.f32 0.0, %v1368
        %v1370 = vpop.f32.mrb[0].mxu0
        %v1371 = vpop.f32.mrb[0].mxu0
        %v1372 = vpop.f32.mrb[0].mxu0
        %1373 = vdwg.mxu0
        %1374 = vrot.lane.b32.xlu0 %v1097, 120
        %v1375 = vpop.permute.xlu0 %1374
        %1376 = vrot.lane.b32.xlu0 %v1156, 88
        %v1377 = vpop.permute.xlu0 %1376
        %v1379 = vsel %vm1109, %v1375, 0
        %v1382 = vsel %vm1109, %v1377, 0
        %1384 = vmatprep.subr.bf16.mxu0 0
        %1385 = vmatpush1.bf16.xpose.msra.mxu0 %v1382
        %1386 = vmatprep.subr.bf16.mxu0 0
        %1387 = vmatpush1.bf16.xpose.msra.mxu0 0
        %1388 = vmatprep.subr.bf16.mxu0 0
        %1389 = vmatpush1.bf16.xpose.msra.mxu0 0
        %1390 = vmatprep.subr.bf16.mxu0 0
        %1391 = vmatpush1.bf16.xpose.msra.mxu0 0
        %1392 = vmatprep.subr.bf16.mxu0 0
        %1393 = vmatpush1.bf16.xpose.msra.mxu0 0
        %1394 = vmatprep.subr.bf16.mxu0 0
        %1395 = vmatpush1.bf16.xpose.msra.mxu0 0
        %1396 = vmatprep.subr.bf16.mxu0 0
        %1397 = vmatpush1.bf16.xpose.msra.mxu0 0
        %1398 = vmatprep.subr.bf16.mxu0 0
        %1399 = vmatpush1.bf16.xpose.msra.mxu0 0
        %1400 = vmatprep.subr.bf16.mxu0 0
        %1401 = vmatpush1.bf16.xpose.msra.mxu0 0
        %1402 = vmatprep.subr.bf16.mxu0 0
        %1403 = vmatpush1.bf16.xpose.msra.mxu0 0
        %1404 = vmatprep.subr.bf16.mxu0 0
        %1405 = vmatpush1.bf16.xpose.msra.mxu0 0
        %1406 = vmatprep.subr.bf16.mxu0 0
        %1407 = vmatpush1.bf16.xpose.msra.mxu0 0
        %1408 = vmatprep.subr.bf16.mxu0 0
        %1409 = vmatpush1.bf16.xpose.msra.mxu0 0
        %1410 = vmatprep.subr.bf16.mxu0 0
        %1411 = vmatpush1.bf16.xpose.msra.mxu0 0
        %1412 = vmatprep.subr.bf16.mxu0 0
        %1413 = vmatpush1.bf16.xpose.msra.mxu0 0
        %1414 = vmatprep.subr.bf16.mxu0 0
        %1415 = vmatpush1.bf16.xpose.msra.mxu0 0
        %1416 = vmatprep.mubr.bf16.mxu0 0
        %1417 = vmatmul.mubr.bf16.gmra.mrb[0].mxu0 %v1379
        %v1418 = vpop.f32.mrb[0].mxu0
        %v1419 = vadd.f32 0.0, %v1418
        %v1420 = vpop.f32.mrb[0].mxu0
        %v1421 = vpop.f32.mrb[0].mxu0
        %v1422 = vpop.f32.mrb[0].mxu0
        %1423 = vdwg.mxu0
        %v1424 = vsel %vm1109, %v1369, -inf
        %1425 = vmax.xlane.f32.xlu0 %v1424
        %v1426 = vpop.xlane.xlu0 %1425
        %v1427 = vsel %vm1109, %v1419, -inf
        %1428 = vmax.xlane.f32.xlu0 %v1427
        %v1429 = vpop.xlane.xlu0 %1428
        %v1430 = vsub.f32 %v1369, %v1426
        %v1431 = vsub.f32 %v1419, %v1429
        %v1432 = vmul.f32 %v1430, 1.442695
        %v1433 = vpow.pop %v1432
        %v1434 = vmul.f32 %v1431, 1.442695
        %v1435 = vpow.pop %v1434
        %v1436 = vsel %vm1109, %v1433, 0.0
        %1437 = vadd.xlane.f32.xlu0 %v1436
        %v1438 = vpop.xlane.xlu0 %1437
        %v1439 = vsel %vm1109, %v1435, 0.0
        %1440 = vadd.xlane.f32.xlu0 %v1439
        %v1441 = vpop.xlane.xlu0 %1440
        %v1442 = vrcp.pop %v1438
        %v1443 = vrcp.pop %v1441
        %v1444 = vmul.f32 %v1433, %v1442
        %v1445 = vmul.f32 %v1435, %v1443
        %v1446 = vpack.c.bf16 %v1444, %v1444
        %v1447 = vpack.c.bf16 %v1445, %v1445
        %1448 = vrot.lane.b32.xlu0 %v1104, 120
        %v1449 = vpop.permute.xlu0 %1448
        %v1451 = vsel %vm1109, %v1446, 0
        %v1454 = vsel %vm1232, %v1449, 0
        %1456 = vmatprep.subr.bf16.mxu0 0
        %1457 = vmatpush1.bf16.msra.mxu0 %v1454
        %1458 = vmatprep.subr.bf16.mxu0 0
        %1459 = vmatpush1.bf16.msra.mxu0 0
        %1460 = vmatprep.subr.bf16.mxu0 0
        %1461 = vmatpush1.bf16.msra.mxu0 0
        %1462 = vmatprep.subr.bf16.mxu0 0
        %1463 = vmatpush1.bf16.msra.mxu0 0
        %1464 = vmatprep.subr.bf16.mxu0 0
        %1465 = vmatpush1.bf16.msra.mxu0 0
        %1466 = vmatprep.subr.bf16.mxu0 0
        %1467 = vmatpush1.bf16.msra.mxu0 0
        %1468 = vmatprep.subr.bf16.mxu0 0
        %1469 = vmatpush1.bf16.msra.mxu0 0
        %1470 = vmatprep.subr.bf16.mxu0 0
        %1471 = vmatpush1.bf16.msra.mxu0 0
        %1472 = vmatprep.subr.bf16.mxu0 0
        %1473 = vmatpush1.bf16.msra.mxu0 0
        %1474 = vmatprep.subr.bf16.mxu0 0
        %1475 = vmatpush1.bf16.msra.mxu0 0
        %1476 = vmatprep.subr.bf16.mxu0 0
        %1477 = vmatpush1.bf16.msra.mxu0 0
        %1478 = vmatprep.subr.bf16.mxu0 0
        %1479 = vmatpush1.bf16.msra.mxu0 0
        %1480 = vmatprep.subr.bf16.mxu0 0
        %1481 = vmatpush1.bf16.msra.mxu0 0
        %1482 = vmatprep.subr.bf16.mxu0 0
        %1483 = vmatpush1.bf16.msra.mxu0 0
        %1484 = vmatprep.subr.bf16.mxu0 0
        %1485 = vmatpush1.bf16.msra.mxu0 0
        %1486 = vmatprep.subr.bf16.mxu0 0
        %1487 = vmatpush1.bf16.msra.mxu0 0
        %1488 = vmatprep.mubr.bf16.mxu0 0
        %1489 = vmatmul.mubr.bf16.gmra.mrb[0].mxu0 %v1451
        %v1490 = vpop.f32.mrb[0].mxu0
        %v1491 = vadd.f32 0.0, %v1490
        %v1492 = vpop.f32.mrb[0].mxu0
        %v1493 = vpop.f32.mrb[0].mxu0
        %v1494 = vpop.f32.mrb[0].mxu0
        %1495 = vdwg.mxu0
        %1496 = vrot.lane.b32.xlu0 %v1105, 120
        %v1497 = vpop.permute.xlu0 %1496
        %v1499 = vsel %vm1109, %v1447, 0
        %v1502 = vsel %vm1232, %v1497, 0
        %1504 = vmatprep.subr.bf16.mxu0 0
        %1505 = vmatpush1.bf16.msra.mxu0 %v1502
        %1506 = vmatprep.subr.bf16.mxu0 0
        %1507 = vmatpush1.bf16.msra.mxu0 0
        %1508 = vmatprep.subr.bf16.mxu0 0
        %1509 = vmatpush1.bf16.msra.mxu0 0
        %1510 = vmatprep.subr.bf16.mxu0 0
        %1511 = vmatpush1.bf16.msra.mxu0 0
        %1512 = vmatprep.subr.bf16.mxu0 0
        %1513 = vmatpush1.bf16.msra.mxu0 0
        %1514 = vmatprep.subr.bf16.mxu0 0
        %1515 = vmatpush1.bf16.msra.mxu0 0
        %1516 = vmatprep.subr.bf16.mxu0 0
        %1517 = vmatpush1.bf16.msra.mxu0 0
        %1518 = vmatprep.subr.bf16.mxu0 0
        %1519 = vmatpush1.bf16.msra.mxu0 0
        %1520 = vmatprep.subr.bf16.mxu0 0
        %1521 = vmatpush1.bf16.msra.mxu0 0
        %1522 = vmatprep.subr.bf16.mxu0 0
        %1523 = vmatpush1.bf16.msra.mxu0 0
        %1524 = vmatprep.subr.bf16.mxu0 0
        %1525 = vmatpush1.bf16.msra.mxu0 0
        %1526 = vmatprep.subr.bf16.mxu0 0
        %1527 = vmatpush1.bf16.msra.mxu0 0
        %1528 = vmatprep.subr.bf16.mxu0 0
        %1529 = vmatpush1.bf16.msra.mxu0 0
        %1530 = vmatprep.subr.bf16.mxu0 0
        %1531 = vmatpush1.bf16.msra.mxu0 0
        %1532 = vmatprep.subr.bf16.mxu0 0
        %1533 = vmatpush1.bf16.msra.mxu0 0
        %1534 = vmatprep.subr.bf16.mxu0 0
        %1535 = vmatpush1.bf16.msra.mxu0 0
        %1536 = vmatprep.mubr.bf16.mxu0 0
        %1537 = vmatmul.mubr.bf16.gmra.mrb[0].mxu0 %v1499
        %v1538 = vpop.f32.mrb[0].mxu0
        %v1539 = vadd.f32 0.0, %v1538
        %v1540 = vpop.f32.mrb[0].mxu0
        %v1541 = vpop.f32.mrb[0].mxu0
        %v1542 = vpop.f32.mrb[0].mxu0
        %1543 = vdwg.mxu0
        %v1544 = vpack.c.bf16 %v1539, %v1491
        %1546 = vrot.lane.b32.xlu0 %v1544, 8
        %v1547 = vpop.permute.xlu0 %1546
        %vm1549 = vcmask 130112
        %1550 = vst.msk [vmem:[#allocation2] sm:$0xff] %vm1549, %v1547
        %1551 = vrot.lane.b32.xlu0 %v1096, 112
        %v1552 = vpop.permute.xlu0 %1551
        %1553 = vrot.lane.b32.xlu0 %v1106, 80
        %v1554 = vpop.permute.xlu0 %1553
        %v1556 = vsel %vm1109, %v1552, 0
        %v1559 = vsel %vm1109, %v1554, 0
        %1561 = vmatprep.subr.bf16.mxu0 0
        %1562 = vmatpush1.bf16.xpose.msra.mxu0 %v1559
        %1563 = vmatprep.subr.bf16.mxu0 0
        %1564 = vmatpush1.bf16.xpose.msra.mxu0 0
        %1565 = vmatprep.subr.bf16.mxu0 0
        %1566 = vmatpush1.bf16.xpose.msra.mxu0 0
        %1567 = vmatprep.subr.bf16.mxu0 0
        %1568 = vmatpush1.bf16.xpose.msra.mxu0 0
        %1569 = vmatprep.subr.bf16.mxu0 0
        %1570 = vmatpush1.bf16.xpose.msra.mxu0 0
        %1571 = vmatprep.subr.bf16.mxu0 0
        %1572 = vmatpush1.bf16.xpose.msra.mxu0 0
        %1573 = vmatprep.subr.bf16.mxu0 0
        %1574 = vmatpush1.bf16.xpose.msra.mxu0 0
        %1575 = vmatprep.subr.bf16.mxu0 0
        %1576 = vmatpush1.bf16.xpose.msra.mxu0 0
        %1577 = vmatprep.subr.bf16.mxu0 0
        %1578 = vmatpush1.bf16.xpose.msra.mxu0 0
        %1579 = vmatprep.subr.bf16.mxu0 0
        %1580 = vmatpush1.bf16.xpose.msra.mxu0 0
        %1581 = vmatprep.subr.bf16.mxu0 0
        %1582 = vmatpush1.bf16.xpose.msra.mxu0 0
        %1583 = vmatprep.subr.bf16.mxu0 0
        %1584 = vmatpush1.bf16.xpose.msra.mxu0 0
        %1585 = vmatprep.subr.bf16.mxu0 0
        %1586 = vmatpush1.bf16.xpose.msra.mxu0 0
        %1587 = vmatprep.subr.bf16.mxu0 0
        %1588 = vmatpush1.bf16.xpose.msra.mxu0 0
        %1589 = vmatprep.subr.bf16.mxu0 0
        %1590 = vmatpush1.bf16.xpose.msra.mxu0 0
        %1591 = vmatprep.subr.bf16.mxu0 0
        %1592 = vmatpush1.bf16.xpose.msra.mxu0 0
        %1593 = vmatprep.mubr.bf16.mxu0 0
        %1594 = vmatmul.mubr.bf16.gmra.mrb[0].mxu0 %v1556
        %v1595 = vpop.f32.mrb[0].mxu0
        %v1596 = vadd.f32 0.0, %v1595
        %v1597 = vpop.f32.mrb[0].mxu0
        %v1598 = vpop.f32.mrb[0].mxu0
        %v1599 = vpop.f32.mrb[0].mxu0
        %1600 = vdwg.mxu0
        %1601 = vrot.lane.b32.xlu0 %v1097, 112
        %v1602 = vpop.permute.xlu0 %1601
        %1603 = vrot.lane.b32.xlu0 %v1156, 80
        %v1604 = vpop.permute.xlu0 %1603
        %v1606 = vsel %vm1109, %v1602, 0
        %v1609 = vsel %vm1109, %v1604, 0
        %1611 = vmatprep.subr.bf16.mxu0 0
        %1612 = vmatpush1.bf16.xpose.msra.mxu0 %v1609
        %1613 = vmatprep.subr.bf16.mxu0 0
        %1614 = vmatpush1.bf16.xpose.msra.mxu0 0
        %1615 = vmatprep.subr.bf16.mxu0 0
        %1616 = vmatpush1.bf16.xpose.msra.mxu0 0
        %1617 = vmatprep.subr.bf16.mxu0 0
        %1618 = vmatpush1.bf16.xpose.msra.mxu0 0
        %1619 = vmatprep.subr.bf16.mxu0 0
        %1620 = vmatpush1.bf16.xpose.msra.mxu0 0
        %1621 = vmatprep.subr.bf16.mxu0 0
        %1622 = vmatpush1.bf16.xpose.msra.mxu0 0
        %1623 = vmatprep.subr.bf16.mxu0 0
        %1624 = vmatpush1.bf16.xpose.msra.mxu0 0
        %1625 = vmatprep.subr.bf16.mxu0 0
        %1626 = vmatpush1.bf16.xpose.msra.mxu0 0
        %1627 = vmatprep.subr.bf16.mxu0 0
        %1628 = vmatpush1.bf16.xpose.msra.mxu0 0
        %1629 = vmatprep.subr.bf16.mxu0 0
        %1630 = vmatpush1.bf16.xpose.msra.mxu0 0
        %1631 = vmatprep.subr.bf16.mxu0 0
        %1632 = vmatpush1.bf16.xpose.msra.mxu0 0
        %1633 = vmatprep.subr.bf16.mxu0 0
        %1634 = vmatpush1.bf16.xpose.msra.mxu0 0
        %1635 = vmatprep.subr.bf16.mxu0 0
        %1636 = vmatpush1.bf16.xpose.msra.mxu0 0
        %1637 = vmatprep.subr.bf16.mxu0 0
        %1638 = vmatpush1.bf16.xpose.msra.mxu0 0
        %1639 = vmatprep.subr.bf16.mxu0 0
        %1640 = vmatpush1.bf16.xpose.msra.mxu0 0
        %1641 = vmatprep.subr.bf16.mxu0 0
        %1642 = vmatpush1.bf16.xpose.msra.mxu0 0
        %1643 = vmatprep.mubr.bf16.mxu0 0
        %1644 = vmatmul.mubr.bf16.gmra.mrb[0].mxu0 %v1606
        %v1645 = vpop.f32.mrb[0].mxu0
        %v1646 = vadd.f32 0.0, %v1645
        %v1647 = vpop.f32.mrb[0].mxu0
        %v1648 = vpop.f32.mrb[0].mxu0
        %v1649 = vpop.f32.mrb[0].mxu0
        %1650 = vdwg.mxu0
        %v1651 = vsel %vm1109, %v1596, -inf
        %1652 = vmax.xlane.f32.xlu0 %v1651
        %v1653 = vpop.xlane.xlu0 %1652
        %v1654 = vsel %vm1109, %v1646, -inf
        %1655 = vmax.xlane.f32.xlu0 %v1654
        %v1656 = vpop.xlane.xlu0 %1655
        %v1657 = vsub.f32 %v1596, %v1653
        %v1658 = vsub.f32 %v1646, %v1656
        %v1659 = vmul.f32 %v1657, 1.442695
        %v1660 = vpow.pop %v1659
        %v1661 = vmul.f32 %v1658, 1.442695
        %v1662 = vpow.pop %v1661
        %v1663 = vsel %vm1109, %v1660, 0.0
        %1664 = vadd.xlane.f32.xlu0 %v1663
        %v1665 = vpop.xlane.xlu0 %1664
        %v1666 = vsel %vm1109, %v1662, 0.0
        %1667 = vadd.xlane.f32.xlu0 %v1666
        %v1668 = vpop.xlane.xlu0 %1667
        %v1669 = vrcp.pop %v1665
        %v1670 = vrcp.pop %v1668
        %v1671 = vmul.f32 %v1660, %v1669
        %v1672 = vmul.f32 %v1662, %v1670
        %v1673 = vpack.c.bf16 %v1671, %v1671
        %v1674 = vpack.c.bf16 %v1672, %v1672
        %1675 = vrot.lane.b32.xlu0 %v1104, 112
        %v1676 = vpop.permute.xlu0 %1675
        %v1678 = vsel %vm1109, %v1673, 0
        %v1681 = vsel %vm1232, %v1676, 0
        %1683 = vmatprep.subr.bf16.mxu0 0
        %1684 = vmatpush1.bf16.msra.mxu0 %v1681
        %1685 = vmatprep.subr.bf16.mxu0 0
        %1686 = vmatpush1.bf16.msra.mxu0 0
        %1687 = vmatprep.subr.bf16.mxu0 0
        %1688 = vmatpush1.bf16.msra.mxu0 0
        %1689 = vmatprep.subr.bf16.mxu0 0
        %1690 = vmatpush1.bf16.msra.mxu0 0
        %1691 = vmatprep.subr.bf16.mxu0 0
        %1692 = vmatpush1.bf16.msra.mxu0 0
        %1693 = vmatprep.subr.bf16.mxu0 0
        %1694 = vmatpush1.bf16.msra.mxu0 0
        %1695 = vmatprep.subr.bf16.mxu0 0
        %1696 = vmatpush1.bf16.msra.mxu0 0
        %1697 = vmatprep.subr.bf16.mxu0 0
        %1698 = vmatpush1.bf16.msra.mxu0 0
        %1699 = vmatprep.subr.bf16.mxu0 0
        %1700 = vmatpush1.bf16.msra.mxu0 0
        %1701 = vmatprep.subr.bf16.mxu0 0
        %1702 = vmatpush1.bf16.msra.mxu0 0
        %1703 = vmatprep.subr.bf16.mxu0 0
        %1704 = vmatpush1.bf16.msra.mxu0 0
        %1705 = vmatprep.subr.bf16.mxu0 0
        %1706 = vmatpush1.bf16.msra.mxu0 0
        %1707 = vmatprep.subr.bf16.mxu0 0
        %1708 = vmatpush1.bf16.msra.mxu0 0
        %1709 = vmatprep.subr.bf16.mxu0 0
        %1710 = vmatpush1.bf16.msra.mxu0 0
        %1711 = vmatprep.subr.bf16.mxu0 0
        %1712 = vmatpush1.bf16.msra.mxu0 0
        %1713 = vmatprep.subr.bf16.mxu0 0
        %1714 = vmatpush1.bf16.msra.mxu0 0
        %1715 = vmatprep.mubr.bf16.mxu0 0
        %1716 = vmatmul.mubr.bf16.gmra.mrb[0].mxu0 %v1678
        %v1717 = vpop.f32.mrb[0].mxu0
        %v1718 = vadd.f32 0.0, %v1717
        %v1719 = vpop.f32.mrb[0].mxu0
        %v1720 = vpop.f32.mrb[0].mxu0
        %v1721 = vpop.f32.mrb[0].mxu0
        %1722 = vdwg.mxu0
        %1723 = vrot.lane.b32.xlu0 %v1105, 112
        %v1724 = vpop.permute.xlu0 %1723
        %v1726 = vsel %vm1109, %v1674, 0
        %v1729 = vsel %vm1232, %v1724, 0
        %1731 = vmatprep.subr.bf16.mxu0 0
        %1732 = vmatpush1.bf16.msra.mxu0 %v1729
        %1733 = vmatprep.subr.bf16.mxu0 0
        %1734 = vmatpush1.bf16.msra.mxu0 0
        %1735 = vmatprep.subr.bf16.mxu0 0
        %1736 = vmatpush1.bf16.msra.mxu0 0
        %1737 = vmatprep.subr.bf16.mxu0 0
        %1738 = vmatpush1.bf16.msra.mxu0 0
        %1739 = vmatprep.subr.bf16.mxu0 0
        %1740 = vmatpush1.bf16.msra.mxu0 0
        %1741 = vmatprep.subr.bf16.mxu0 0
        %1742 = vmatpush1.bf16.msra.mxu0 0
        %1743 = vmatprep.subr.bf16.mxu0 0
        %1744 = vmatpush1.bf16.msra.mxu0 0
        %1745 = vmatprep.subr.bf16.mxu0 0
        %1746 = vmatpush1.bf16.msra.mxu0 0
        %1747 = vmatprep.subr.bf16.mxu0 0
        %1748 = vmatpush1.bf16.msra.mxu0 0
        %1749 = vmatprep.subr.bf16.mxu0 0
        %1750 = vmatpush1.bf16.msra.mxu0 0
        %1751 = vmatprep.subr.bf16.mxu0 0
        %1752 = vmatpush1.bf16.msra.mxu0 0
        %1753 = vmatprep.subr.bf16.mxu0 0
        %1754 = vmatpush1.bf16.msra.mxu0 0
        %1755 = vmatprep.subr.bf16.mxu0 0
        %1756 = vmatpush1.bf16.msra.mxu0 0
        %1757 = vmatprep.subr.bf16.mxu0 0
        %1758 = vmatpush1.bf16.msra.mxu0 0
        %1759 = vmatprep.subr.bf16.mxu0 0
        %1760 = vmatpush1.bf16.msra.mxu0 0
        %1761 = vmatprep.subr.bf16.mxu0 0
        %1762 = vmatpush1.bf16.msra.mxu0 0
        %1763 = vmatprep.mubr.bf16.mxu0 0
        %1764 = vmatmul.mubr.bf16.gmra.mrb[0].mxu0 %v1726
        %v1765 = vpop.f32.mrb[0].mxu0
        %v1766 = vadd.f32 0.0, %v1765
        %v1767 = vpop.f32.mrb[0].mxu0
        %v1768 = vpop.f32.mrb[0].mxu0
        %v1769 = vpop.f32.mrb[0].mxu0
        %1770 = vdwg.mxu0
        %v1771 = vpack.c.bf16 %v1766, %v1718
        %1773 = vrot.lane.b32.xlu0 %v1771, 16
        %v1774 = vpop.permute.xlu0 %1773
        %vm1776 = vcmask 195712
        %1777 = vst.msk [vmem:[#allocation2] sm:$0xff] %vm1776, %v1774
        %1778 = vrot.lane.b32.xlu0 %v1096, 104
        %v1779 = vpop.permute.xlu0 %1778
        %1780 = vrot.lane.b32.xlu0 %v1106, 72
        %v1781 = vpop.permute.xlu0 %1780
        %v1783 = vsel %vm1109, %v1779, 0
        %v1786 = vsel %vm1109, %v1781, 0
        %1788 = vmatprep.subr.bf16.mxu0 0
        %1789 = vmatpush1.bf16.xpose.msra.mxu0 %v1786
        %1790 = vmatprep.subr.bf16.mxu0 0
        %1791 = vmatpush1.bf16.xpose.msra.mxu0 0
        %1792 = vmatprep.subr.bf16.mxu0 0
        %1793 = vmatpush1.bf16.xpose.msra.mxu0 0
        %1794 = vmatprep.subr.bf16.mxu0 0
        %1795 = vmatpush1.bf16.xpose.msra.mxu0 0
        %1796 = vmatprep.subr.bf16.mxu0 0
        %1797 = vmatpush1.bf16.xpose.msra.mxu0 0
        %1798 = vmatprep.subr.bf16.mxu0 0
        %1799 = vmatpush1.bf16.xpose.msra.mxu0 0
        %1800 = vmatprep.subr.bf16.mxu0 0
        %1801 = vmatpush1.bf16.xpose.msra.mxu0 0
        %1802 = vmatprep.subr.bf16.mxu0 0
        %1803 = vmatpush1.bf16.xpose.msra.mxu0 0
        %1804 = vmatprep.subr.bf16.mxu0 0
        %1805 = vmatpush1.bf16.xpose.msra.mxu0 0
        %1806 = vmatprep.subr.bf16.mxu0 0
        %1807 = vmatpush1.bf16.xpose.msra.mxu0 0
        %1808 = vmatprep.subr.bf16.mxu0 0
        %1809 = vmatpush1.bf16.xpose.msra.mxu0 0
        %1810 = vmatprep.subr.bf16.mxu0 0
        %1811 = vmatpush1.bf16.xpose.msra.mxu0 0
        %1812 = vmatprep.subr.bf16.mxu0 0
        %1813 = vmatpush1.bf16.xpose.msra.mxu0 0
        %1814 = vmatprep.subr.bf16.mxu0 0
        %1815 = vmatpush1.bf16.xpose.msra.mxu0 0
        %1816 = vmatprep.subr.bf16.mxu0 0
        %1817 = vmatpush1.bf16.xpose.msra.mxu0 0
        %1818 = vmatprep.subr.bf16.mxu0 0
        %1819 = vmatpush1.bf16.xpose.msra.mxu0 0
        %1820 = vmatprep.mubr.bf16.mxu0 0
        %1821 = vmatmul.mubr.bf16.gmra.mrb[0].mxu0 %v1783
        %v1822 = vpop.f32.mrb[0].mxu0
        %v1823 = vadd.f32 0.0, %v1822
        %v1824 = vpop.f32.mrb[0].mxu0
        %v1825 = vpop.f32.mrb[0].mxu0
        %v1826 = vpop.f32.mrb[0].mxu0
        %1827 = vdwg.mxu0
        %1828 = vrot.lane.b32.xlu0 %v1097, 104
        %v1829 = vpop.permute.xlu0 %1828
        %1830 = vrot.lane.b32.xlu0 %v1156, 72
        %v1831 = vpop.permute.xlu0 %1830
        %v1833 = vsel %vm1109, %v1829, 0
        %v1836 = vsel %vm1109, %v1831, 0
        %1838 = vmatprep.subr.bf16.mxu0 0
        %1839 = vmatpush1.bf16.xpose.msra.mxu0 %v1836
        %1840 = vmatprep.subr.bf16.mxu0 0
        %1841 = vmatpush1.bf16.xpose.msra.mxu0 0
        %1842 = vmatprep.subr.bf16.mxu0 0
        %1843 = vmatpush1.bf16.xpose.msra.mxu0 0
        %1844 = vmatprep.subr.bf16.mxu0 0
        %1845 = vmatpush1.bf16.xpose.msra.mxu0 0
        %1846 = vmatprep.subr.bf16.mxu0 0
        %1847 = vmatpush1.bf16.xpose.msra.mxu0 0
        %1848 = vmatprep.subr.bf16.mxu0 0
        %1849 = vmatpush1.bf16.xpose.msra.mxu0 0
        %1850 = vmatprep.subr.bf16.mxu0 0
        %1851 = vmatpush1.bf16.xpose.msra.mxu0 0
        %1852 = vmatprep.subr.bf16.mxu0 0
        %1853 = vmatpush1.bf16.xpose.msra.mxu0 0
        %1854 = vmatprep.subr.bf16.mxu0 0
        %1855 = vmatpush1.bf16.xpose.msra.mxu0 0
        %1856 = vmatprep.subr.bf16.mxu0 0
        %1857 = vmatpush1.bf16.xpose.msra.mxu0 0
        %1858 = vmatprep.subr.bf16.mxu0 0
        %1859 = vmatpush1.bf16.xpose.msra.mxu0 0
        %1860 = vmatprep.subr.bf16.mxu0 0
        %1861 = vmatpush1.bf16.xpose.msra.mxu0 0
        %1862 = vmatprep.subr.bf16.mxu0 0
        %1863 = vmatpush1.bf16.xpose.msra.mxu0 0
        %1864 = vmatprep.subr.bf16.mxu0 0
        %1865 = vmatpush1.bf16.xpose.msra.mxu0 0
        %1866 = vmatprep.subr.bf16.mxu0 0
        %1867 = vmatpush1.bf16.xpose.msra.mxu0 0
        %1868 = vmatprep.subr.bf16.mxu0 0
        %1869 = vmatpush1.bf16.xpose.msra.mxu0 0
        %1870 = vmatprep.mubr.bf16.mxu0 0
        %1871 = vmatmul.mubr.bf16.gmra.mrb[0].mxu0 %v1833
        %v1872 = vpop.f32.mrb[0].mxu0
        %v1873 = vadd.f32 0.0, %v1872
        %v1874 = vpop.f32.mrb[0].mxu0
        %v1875 = vpop.f32.mrb[0].mxu0
        %v1876 = vpop.f32.mrb[0].mxu0
        %1877 = vdwg.mxu0
        %v1878 = vsel %vm1109, %v1823, -inf
        %1879 = vmax.xlane.f32.xlu0 %v1878
        %v1880 = vpop.xlane.xlu0 %1879
        %v1881 = vsel %vm1109, %v1873, -inf
        %1882 = vmax.xlane.f32.xlu0 %v1881
        %v1883 = vpop.xlane.xlu0 %1882
        %v1884 = vsub.f32 %v1823, %v1880
        %v1885 = vsub.f32 %v1873, %v1883
        %v1886 = vmul.f32 %v1884, 1.442695
        %v1887 = vpow.pop %v1886
        %v1888 = vmul.f32 %v1885, 1.442695
        %v1889 = vpow.pop %v1888
        %v1890 = vsel %vm1109, %v1887, 0.0
        %1891 = vadd.xlane.f32.xlu0 %v1890
        %v1892 = vpop.xlane.xlu0 %1891
        %v1893 = vsel %vm1109, %v1889, 0.0
        %1894 = vadd.xlane.f32.xlu0 %v1893
        %v1895 = vpop.xlane.xlu0 %1894
        %v1896 = vrcp.pop %v1892
        %v1897 = vrcp.pop %v1895
        %v1898 = vmul.f32 %v1887, %v1896
        %v1899 = vmul.f32 %v1889, %v1897
        %v1900 = vpack.c.bf16 %v1898, %v1898
        %v1901 = vpack.c.bf16 %v1899, %v1899
        %1902 = vrot.lane.b32.xlu0 %v1104, 104
        %v1903 = vpop.permute.xlu0 %1902
        %v1905 = vsel %vm1109, %v1900, 0
        %v1908 = vsel %vm1232, %v1903, 0
        %1910 = vmatprep.subr.bf16.mxu0 0
        %1911 = vmatpush1.bf16.msra.mxu0 %v1908
        %1912 = vmatprep.subr.bf16.mxu0 0
        %1913 = vmatpush1.bf16.msra.mxu0 0
        %1914 = vmatprep.subr.bf16.mxu0 0
        %1915 = vmatpush1.bf16.msra.mxu0 0
        %1916 = vmatprep.subr.bf16.mxu0 0
        %1917 = vmatpush1.bf16.msra.mxu0 0
        %1918 = vmatprep.subr.bf16.mxu0 0
        %1919 = vmatpush1.bf16.msra.mxu0 0
        %1920 = vmatprep.subr.bf16.mxu0 0
        %1921 = vmatpush1.bf16.msra.mxu0 0
        %1922 = vmatprep.subr.bf16.mxu0 0
        %1923 = vmatpush1.bf16.msra.mxu0 0
        %1924 = vmatprep.subr.bf16.mxu0 0
        %1925 = vmatpush1.bf16.msra.mxu0 0
        %1926 = vmatprep.subr.bf16.mxu0 0
        %1927 = vmatpush1.bf16.msra.mxu0 0
        %1928 = vmatprep.subr.bf16.mxu0 0
        %1929 = vmatpush1.bf16.msra.mxu0 0
        %1930 = vmatprep.subr.bf16.mxu0 0
        %1931 = vmatpush1.bf16.msra.mxu0 0
        %1932 = vmatprep.subr.bf16.mxu0 0
        %1933 = vmatpush1.bf16.msra.mxu0 0
        %1934 = vmatprep.subr.bf16.mxu0 0
        %1935 = vmatpush1.bf16.msra.mxu0 0
        %1936 = vmatprep.subr.bf16.mxu0 0
        %1937 = vmatpush1.bf16.msra.mxu0 0
        %1938 = vmatprep.subr.bf16.mxu0 0
        %1939 = vmatpush1.bf16.msra.mxu0 0
        %1940 = vmatprep.subr.bf16.mxu0 0
        %1941 = vmatpush1.bf16.msra.mxu0 0
        %1942 = vmatprep.mubr.bf16.mxu0 0
        %1943 = vmatmul.mubr.bf16.gmra.mrb[0].mxu0 %v1905
        %v1944 = vpop.f32.mrb[0].mxu0
        %v1945 = vadd.f32 0.0, %v1944
        %v1946 = vpop.f32.mrb[0].mxu0
        %v1947 = vpop.f32.mrb[0].mxu0
        %v1948 = vpop.f32.mrb[0].mxu0
        %1949 = vdwg.mxu0
        %1950 = vrot.lane.b32.xlu0 %v1105, 104
        %v1951 = vpop.permute.xlu0 %1950
        %v1953 = vsel %vm1109, %v1901, 0
        %v1956 = vsel %vm1232, %v1951, 0
        %1958 = vmatprep.subr.bf16.mxu0 0
        %1959 = vmatpush1.bf16.msra.mxu0 %v1956
        %1960 = vmatprep.subr.bf16.mxu0 0
        %1961 = vmatpush1.bf16.msra.mxu0 0
        %1962 = vmatprep.subr.bf16.mxu0 0
        %1963 = vmatpush1.bf16.msra.mxu0 0
        %1964 = vmatprep.subr.bf16.mxu0 0
        %1965 = vmatpush1.bf16.msra.mxu0 0
        %1966 = vmatprep.subr.bf16.mxu0 0
        %1967 = vmatpush1.bf16.msra.mxu0 0
        %1968 = vmatprep.subr.bf16.mxu0 0
        %1969 = vmatpush1.bf16.msra.mxu0 0
        %1970 = vmatprep.subr.bf16.mxu0 0
        %1971 = vmatpush1.bf16.msra.mxu0 0
        %1972 = vmatprep.subr.bf16.mxu0 0
        %1973 = vmatpush1.bf16.msra.mxu0 0
        %1974 = vmatprep.subr.bf16.mxu0 0
        %1975 = vmatpush1.bf16.msra.mxu0 0
        %1976 = vmatprep.subr.bf16.mxu0 0
        %1977 = vmatpush1.bf16.msra.mxu0 0
        %1978 = vmatprep.subr.bf16.mxu0 0
        %1979 = vmatpush1.bf16.msra.mxu0 0
        %1980 = vmatprep.subr.bf16.mxu0 0
        %1981 = vmatpush1.bf16.msra.mxu0 0
        %1982 = vmatprep.subr.bf16.mxu0 0
        %1983 = vmatpush1.bf16.msra.mxu0 0
        %1984 = vmatprep.subr.bf16.mxu0 0
        %1985 = vmatpush1.bf16.msra.mxu0 0
        %1986 = vmatprep.subr.bf16.mxu0 0
        %1987 = vmatpush1.bf16.msra.mxu0 0
        %1988 = vmatprep.subr.bf16.mxu0 0
        %1989 = vmatpush1.bf16.msra.mxu0 0
        %1990 = vmatprep.mubr.bf16.mxu0 0
        %1991 = vmatmul.mubr.bf16.gmra.mrb[0].mxu0 %v1953
        %v1992 = vpop.f32.mrb[0].mxu0
        %v1993 = vadd.f32 0.0, %v1992
        %v1994 = vpop.f32.mrb[0].mxu0
        %v1995 = vpop.f32.mrb[0].mxu0
        %v1996 = vpop.f32.mrb[0].mxu0
        %1997 = vdwg.mxu0
        %v1998 = vpack.c.bf16 %v1993, %v1945
        %2000 = vrot.lane.b32.xlu0 %v1998, 24
        %v2001 = vpop.permute.xlu0 %2000
        %vm2003 = vcmask 261312
        %2004 = vst.msk [vmem:[#allocation2] sm:$0xff] %vm2003, %v2001
        %v2005 = vld [vmem:[#allocation2] sm:$0xff]
        %v2006 = vld [vmem:[%s907] sm:$0xf]
        %v2007 = vld [vmem:[%s907 + $0x4] sm:$0xf]
        %v2008 = vld [vmem:[%s907 + $0x8] sm:$0xf]
        %v2009 = vld [vmem:[%s907 + $0xc] sm:$0xf]
        %v2010 = vlaneseq
        %v2011 = vshrl.u32 %v2010, 7
        %v2012 = vsub.s32 1, %v2011
        %v2013 = vrot.slane %v939, %v2012
        %v2018 = vunpack.c.l.b16 %v2006
        %v2019 = vunpack.c.l.b16 %v2007
        %v2020 = vunpack.c.l.b16 %v2008
        %v2021 = vunpack.c.l.b16 %v2009
        %v2022 = vpack.c.b16 %v2019, %v2018
        %v2023 = vpack.c.b16 %v2021, %v2020
        %v2027 = vsel %vm965, %v2005, 0
        %2029 = vmatprep.subr.bf16.mxu0 0
        %2030 = vmatpush1.bf16.msra.mxu0 %v2022
        %2031 = vmatprep.subr.bf16.mxu0 0
        %2032 = vmatpush1.bf16.msra.mxu0 %v2023
        %2033 = vmatprep.subr.bf16.mxu0 0
        %2034 = vmatpush1.bf16.msra.mxu0 0
        %2035 = vmatprep.subr.bf16.mxu0 0
        %2036 = vmatpush1.bf16.msra.mxu0 0
        %2037 = vmatprep.subr.bf16.mxu0 0
        %2038 = vmatpush1.bf16.msra.mxu0 0
        %2039 = vmatprep.subr.bf16.mxu0 0
        %2040 = vmatpush1.bf16.msra.mxu0 0
        %2041 = vmatprep.subr.bf16.mxu0 0
        %2042 = vmatpush1.bf16.msra.mxu0 0
        %2043 = vmatprep.subr.bf16.mxu0 0
        %2044 = vmatpush1.bf16.msra.mxu0 0
        %2045 = vmatprep.subr.bf16.mxu0 0
        %2046 = vmatpush1.bf16.msra.mxu0 0
        %2047 = vmatprep.subr.bf16.mxu0 0
        %2048 = vmatpush1.bf16.msra.mxu0 0
        %2049 = vmatprep.subr.bf16.mxu0 0
        %2050 = vmatpush1.bf16.msra.mxu0 0
        %2051 = vmatprep.subr.bf16.mxu0 0
        %2052 = vmatpush1.bf16.msra.mxu0 0
        %2053 = vmatprep.subr.bf16.mxu0 0
        %2054 = vmatpush1.bf16.msra.mxu0 0
        %2055 = vmatprep.subr.bf16.mxu0 0
        %2056 = vmatpush1.bf16.msra.mxu0 0
        %2057 = vmatprep.subr.bf16.mxu0 0
        %2058 = vmatpush1.bf16.msra.mxu0 0
        %2059 = vmatprep.subr.bf16.mxu0 0
        %2060 = vmatpush1.bf16.msra.mxu0 0
        %2061 = vmatprep.mubr.bf16.mxu0 0
        %2062 = vmatmul.mubr.bf16.gmra.mrb[0].mxu0 %v2027
        %v2063 = vpop.f32.mrb[0].mxu0
        %v2064 = vadd.f32 %v2013, %v2063
        %v2065 = vpop.f32.mrb[0].mxu0
        %v2066 = vpop.f32.mrb[0].mxu0
        %v2067 = vadd.f32 %v2013, %v2066
        %v2068 = vpop.f32.mrb[0].mxu0
        %2069 = vdwg.mxu0
        %v2070 = vadd.f32 %v927, %v2064
        %v2071 = vadd.f32 %v928, %v2067
        %v2072 = vsel %vm965, %v2070, 0.0
        %2073 = vadd.xlane.f32.xlu0 %v2072
        %v2074 = vpop.xlane.xlu0 %2073
        %v2075 = vsel %vm965, %v2071, 0.0
        %2076 = vadd.xlane.f32.xlu0 %v2075
        %v2077 = vpop.xlane.xlu0 %2076
        %v2078 = vrcp.pop 32.0
        %v2079 = vmul.f32 %v2074, %v2078
        %v2080 = vmul.f32 %v2077, %v2078
        %v2081 = vsub.f32 %v2070, %v2079
        %v2082 = vsub.f32 %v2071, %v2080
        %v2083 = vmul.f32 %v2081, %v2081
        %v2084 = vmul.f32 %v2082, %v2082
        %v2085 = vsel %vm965, %v2083, 0.0
        %2086 = vadd.xlane.f32.xlu0 %v2085
        %v2087 = vpop.xlane.xlu0 %2086
        %v2088 = vsel %vm965, %v2084, 0.0
        %2089 = vadd.xlane.f32.xlu0 %v2088
        %v2090 = vpop.xlane.xlu0 %2089
        %v2091 = vmul.f32 %v2087, %v2078
        %v2092 = vmul.f32 %v2090, %v2078
        %v2093 = vadd.f32 %v2091, 1e-05
        %v2094 = vadd.f32 %v2092, 1e-05
        %v2095 = vrsqrt.pop %v2093
        %v2096 = vrsqrt.pop %v2094
        %v2097 = vmul.f32 %v2081, %v2095
        %v2098 = vmul.f32 %v2082, %v2096
        %v2099 = vlaneseq
        %v2100 = vshrl.u32 %v2099, 7
        %v2101 = vsub.s32 7, %v2100
        %v2102 = vrot.slane %v939, %v2101
        %v2103 = vmul.f32 %v2097, %v2102
        %v2104 = vmul.f32 %v2098, %v2102
        %v2105 = vlaneseq
        %v2106 = vshrl.u32 %v2105, 7
        %v2107 = vsub.s32 0, %v2106
        %v2108 = vrot.slane %v940, %v2107
        %v2109 = vadd.f32 %v2103, %v2108
        %v2110 = vadd.f32 %v2104, %v2108
        %v2111 = vpack.c.bf16 %v2110, %v2109
        %v2112 = vadd.bf16 %v2111, %v946
        %v2113 = vld [vmem:[%s752] sm:$0xf]
        %v2114 = vld [vmem:[%s752 + $0x4] sm:$0xf]
        %v2115 = vld [vmem:[%s752 + $0x8] sm:$0xf]
        %v2116 = vld [vmem:[%s752 + $0xc] sm:$0xf]
        %v2117 = vlaneseq
        %v2118 = vshrl.u32 %v2117, 7
        %v2119 = vsub.s32 2, %v2118
        %v2120 = vrot.slane %v939, %v2119
        %v2125 = vunpack.c.l.b16 %v2113
        %v2126 = vunpack.c.l.b16 %v2114
        %v2127 = vunpack.c.l.b16 %v2115
        %v2128 = vunpack.c.l.b16 %v2116
        %v2129 = vpack.c.b16 %v2126, %v2125
        %v2130 = vpack.c.b16 %v2128, %v2127
        %v2134 = vsel %vm965, %v2112, 0
        %2136 = vmatprep.subr.bf16.mxu0 0
        %2137 = vmatpush1.bf16.msra.mxu0 %v2129
        %2138 = vmatprep.subr.bf16.mxu0 0
        %2139 = vmatpush1.bf16.msra.mxu0 %v2130
        %2140 = vmatprep.subr.bf16.mxu0 0
        %2141 = vmatpush1.bf16.msra.mxu0 0
        %2142 = vmatprep.subr.bf16.mxu0 0
        %2143 = vmatpush1.bf16.msra.mxu0 0
        %2144 = vmatprep.subr.bf16.mxu0 0
        %2145 = vmatpush1.bf16.msra.mxu0 0
        %2146 = vmatprep.subr.bf16.mxu0 0
        %2147 = vmatpush1.bf16.msra.mxu0 0
        %2148 = vmatprep.subr.bf16.mxu0 0
        %2149 = vmatpush1.bf16.msra.mxu0 0
        %2150 = vmatprep.subr.bf16.mxu0 0
        %2151 = vmatpush1.bf16.msra.mxu0 0
        %2152 = vmatprep.subr.bf16.mxu0 0
        %2153 = vmatpush1.bf16.msra.mxu0 0
        %2154 = vmatprep.subr.bf16.mxu0 0
        %2155 = vmatpush1.bf16.msra.mxu0 0
        %2156 = vmatprep.subr.bf16.mxu0 0
        %2157 = vmatpush1.bf16.msra.mxu0 0
        %2158 = vmatprep.subr.bf16.mxu0 0
        %2159 = vmatpush1.bf16.msra.mxu0 0
        %2160 = vmatprep.subr.bf16.mxu0 0
        %2161 = vmatpush1.bf16.msra.mxu0 0
        %2162 = vmatprep.subr.bf16.mxu0 0
        %2163 = vmatpush1.bf16.msra.mxu0 0
        %2164 = vmatprep.subr.bf16.mxu0 0
        %2165 = vmatpush1.bf16.msra.mxu0 0
        %2166 = vmatprep.subr.bf16.mxu0 0
        %2167 = vmatpush1.bf16.msra.mxu0 0
        %2168 = vmatprep.mubr.bf16.mxu0 0
        %2169 = vmatmul.mubr.bf16.gmra.mrb[0].mxu0 %v2134
        %v2170 = vpop.f32.mrb[0].mxu0
        %v2171 = vadd.f32 %v2120, %v2170
        %v2172 = vpop.f32.mrb[0].mxu0
        %v2173 = vpop.f32.mrb[0].mxu0
        %v2174 = vadd.f32 %v2120, %v2173
        %v2175 = vpop.f32.mrb[0].mxu0
        %2176 = vdwg.mxu0
        %v2177 = vpack.c.bf16 %v2174, %v2171
        %v2178 = vld [vmem:[%s761] sm:$0xf]
        %v2179 = vld [vmem:[%s761 + $0x4] sm:$0xf]
        %v2180 = vld [vmem:[%s761 + $0x8] sm:$0xf]
        %v2181 = vld [vmem:[%s761 + $0xc] sm:$0xf]
        %v2182 = vlaneseq
        %v2183 = vshrl.u32 %v2182, 7
        %v2184 = vsub.s32 3, %v2183
        %v2185 = vrot.slane %v939, %v2184
        %v2190 = vunpack.c.l.b16 %v935
        %v2191 = vunpack.c.l.b16 %v936
        %v2192 = vunpack.c.l.b16 %v937
        %v2193 = vunpack.c.l.b16 %v938
        %v2194 = vpack.c.b16 %v2191, %v2190
        %v2195 = vpack.c.b16 %v2193, %v2192
        %v2200 = vunpack.c.l.b16 %v2178
        %v2201 = vunpack.c.l.b16 %v2179
        %v2202 = vunpack.c.l.b16 %v2180
        %v2203 = vunpack.c.l.b16 %v2181
        %v2204 = vpack.c.b16 %v2201, %v2200
        %v2205 = vpack.c.b16 %v2203, %v2202
        %v2209 = vsel %vm965, %v2194, 0
        %v2212 = vsel %vm965, %v2195, 0
        %2214 = vmatprep.subr.bf16.mxu0 0
        %2215 = vmatpush1.bf16.msra.mxu0 %v2204
        %2216 = vmatprep.subr.bf16.mxu0 0
        %2217 = vmatpush1.bf16.msra.mxu0 %v2205
        %2218 = vmatprep.subr.bf16.mxu0 0
        %2219 = vmatpush1.bf16.msra.mxu0 0
        %2220 = vmatprep.subr.bf16.mxu0 0
        %2221 = vmatpush1.bf16.msra.mxu0 0
        %2222 = vmatprep.subr.bf16.mxu0 0
        %2223 = vmatpush1.bf16.msra.mxu0 0
        %2224 = vmatprep.subr.bf16.mxu0 0
        %2225 = vmatpush1.bf16.msra.mxu0 0
        %2226 = vmatprep.subr.bf16.mxu0 0
        %2227 = vmatpush1.bf16.msra.mxu0 0
        %2228 = vmatprep.subr.bf16.mxu0 0
        %2229 = vmatpush1.bf16.msra.mxu0 0
        %2230 = vmatprep.subr.bf16.mxu0 0
        %2231 = vmatpush1.bf16.msra.mxu0 0
        %2232 = vmatprep.subr.bf16.mxu0 0
        %2233 = vmatpush1.bf16.msra.mxu0 0
        %2234 = vmatprep.subr.bf16.mxu0 0
        %2235 = vmatpush1.bf16.msra.mxu0 0
        %2236 = vmatprep.subr.bf16.mxu0 0
        %2237 = vmatpush1.bf16.msra.mxu0 0
        %2238 = vmatprep.subr.bf16.mxu0 0
        %2239 = vmatpush1.bf16.msra.mxu0 0
        %2240 = vmatprep.subr.bf16.mxu0 0
        %2241 = vmatpush1.bf16.msra.mxu0 0
        %2242 = vmatprep.subr.bf16.mxu0 0
        %2243 = vmatpush1.bf16.msra.mxu0 0
        %2244 = vmatprep.subr.bf16.mxu0 0
        %2245 = vmatpush1.bf16.msra.mxu0 0
        %2246 = vmatprep.mubr.bf16.mxu0 0
        %2247 = vmatmul.mubr.bf16.gmra.mrb[0].mxu0 %v2209
        %v2248 = vpop.f32.mrb[0].mxu0
        %v2249 = vadd.f32 %v2185, %v2248
        %v2250 = vpop.f32.mrb[0].mxu0
        %v2251 = vpop.f32.mrb[0].mxu0
        %v2252 = vadd.f32 %v2185, %v2251
        %v2253 = vpop.f32.mrb[0].mxu0
        %2254 = vmatprep.mubr.bf16.mxu0 0
        %2255 = vmatmul.mubr.bf16.gmra.mrb[0].mxu0 %v2212
        %v2256 = vpop.f32.mrb[0].mxu0
        %v2257 = vadd.f32 %v2185, %v2256
        %v2258 = vpop.f32.mrb[0].mxu0
        %v2259 = vpop.f32.mrb[0].mxu0
        %v2260 = vadd.f32 %v2185, %v2259
        %v2261 = vpop.f32.mrb[0].mxu0
        %2262 = vdwg.mxu0
        %v2263 = vpack.c.bf16 %v2252, %v2249
        %v2264 = vpack.c.bf16 %v2260, %v2257
        %v2265 = vld [vmem:[%s770] sm:$0xf]
        %v2266 = vld [vmem:[%s770 + $0x4] sm:$0xf]
        %v2267 = vld [vmem:[%s770 + $0x8] sm:$0xf]
        %v2268 = vld [vmem:[%s770 + $0xc] sm:$0xf]
        %v2269 = vlaneseq
        %v2270 = vshrl.u32 %v2269, 7
        %v2271 = vsub.s32 4, %v2270
        %v2272 = vrot.slane %v939, %v2271
        %v2277 = vunpack.c.l.b16 %v931
        %v2278 = vunpack.c.l.b16 %v932
        %v2279 = vunpack.c.l.b16 %v933
        %v2280 = vunpack.c.l.b16 %v934
        %v2281 = vpack.c.b16 %v2278, %v2277
        %v2282 = vpack.c.b16 %v2280, %v2279
        %v2287 = vunpack.c.l.b16 %v2265
        %v2288 = vunpack.c.l.b16 %v2266
        %v2289 = vunpack.c.l.b16 %v2267
        %v2290 = vunpack.c.l.b16 %v2268
        %v2291 = vpack.c.b16 %v2288, %v2287
        %v2292 = vpack.c.b16 %v2290, %v2289
        %v2296 = vsel %vm965, %v2281, 0
        %v2299 = vsel %vm965, %v2282, 0
        %2301 = vmatprep.subr.bf16.mxu0 0
        %2302 = vmatpush1.bf16.msra.mxu0 %v2291
        %2303 = vmatprep.subr.bf16.mxu0 0
        %2304 = vmatpush1.bf16.msra.mxu0 %v2292
        %2305 = vmatprep.subr.bf16.mxu0 0
        %2306 = vmatpush1.bf16.msra.mxu0 0
        %2307 = vmatprep.subr.bf16.mxu0 0
        %2308 = vmatpush1.bf16.msra.mxu0 0
        %2309 = vmatprep.subr.bf16.mxu0 0
        %2310 = vmatpush1.bf16.msra.mxu0 0
        %2311 = vmatprep.subr.bf16.mxu0 0
        %2312 = vmatpush1.bf16.msra.mxu0 0
        %2313 = vmatprep.subr.bf16.mxu0 0
        %2314 = vmatpush1.bf16.msra.mxu0 0
        %2315 = vmatprep.subr.bf16.mxu0 0
        %2316 = vmatpush1.bf16.msra.mxu0 0
        %2317 = vmatprep.subr.bf16.mxu0 0
        %2318 = vmatpush1.bf16.msra.mxu0 0
        %2319 = vmatprep.subr.bf16.mxu0 0
        %2320 = vmatpush1.bf16.msra.mxu0 0
        %2321 = vmatprep.subr.bf16.mxu0 0
        %2322 = vmatpush1.bf16.msra.mxu0 0
        %2323 = vmatprep.subr.bf16.mxu0 0
        %2324 = vmatpush1.bf16.msra.mxu0 0
        %2325 = vmatprep.subr.bf16.mxu0 0
        %2326 = vmatpush1.bf16.msra.mxu0 0
        %2327 = vmatprep.subr.bf16.mxu0 0
        %2328 = vmatpush1.bf16.msra.mxu0 0
        %2329 = vmatprep.subr.bf16.mxu0 0
        %2330 = vmatpush1.bf16.msra.mxu0 0
        %2331 = vmatprep.subr.bf16.mxu0 0
        %2332 = vmatpush1.bf16.msra.mxu0 0
        %2333 = vmatprep.mubr.bf16.mxu0 0
        %2334 = vmatmul.mubr.bf16.gmra.mrb[0].mxu0 %v2296
        %v2335 = vpop.f32.mrb[0].mxu0
        %v2336 = vadd.f32 %v2272, %v2335
        %v2337 = vpop.f32.mrb[0].mxu0
        %v2338 = vpop.f32.mrb[0].mxu0
        %v2339 = vadd.f32 %v2272, %v2338
        %v2340 = vpop.f32.mrb[0].mxu0
        %2341 = vmatprep.mubr.bf16.mxu0 0
        %2342 = vmatmul.mubr.bf16.gmra.mrb[0].mxu0 %v2299
        %v2343 = vpop.f32.mrb[0].mxu0
        %v2344 = vadd.f32 %v2272, %v2343
        %v2345 = vpop.f32.mrb[0].mxu0
        %v2346 = vpop.f32.mrb[0].mxu0
        %v2347 = vadd.f32 %v2272, %v2346
        %v2348 = vpop.f32.mrb[0].mxu0
        %2349 = vdwg.mxu0
        %v2350 = vpack.c.bf16 %v2339, %v2336
        %v2351 = vpack.c.bf16 %v2347, %v2344
        %v2353 = vunpack.c.l.b16 %v2177
        %v2354 = vunpack.c.h.b16 %v2177
        %v2355 = vpack.c.b16 %v2353, %v2353
        %v2356 = vpack.c.b16 %v2354, %v2354
        %v2358 = vsel %vm1109, %v2355, 0
        %v2361 = vsel %vm1109, %v2263, 0
        %2363 = vmatprep.subr.bf16.mxu0 0
        %2364 = vmatpush1.bf16.xpose.msra.mxu0 %v2361
        %2365 = vmatprep.subr.bf16.mxu0 0
        %2366 = vmatpush1.bf16.xpose.msra.mxu0 0
        %2367 = vmatprep.subr.bf16.mxu0 0
        %2368 = vmatpush1.bf16.xpose.msra.mxu0 0
        %2369 = vmatprep.subr.bf16.mxu0 0
        %2370 = vmatpush1.bf16.xpose.msra.mxu0 0
        %2371 = vmatprep.subr.bf16.mxu0 0
        %2372 = vmatpush1.bf16.xpose.msra.mxu0 0
        %2373 = vmatprep.subr.bf16.mxu0 0
        %2374 = vmatpush1.bf16.xpose.msra.mxu0 0
        %2375 = vmatprep.subr.bf16.mxu0 0
        %2376 = vmatpush1.bf16.xpose.msra.mxu0 0
        %2377 = vmatprep.subr.bf16.mxu0 0
        %2378 = vmatpush1.bf16.xpose.msra.mxu0 0
        %2379 = vmatprep.subr.bf16.mxu0 0
        %2380 = vmatpush1.bf16.xpose.msra.mxu0 0
        %2381 = vmatprep.subr.bf16.mxu0 0
        %2382 = vmatpush1.bf16.xpose.msra.mxu0 0
        %2383 = vmatprep.subr.bf16.mxu0 0
        %2384 = vmatpush1.bf16.xpose.msra.mxu0 0
        %2385 = vmatprep.subr.bf16.mxu0 0
        %2386 = vmatpush1.bf16.xpose.msra.mxu0 0
        %2387 = vmatprep.subr.bf16.mxu0 0
        %2388 = vmatpush1.bf16.xpose.msra.mxu0 0
        %2389 = vmatprep.subr.bf16.mxu0 0
        %2390 = vmatpush1.bf16.xpose.msra.mxu0 0
        %2391 = vmatprep.subr.bf16.mxu0 0
        %2392 = vmatpush1.bf16.xpose.msra.mxu0 0
        %2393 = vmatprep.subr.bf16.mxu0 0
        %2394 = vmatpush1.bf16.xpose.msra.mxu0 0
        %2395 = vmatprep.mubr.bf16.mxu0 0
        %2396 = vmatmul.mubr.bf16.gmra.mrb[0].mxu0 %v2358
        %v2397 = vpop.f32.mrb[0].mxu0
        %v2398 = vadd.f32 0.0, %v2397
        %v2399 = vpop.f32.mrb[0].mxu0
        %v2400 = vpop.f32.mrb[0].mxu0
        %v2401 = vpop.f32.mrb[0].mxu0
        %2402 = vdwg.mxu0
        %v2404 = vsel %vm1109, %v2356, 0
        %v2407 = vsel %vm1109, %v2264, 0
        %2409 = vmatprep.subr.bf16.mxu0 0
        %2410 = vmatpush1.bf16.xpose.msra.mxu0 %v2407
        %2411 = vmatprep.subr.bf16.mxu0 0
        %2412 = vmatpush1.bf16.xpose.msra.mxu0 0
        %2413 = vmatprep.subr.bf16.mxu0 0
        %2414 = vmatpush1.bf16.xpose.msra.mxu0 0
        %2415 = vmatprep.subr.bf16.mxu0 0
        %2416 = vmatpush1.bf16.xpose.msra.mxu0 0
        %2417 = vmatprep.subr.bf16.mxu0 0
        %2418 = vmatpush1.bf16.xpose.msra.mxu0 0
        %2419 = vmatprep.subr.bf16.mxu0 0
        %2420 = vmatpush1.bf16.xpose.msra.mxu0 0
        %2421 = vmatprep.subr.bf16.mxu0 0
        %2422 = vmatpush1.bf16.xpose.msra.mxu0 0
        %2423 = vmatprep.subr.bf16.mxu0 0
        %2424 = vmatpush1.bf16.xpose.msra.mxu0 0
        %2425 = vmatprep.subr.bf16.mxu0 0
        %2426 = vmatpush1.bf16.xpose.msra.mxu0 0
        %2427 = vmatprep.subr.bf16.mxu0 0
        %2428 = vmatpush1.bf16.xpose.msra.mxu0 0
        %2429 = vmatprep.subr.bf16.mxu0 0
        %2430 = vmatpush1.bf16.xpose.msra.mxu0 0
        %2431 = vmatprep.subr.bf16.mxu0 0
        %2432 = vmatpush1.bf16.xpose.msra.mxu0 0
        %2433 = vmatprep.subr.bf16.mxu0 0
        %2434 = vmatpush1.bf16.xpose.msra.mxu0 0
        %2435 = vmatprep.subr.bf16.mxu0 0
        %2436 = vmatpush1.bf16.xpose.msra.mxu0 0
        %2437 = vmatprep.subr.bf16.mxu0 0
        %2438 = vmatpush1.bf16.xpose.msra.mxu0 0
        %2439 = vmatprep.subr.bf16.mxu0 0
        %2440 = vmatpush1.bf16.xpose.msra.mxu0 0
        %2441 = vmatprep.mubr.bf16.mxu0 0
        %2442 = vmatmul.mubr.bf16.gmra.mrb[0].mxu0 %v2404
        %v2443 = vpop.f32.mrb[0].mxu0
        %v2444 = vadd.f32 0.0, %v2443
        %v2445 = vpop.f32.mrb[0].mxu0
        %v2446 = vpop.f32.mrb[0].mxu0
        %v2447 = vpop.f32.mrb[0].mxu0
        %2448 = vdwg.mxu0
        %vm2449 = vcmask 130048
        %v2450 = vsel %vm2449, %v2398, -inf
        %2451 = vmax.xlane.f32.xlu0 %v2450
        %v2452 = vpop.xlane.xlu0 %2451
        %v2453 = vsel %vm2449, %v2444, -inf
        %2454 = vmax.xlane.f32.xlu0 %v2453
        %v2455 = vpop.xlane.xlu0 %2454
        %v2456 = vsub.f32 %v2398, %v2452
        %v2457 = vsub.f32 %v2444, %v2455
        %v2458 = vmul.f32 %v2456, 1.442695
        %v2459 = vpow.pop %v2458
        %v2460 = vmul.f32 %v2457, 1.442695
        %v2461 = vpow.pop %v2460
        %v2462 = vsel %vm2449, %v2459, 0.0
        %2463 = vadd.xlane.f32.xlu0 %v2462
        %v2464 = vpop.xlane.xlu0 %2463
        %v2465 = vsel %vm2449, %v2461, 0.0
        %2466 = vadd.xlane.f32.xlu0 %v2465
        %v2467 = vpop.xlane.xlu0 %2466
        %v2468 = vrcp.pop %v2464
        %v2469 = vrcp.pop %v2467
        %v2470 = vmul.f32 %v2459, %v2468
        %v2471 = vmul.f32 %v2461, %v2469
        %v2472 = vpack.c.bf16 %v2470, %v2470
        %v2473 = vpack.c.bf16 %v2471, %v2471
        %v2475 = vsel %vm2449, %v2472, 0
        %2477 = vmatprep.subr.bf16.mxu0 0
        %2478 = vmatpush1.bf16.msra.mxu0 %v2350
        %2479 = vmatprep.subr.bf16.mxu0 0
        %2480 = vmatpush1.bf16.msra.mxu0 0
        %2481 = vmatprep.subr.bf16.mxu0 0
        %2482 = vmatpush1.bf16.msra.mxu0 0
        %2483 = vmatprep.subr.bf16.mxu0 0
        %2484 = vmatpush1.bf16.msra.mxu0 0
        %2485 = vmatprep.subr.bf16.mxu0 0
        %2486 = vmatpush1.bf16.msra.mxu0 0
        %2487 = vmatprep.subr.bf16.mxu0 0
        %2488 = vmatpush1.bf16.msra.mxu0 0
        %2489 = vmatprep.subr.bf16.mxu0 0
        %2490 = vmatpush1.bf16.msra.mxu0 0
        %2491 = vmatprep.subr.bf16.mxu0 0
        %2492 = vmatpush1.bf16.msra.mxu0 0
        %2493 = vmatprep.subr.bf16.mxu0 0
        %2494 = vmatpush1.bf16.msra.mxu0 0
        %2495 = vmatprep.subr.bf16.mxu0 0
        %2496 = vmatpush1.bf16.msra.mxu0 0
        %2497 = vmatprep.subr.bf16.mxu0 0
        %2498 = vmatpush1.bf16.msra.mxu0 0
        %2499 = vmatprep.subr.bf16.mxu0 0
        %2500 = vmatpush1.bf16.msra.mxu0 0
        %2501 = vmatprep.subr.bf16.mxu0 0
        %2502 = vmatpush1.bf16.msra.mxu0 0
        %2503 = vmatprep.subr.bf16.mxu0 0
        %2504 = vmatpush1.bf16.msra.mxu0 0
        %2505 = vmatprep.subr.bf16.mxu0 0
        %2506 = vmatpush1.bf16.msra.mxu0 0
        %2507 = vmatprep.subr.bf16.mxu0 0
        %2508 = vmatpush1.bf16.msra.mxu0 0
        %2509 = vmatprep.mubr.bf16.mxu0 0
        %2510 = vmatmul.mubr.bf16.gmra.mrb[0].mxu0 %v2475
        %v2511 = vpop.f32.mrb[0].mxu0
        %v2512 = vadd.f32 0.0, %v2511
        %v2513 = vpop.f32.mrb[0].mxu0
        %v2514 = vpop.f32.mrb[0].mxu0
        %v2515 = vpop.f32.mrb[0].mxu0
        %2516 = vdwg.mxu0
        %v2518 = vsel %vm2449, %v2473, 0
        %2520 = vmatprep.subr.bf16.mxu0 0
        %2521 = vmatpush1.bf16.msra.mxu0 %v2351
        %2522 = vmatprep.subr.bf16.mxu0 0
        %2523 = vmatpush1.bf16.msra.mxu0 0
        %2524 = vmatprep.subr.bf16.mxu0 0
        %2525 = vmatpush1.bf16.msra.mxu0 0
        %2526 = vmatprep.subr.bf16.mxu0 0
        %2527 = vmatpush1.bf16.msra.mxu0 0
        %2528 = vmatprep.subr.bf16.mxu0 0
        %2529 = vmatpush1.bf16.msra.mxu0 0
        %2530 = vmatprep.subr.bf16.mxu0 0
        %2531 = vmatpush1.bf16.msra.mxu0 0
        %2532 = vmatprep.subr.bf16.mxu0 0
        %2533 = vmatpush1.bf16.msra.mxu0 0
        %2534 = vmatprep.subr.bf16.mxu0 0
        %2535 = vmatpush1.bf16.msra.mxu0 0
        %2536 = vmatprep.subr.bf16.mxu0 0
        %2537 = vmatpush1.bf16.msra.mxu0 0
        %2538 = vmatprep.subr.bf16.mxu0 0
        %2539 = vmatpush1.bf16.msra.mxu0 0
        %2540 = vmatprep.subr.bf16.mxu0 0
        %2541 = vmatpush1.bf16.msra.mxu0 0
        %2542 = vmatprep.subr.bf16.mxu0 0
        %2543 = vmatpush1.bf16.msra.mxu0 0
        %2544 = vmatprep.subr.bf16.mxu0 0
        %2545 = vmatpush1.bf16.msra.mxu0 0
        %2546 = vmatprep.subr.bf16.mxu0 0
        %2547 = vmatpush1.bf16.msra.mxu0 0
        %2548 = vmatprep.subr.bf16.mxu0 0
        %2549 = vmatpush1.bf16.msra.mxu0 0
        %2550 = vmatprep.subr.bf16.mxu0 0
        %2551 = vmatpush1.bf16.msra.mxu0 0
        %2552 = vmatprep.mubr.bf16.mxu0 0
        %2553 = vmatmul.mubr.bf16.gmra.mrb[0].mxu0 %v2518
        %v2554 = vpop.f32.mrb[0].mxu0
        %v2555 = vadd.f32 0.0, %v2554
        %v2556 = vpop.f32.mrb[0].mxu0
        %v2557 = vpop.f32.mrb[0].mxu0
        %v2558 = vpop.f32.mrb[0].mxu0
        %2559 = vdwg.mxu0
        %v2560 = vpack.c.bf16 %v2555, %v2512
        %2561 = vst.msk [vmem:[#allocation2] sm:$0xff] %vm1109, %v2560
        %2562 = vrot.lane.b32.xlu0 %v2355, 120
        %v2563 = vpop.permute.xlu0 %2562
        %2565 = vrot.lane.b32.xlu0 %v2263, 120
        %v2566 = vpop.permute.xlu0 %2565
        %v2568 = vsel %vm1109, %v2563, 0
        %v2571 = vsel %vm1109, %v2566, 0
        %2573 = vmatprep.subr.bf16.mxu0 0
        %2574 = vmatpush1.bf16.xpose.msra.mxu0 %v2571
        %2575 = vmatprep.subr.bf16.mxu0 0
        %2576 = vmatpush1.bf16.xpose.msra.mxu0 0
        %2577 = vmatprep.subr.bf16.mxu0 0
        %2578 = vmatpush1.bf16.xpose.msra.mxu0 0
        %2579 = vmatprep.subr.bf16.mxu0 0
        %2580 = vmatpush1.bf16.xpose.msra.mxu0 0
        %2581 = vmatprep.subr.bf16.mxu0 0
        %2582 = vmatpush1.bf16.xpose.msra.mxu0 0
        %2583 = vmatprep.subr.bf16.mxu0 0
        %2584 = vmatpush1.bf16.xpose.msra.mxu0 0
        %2585 = vmatprep.subr.bf16.mxu0 0
        %2586 = vmatpush1.bf16.xpose.msra.mxu0 0
        %2587 = vmatprep.subr.bf16.mxu0 0
        %2588 = vmatpush1.bf16.xpose.msra.mxu0 0
        %2589 = vmatprep.subr.bf16.mxu0 0
        %2590 = vmatpush1.bf16.xpose.msra.mxu0 0
        %2591 = vmatprep.subr.bf16.mxu0 0
        %2592 = vmatpush1.bf16.xpose.msra.mxu0 0
        %2593 = vmatprep.subr.bf16.mxu0 0
        %2594 = vmatpush1.bf16.xpose.msra.mxu0 0
        %2595 = vmatprep.subr.bf16.mxu0 0
        %2596 = vmatpush1.bf16.xpose.msra.mxu0 0
        %2597 = vmatprep.subr.bf16.mxu0 0
        %2598 = vmatpush1.bf16.xpose.msra.mxu0 0
        %2599 = vmatprep.subr.bf16.mxu0 0
        %2600 = vmatpush1.bf16.xpose.msra.mxu0 0
        %2601 = vmatprep.subr.bf16.mxu0 0
        %2602 = vmatpush1.bf16.xpose.msra.mxu0 0
        %2603 = vmatprep.subr.bf16.mxu0 0
        %2604 = vmatpush1.bf16.xpose.msra.mxu0 0
        %2605 = vmatprep.mubr.bf16.mxu0 0
        %2606 = vmatmul.mubr.bf16.gmra.mrb[0].mxu0 %v2568
        %v2607 = vpop.f32.mrb[0].mxu0
        %v2608 = vadd.f32 0.0, %v2607
        %v2609 = vpop.f32.mrb[0].mxu0
        %v2610 = vpop.f32.mrb[0].mxu0
        %v2611 = vpop.f32.mrb[0].mxu0
        %2612 = vdwg.mxu0
        %2613 = vrot.lane.b32.xlu0 %v2356, 120
        %v2614 = vpop.permute.xlu0 %2613
        %2616 = vrot.lane.b32.xlu0 %v2264, 120
        %v2617 = vpop.permute.xlu0 %2616
        %v2619 = vsel %vm1109, %v2614, 0
        %v2622 = vsel %vm1109, %v2617, 0
        %2624 = vmatprep.subr.bf16.mxu0 0
        %2625 = vmatpush1.bf16.xpose.msra.mxu0 %v2622
        %2626 = vmatprep.subr.bf16.mxu0 0
        %2627 = vmatpush1.bf16.xpose.msra.mxu0 0
        %2628 = vmatprep.subr.bf16.mxu0 0
        %2629 = vmatpush1.bf16.xpose.msra.mxu0 0
        %2630 = vmatprep.subr.bf16.mxu0 0
        %2631 = vmatpush1.bf16.xpose.msra.mxu0 0
        %2632 = vmatprep.subr.bf16.mxu0 0
        %2633 = vmatpush1.bf16.xpose.msra.mxu0 0
        %2634 = vmatprep.subr.bf16.mxu0 0
        %2635 = vmatpush1.bf16.xpose.msra.mxu0 0
        %2636 = vmatprep.subr.bf16.mxu0 0
        %2637 = vmatpush1.bf16.xpose.msra.mxu0 0
        %2638 = vmatprep.subr.bf16.mxu0 0
        %2639 = vmatpush1.bf16.xpose.msra.mxu0 0
        %2640 = vmatprep.subr.bf16.mxu0 0
        %2641 = vmatpush1.bf16.xpose.msra.mxu0 0
        %2642 = vmatprep.subr.bf16.mxu0 0
        %2643 = vmatpush1.bf16.xpose.msra.mxu0 0
        %2644 = vmatprep.subr.bf16.mxu0 0
        %2645 = vmatpush1.bf16.xpose.msra.mxu0 0
        %2646 = vmatprep.subr.bf16.mxu0 0
        %2647 = vmatpush1.bf16.xpose.msra.mxu0 0
        %2648 = vmatprep.subr.bf16.mxu0 0
        %2649 = vmatpush1.bf16.xpose.msra.mxu0 0
        %2650 = vmatprep.subr.bf16.mxu0 0
        %2651 = vmatpush1.bf16.xpose.msra.mxu0 0
        %2652 = vmatprep.subr.bf16.mxu0 0
        %2653 = vmatpush1.bf16.xpose.msra.mxu0 0
        %2654 = vmatprep.subr.bf16.mxu0 0
        %2655 = vmatpush1.bf16.xpose.msra.mxu0 0
        %2656 = vmatprep.mubr.bf16.mxu0 0
        %2657 = vmatmul.mubr.bf16.gmra.mrb[0].mxu0 %v2619
        %v2658 = vpop.f32.mrb[0].mxu0
        %v2659 = vadd.f32 0.0, %v2658
        %v2660 = vpop.f32.mrb[0].mxu0
        %v2661 = vpop.f32.mrb[0].mxu0
        %v2662 = vpop.f32.mrb[0].mxu0
        %2663 = vdwg.mxu0
        %v2664 = vsel %vm2449, %v2608, -inf
        %2665 = vmax.xlane.f32.xlu0 %v2664
        %v2666 = vpop.xlane.xlu0 %2665
        %v2667 = vsel %vm2449, %v2659, -inf
        %2668 = vmax.xlane.f32.xlu0 %v2667
        %v2669 = vpop.xlane.xlu0 %2668
        %v2670 = vsub.f32 %v2608, %v2666
        %v2671 = vsub.f32 %v2659, %v2669
        %v2672 = vmul.f32 %v2670, 1.442695
        %v2673 = vpow.pop %v2672
        %v2674 = vmul.f32 %v2671, 1.442695
        %v2675 = vpow.pop %v2674
        %v2676 = vsel %vm2449, %v2673, 0.0
        %2677 = vadd.xlane.f32.xlu0 %v2676
        %v2678 = vpop.xlane.xlu0 %2677
        %v2679 = vsel %vm2449, %v2675, 0.0
        %2680 = vadd.xlane.f32.xlu0 %v2679
        %v2681 = vpop.xlane.xlu0 %2680
        %v2682 = vrcp.pop %v2678
        %v2683 = vrcp.pop %v2681
        %v2684 = vmul.f32 %v2673, %v2682
        %v2685 = vmul.f32 %v2675, %v2683
        %v2686 = vpack.c.bf16 %v2684, %v2684
        %v2687 = vpack.c.bf16 %v2685, %v2685
        %2689 = vrot.lane.b32.xlu0 %v2350, 120
        %v2690 = vpop.permute.xlu0 %2689
        %v2693 = vsel %vm2449, %v2686, 0
        %2695 = vmatprep.subr.bf16.mxu0 0
        %2696 = vmatpush1.bf16.msra.mxu0 %v2690
        %2697 = vmatprep.subr.bf16.mxu0 0
        %2698 = vmatpush1.bf16.msra.mxu0 0
        %2699 = vmatprep.subr.bf16.mxu0 0
        %2700 = vmatpush1.bf16.msra.mxu0 0
        %2701 = vmatprep.subr.bf16.mxu0 0
        %2702 = vmatpush1.bf16.msra.mxu0 0
        %2703 = vmatprep.subr.bf16.mxu0 0
        %2704 = vmatpush1.bf16.msra.mxu0 0
        %2705 = vmatprep.subr.bf16.mxu0 0
        %2706 = vmatpush1.bf16.msra.mxu0 0
        %2707 = vmatprep.subr.bf16.mxu0 0
        %2708 = vmatpush1.bf16.msra.mxu0 0
        %2709 = vmatprep.subr.bf16.mxu0 0
        %2710 = vmatpush1.bf16.msra.mxu0 0
        %2711 = vmatprep.subr.bf16.mxu0 0
        %2712 = vmatpush1.bf16.msra.mxu0 0
        %2713 = vmatprep.subr.bf16.mxu0 0
        %2714 = vmatpush1.bf16.msra.mxu0 0
        %2715 = vmatprep.subr.bf16.mxu0 0
        %2716 = vmatpush1.bf16.msra.mxu0 0
        %2717 = vmatprep.subr.bf16.mxu0 0
        %2718 = vmatpush1.bf16.msra.mxu0 0
        %2719 = vmatprep.subr.bf16.mxu0 0
        %2720 = vmatpush1.bf16.msra.mxu0 0
        %2721 = vmatprep.subr.bf16.mxu0 0
        %2722 = vmatpush1.bf16.msra.mxu0 0
        %2723 = vmatprep.subr.bf16.mxu0 0
        %2724 = vmatpush1.bf16.msra.mxu0 0
        %2725 = vmatprep.subr.bf16.mxu0 0
        %2726 = vmatpush1.bf16.msra.mxu0 0
        %2727 = vmatprep.mubr.bf16.mxu0 0
        %2728 = vmatmul.mubr.bf16.gmra.mrb[0].mxu0 %v2693
        %v2729 = vpop.f32.mrb[0].mxu0
        %v2730 = vadd.f32 0.0, %v2729
        %v2731 = vpop.f32.mrb[0].mxu0
        %v2732 = vpop.f32.mrb[0].mxu0
        %v2733 = vpop.f32.mrb[0].mxu0
        %2734 = vdwg.mxu0
        %2736 = vrot.lane.b32.xlu0 %v2351, 120
        %v2737 = vpop.permute.xlu0 %2736
        %v2740 = vsel %vm2449, %v2687, 0
        %2742 = vmatprep.subr.bf16.mxu0 0
        %2743 = vmatpush1.bf16.msra.mxu0 %v2737
        %2744 = vmatprep.subr.bf16.mxu0 0
        %2745 = vmatpush1.bf16.msra.mxu0 0
        %2746 = vmatprep.subr.bf16.mxu0 0
        %2747 = vmatpush1.bf16.msra.mxu0 0
        %2748 = vmatprep.subr.bf16.mxu0 0
        %2749 = vmatpush1.bf16.msra.mxu0 0
        %2750 = vmatprep.subr.bf16.mxu0 0
        %2751 = vmatpush1.bf16.msra.mxu0 0
        %2752 = vmatprep.subr.bf16.mxu0 0
        %2753 = vmatpush1.bf16.msra.mxu0 0
        %2754 = vmatprep.subr.bf16.mxu0 0
        %2755 = vmatpush1.bf16.msra.mxu0 0
        %2756 = vmatprep.subr.bf16.mxu0 0
        %2757 = vmatpush1.bf16.msra.mxu0 0
        %2758 = vmatprep.subr.bf16.mxu0 0
        %2759 = vmatpush1.bf16.msra.mxu0 0
        %2760 = vmatprep.subr.bf16.mxu0 0
        %2761 = vmatpush1.bf16.msra.mxu0 0
        %2762 = vmatprep.subr.bf16.mxu0 0
        %2763 = vmatpush1.bf16.msra.mxu0 0
        %2764 = vmatprep.subr.bf16.mxu0 0
        %2765 = vmatpush1.bf16.msra.mxu0 0
        %2766 = vmatprep.subr.bf16.mxu0 0
        %2767 = vmatpush1.bf16.msra.mxu0 0
        %2768 = vmatprep.subr.bf16.mxu0 0
        %2769 = vmatpush1.bf16.msra.mxu0 0
        %2770 = vmatprep.subr.bf16.mxu0 0
        %2771 = vmatpush1.bf16.msra.mxu0 0
        %2772 = vmatprep.subr.bf16.mxu0 0
        %2773 = vmatpush1.bf16.msra.mxu0 0
        %2774 = vmatprep.mubr.bf16.mxu0 0
        %2775 = vmatmul.mubr.bf16.gmra.mrb[0].mxu0 %v2740
        %v2776 = vpop.f32.mrb[0].mxu0
        %v2777 = vadd.f32 0.0, %v2776
        %v2778 = vpop.f32.mrb[0].mxu0
        %v2779 = vpop.f32.mrb[0].mxu0
        %v2780 = vpop.f32.mrb[0].mxu0
        %2781 = vdwg.mxu0
        %v2782 = vpack.c.bf16 %v2777, %v2730
        %2784 = vrot.lane.b32.xlu0 %v2782, 8
        %v2785 = vpop.permute.xlu0 %2784
        %2787 = vst.msk [vmem:[#allocation2] sm:$0xff] %vm1549, %v2785
        %2788 = vrot.lane.b32.xlu0 %v2355, 112
        %v2789 = vpop.permute.xlu0 %2788
        %2790 = vrot.lane.b32.xlu0 %v2263, 112
        %v2791 = vpop.permute.xlu0 %2790
        %v2793 = vsel %vm1109, %v2789, 0
        %v2796 = vsel %vm1109, %v2791, 0
        %2798 = vmatprep.subr.bf16.mxu0 0
        %2799 = vmatpush1.bf16.xpose.msra.mxu0 %v2796
        %2800 = vmatprep.subr.bf16.mxu0 0
        %2801 = vmatpush1.bf16.xpose.msra.mxu0 0
        %2802 = vmatprep.subr.bf16.mxu0 0
        %2803 = vmatpush1.bf16.xpose.msra.mxu0 0
        %2804 = vmatprep.subr.bf16.mxu0 0
        %2805 = vmatpush1.bf16.xpose.msra.mxu0 0
        %2806 = vmatprep.subr.bf16.mxu0 0
        %2807 = vmatpush1.bf16.xpose.msra.mxu0 0
        %2808 = vmatprep.subr.bf16.mxu0 0
        %2809 = vmatpush1.bf16.xpose.msra.mxu0 0
        %2810 = vmatprep.subr.bf16.mxu0 0
        %2811 = vmatpush1.bf16.xpose.msra.mxu0 0
        %2812 = vmatprep.subr.bf16.mxu0 0
        %2813 = vmatpush1.bf16.xpose.msra.mxu0 0
        %2814 = vmatprep.subr.bf16.mxu0 0
        %2815 = vmatpush1.bf16.xpose.msra.mxu0 0
        %2816 = vmatprep.subr.bf16.mxu0 0
        %2817 = vmatpush1.bf16.xpose.msra.mxu0 0
        %2818 = vmatprep.subr.bf16.mxu0 0
        %2819 = vmatpush1.bf16.xpose.msra.mxu0 0
        %2820 = vmatprep.subr.bf16.mxu0 0
        %2821 = vmatpush1.bf16.xpose.msra.mxu0 0
        %2822 = vmatprep.subr.bf16.mxu0 0
        %2823 = vmatpush1.bf16.xpose.msra.mxu0 0
        %2824 = vmatprep.subr.bf16.mxu0 0
        %2825 = vmatpush1.bf16.xpose.msra.mxu0 0
        %2826 = vmatprep.subr.bf16.mxu0 0
        %2827 = vmatpush1.bf16.xpose.msra.mxu0 0
        %2828 = vmatprep.subr.bf16.mxu0 0
        %2829 = vmatpush1.bf16.xpose.msra.mxu0 0
        %2830 = vmatprep.mubr.bf16.mxu0 0
        %2831 = vmatmul.mubr.bf16.gmra.mrb[0].mxu0 %v2793
        %v2832 = vpop.f32.mrb[0].mxu0
        %v2833 = vadd.f32 0.0, %v2832
        %v2834 = vpop.f32.mrb[0].mxu0
        %v2835 = vpop.f32.mrb[0].mxu0
        %v2836 = vpop.f32.mrb[0].mxu0
        %2837 = vdwg.mxu0
        %2838 = vrot.lane.b32.xlu0 %v2356, 112
        %v2839 = vpop.permute.xlu0 %2838
        %2840 = vrot.lane.b32.xlu0 %v2264, 112
        %v2841 = vpop.permute.xlu0 %2840
        %v2843 = vsel %vm1109, %v2839, 0
        %v2846 = vsel %vm1109, %v2841, 0
        %2848 = vmatprep.subr.bf16.mxu0 0
        %2849 = vmatpush1.bf16.xpose.msra.mxu0 %v2846
        %2850 = vmatprep.subr.bf16.mxu0 0
        %2851 = vmatpush1.bf16.xpose.msra.mxu0 0
        %2852 = vmatprep.subr.bf16.mxu0 0
        %2853 = vmatpush1.bf16.xpose.msra.mxu0 0
        %2854 = vmatprep.subr.bf16.mxu0 0
        %2855 = vmatpush1.bf16.xpose.msra.mxu0 0
        %2856 = vmatprep.subr.bf16.mxu0 0
        %2857 = vmatpush1.bf16.xpose.msra.mxu0 0
        %2858 = vmatprep.subr.bf16.mxu0 0
        %2859 = vmatpush1.bf16.xpose.msra.mxu0 0
        %2860 = vmatprep.subr.bf16.mxu0 0
        %2861 = vmatpush1.bf16.xpose.msra.mxu0 0
        %2862 = vmatprep.subr.bf16.mxu0 0
        %2863 = vmatpush1.bf16.xpose.msra.mxu0 0
        %2864 = vmatprep.subr.bf16.mxu0 0
        %2865 = vmatpush1.bf16.xpose.msra.mxu0 0
        %2866 = vmatprep.subr.bf16.mxu0 0
        %2867 = vmatpush1.bf16.xpose.msra.mxu0 0
        %2868 = vmatprep.subr.bf16.mxu0 0
        %2869 = vmatpush1.bf16.xpose.msra.mxu0 0
        %2870 = vmatprep.subr.bf16.mxu0 0
        %2871 = vmatpush1.bf16.xpose.msra.mxu0 0
        %2872 = vmatprep.subr.bf16.mxu0 0
        %2873 = vmatpush1.bf16.xpose.msra.mxu0 0
        %2874 = vmatprep.subr.bf16.mxu0 0
        %2875 = vmatpush1.bf16.xpose.msra.mxu0 0
        %2876 = vmatprep.subr.bf16.mxu0 0
        %2877 = vmatpush1.bf16.xpose.msra.mxu0 0
        %2878 = vmatprep.subr.bf16.mxu0 0
        %2879 = vmatpush1.bf16.xpose.msra.mxu0 0
        %2880 = vmatprep.mubr.bf16.mxu0 0
        %2881 = vmatmul.mubr.bf16.gmra.mrb[0].mxu0 %v2843
        %v2882 = vpop.f32.mrb[0].mxu0
        %v2883 = vadd.f32 0.0, %v2882
        %v2884 = vpop.f32.mrb[0].mxu0
        %v2885 = vpop.f32.mrb[0].mxu0
        %v2886 = vpop.f32.mrb[0].mxu0
        %2887 = vdwg.mxu0
        %v2888 = vsel %vm2449, %v2833, -inf
        %2889 = vmax.xlane.f32.xlu0 %v2888
        %v2890 = vpop.xlane.xlu0 %2889
        %v2891 = vsel %vm2449, %v2883, -inf
        %2892 = vmax.xlane.f32.xlu0 %v2891
        %v2893 = vpop.xlane.xlu0 %2892
        %v2894 = vsub.f32 %v2833, %v2890
        %v2895 = vsub.f32 %v2883, %v2893
        %v2896 = vmul.f32 %v2894, 1.442695
        %v2897 = vpow.pop %v2896
        %v2898 = vmul.f32 %v2895, 1.442695
        %v2899 = vpow.pop %v2898
        %v2900 = vsel %vm2449, %v2897, 0.0
        %2901 = vadd.xlane.f32.xlu0 %v2900
        %v2902 = vpop.xlane.xlu0 %2901
        %v2903 = vsel %vm2449, %v2899, 0.0
        %2904 = vadd.xlane.f32.xlu0 %v2903
        %v2905 = vpop.xlane.xlu0 %2904
        %v2906 = vrcp.pop %v2902
        %v2907 = vrcp.pop %v2905
        %v2908 = vmul.f32 %v2897, %v2906
        %v2909 = vmul.f32 %v2899, %v2907
        %v2910 = vpack.c.bf16 %v2908, %v2908
        %v2911 = vpack.c.bf16 %v2909, %v2909
        %2912 = vrot.lane.b32.xlu0 %v2350, 112
        %v2913 = vpop.permute.xlu0 %2912
        %v2916 = vsel %vm2449, %v2910, 0
        %2918 = vmatprep.subr.bf16.mxu0 0
        %2919 = vmatpush1.bf16.msra.mxu0 %v2913
        %2920 = vmatprep.subr.bf16.mxu0 0
        %2921 = vmatpush1.bf16.msra.mxu0 0
        %2922 = vmatprep.subr.bf16.mxu0 0
        %2923 = vmatpush1.bf16.msra.mxu0 0
        %2924 = vmatprep.subr.bf16.mxu0 0
        %2925 = vmatpush1.bf16.msra.mxu0 0
        %2926 = vmatprep.subr.bf16.mxu0 0
        %2927 = vmatpush1.bf16.msra.mxu0 0
        %2928 = vmatprep.subr.bf16.mxu0 0
        %2929 = vmatpush1.bf16.msra.mxu0 0
        %2930 = vmatprep.subr.bf16.mxu0 0
        %2931 = vmatpush1.bf16.msra.mxu0 0
        %2932 = vmatprep.subr.bf16.mxu0 0
        %2933 = vmatpush1.bf16.msra.mxu0 0
        %2934 = vmatprep.subr.bf16.mxu0 0
        %2935 = vmatpush1.bf16.msra.mxu0 0
        %2936 = vmatprep.subr.bf16.mxu0 0
        %2937 = vmatpush1.bf16.msra.mxu0 0
        %2938 = vmatprep.subr.bf16.mxu0 0
        %2939 = vmatpush1.bf16.msra.mxu0 0
        %2940 = vmatprep.subr.bf16.mxu0 0
        %2941 = vmatpush1.bf16.msra.mxu0 0
        %2942 = vmatprep.subr.bf16.mxu0 0
        %2943 = vmatpush1.bf16.msra.mxu0 0
        %2944 = vmatprep.subr.bf16.mxu0 0
        %2945 = vmatpush1.bf16.msra.mxu0 0
        %2946 = vmatprep.subr.bf16.mxu0 0
        %2947 = vmatpush1.bf16.msra.mxu0 0
        %2948 = vmatprep.subr.bf16.mxu0 0
        %2949 = vmatpush1.bf16.msra.mxu0 0
        %2950 = vmatprep.mubr.bf16.mxu0 0
        %2951 = vmatmul.mubr.bf16.gmra.mrb[0].mxu0 %v2916
        %v2952 = vpop.f32.mrb[0].mxu0
        %v2953 = vadd.f32 0.0, %v2952
        %v2954 = vpop.f32.mrb[0].mxu0
        %v2955 = vpop.f32.mrb[0].mxu0
        %v2956 = vpop.f32.mrb[0].mxu0
        %2957 = vdwg.mxu0
        %2958 = vrot.lane.b32.xlu0 %v2351, 112
        %v2959 = vpop.permute.xlu0 %2958
        %v2962 = vsel %vm2449, %v2911, 0
        %2964 = vmatprep.subr.bf16.mxu0 0
        %2965 = vmatpush1.bf16.msra.mxu0 %v2959
        %2966 = vmatprep.subr.bf16.mxu0 0
        %2967 = vmatpush1.bf16.msra.mxu0 0
        %2968 = vmatprep.subr.bf16.mxu0 0
        %2969 = vmatpush1.bf16.msra.mxu0 0
        %2970 = vmatprep.subr.bf16.mxu0 0
        %2971 = vmatpush1.bf16.msra.mxu0 0
        %2972 = vmatprep.subr.bf16.mxu0 0
        %2973 = vmatpush1.bf16.msra.mxu0 0
        %2974 = vmatprep.subr.bf16.mxu0 0
        %2975 = vmatpush1.bf16.msra.mxu0 0
        %2976 = vmatprep.subr.bf16.mxu0 0
        %2977 = vmatpush1.bf16.msra.mxu0 0
        %2978 = vmatprep.subr.bf16.mxu0 0
        %2979 = vmatpush1.bf16.msra.mxu0 0
        %2980 = vmatprep.subr.bf16.mxu0 0
        %2981 = vmatpush1.bf16.msra.mxu0 0
        %2982 = vmatprep.subr.bf16.mxu0 0
        %2983 = vmatpush1.bf16.msra.mxu0 0
        %2984 = vmatprep.subr.bf16.mxu0 0
        %2985 = vmatpush1.bf16.msra.mxu0 0
        %2986 = vmatprep.subr.bf16.mxu0 0
        %2987 = vmatpush1.bf16.msra.mxu0 0
        %2988 = vmatprep.subr.bf16.mxu0 0
        %2989 = vmatpush1.bf16.msra.mxu0 0
        %2990 = vmatprep.subr.bf16.mxu0 0
        %2991 = vmatpush1.bf16.msra.mxu0 0
        %2992 = vmatprep.subr.bf16.mxu0 0
        %2993 = vmatpush1.bf16.msra.mxu0 0
        %2994 = vmatprep.subr.bf16.mxu0 0
        %2995 = vmatpush1.bf16.msra.mxu0 0
        %2996 = vmatprep.mubr.bf16.mxu0 0
        %2997 = vmatmul.mubr.bf16.gmra.mrb[0].mxu0 %v2962
        %v2998 = vpop.f32.mrb[0].mxu0
        %v2999 = vadd.f32 0.0, %v2998
        %v3000 = vpop.f32.mrb[0].mxu0
        %v3001 = vpop.f32.mrb[0].mxu0
        %v3002 = vpop.f32.mrb[0].mxu0
        %3003 = vdwg.mxu0
        %v3004 = vpack.c.bf16 %v2999, %v2953
        %3006 = vrot.lane.b32.xlu0 %v3004, 16
        %v3007 = vpop.permute.xlu0 %3006
        %3009 = vst.msk [vmem:[#allocation2] sm:$0xff] %vm1776, %v3007
        %3010 = vrot.lane.b32.xlu0 %v2355, 104
        %v3011 = vpop.permute.xlu0 %3010
        %3012 = vrot.lane.b32.xlu0 %v2263, 104
        %v3013 = vpop.permute.xlu0 %3012
        %v3015 = vsel %vm1109, %v3011, 0
        %v3018 = vsel %vm1109, %v3013, 0
        %3020 = vmatprep.subr.bf16.mxu0 0
        %3021 = vmatpush1.bf16.xpose.msra.mxu0 %v3018
        %3022 = vmatprep.subr.bf16.mxu0 0
        %3023 = vmatpush1.bf16.xpose.msra.mxu0 0
        %3024 = vmatprep.subr.bf16.mxu0 0
        %3025 = vmatpush1.bf16.xpose.msra.mxu0 0
        %3026 = vmatprep.subr.bf16.mxu0 0
        %3027 = vmatpush1.bf16.xpose.msra.mxu0 0
        %3028 = vmatprep.subr.bf16.mxu0 0
        %3029 = vmatpush1.bf16.xpose.msra.mxu0 0
        %3030 = vmatprep.subr.bf16.mxu0 0
        %3031 = vmatpush1.bf16.xpose.msra.mxu0 0
        %3032 = vmatprep.subr.bf16.mxu0 0
        %3033 = vmatpush1.bf16.xpose.msra.mxu0 0
        %3034 = vmatprep.subr.bf16.mxu0 0
        %3035 = vmatpush1.bf16.xpose.msra.mxu0 0
        %3036 = vmatprep.subr.bf16.mxu0 0
        %3037 = vmatpush1.bf16.xpose.msra.mxu0 0
        %3038 = vmatprep.subr.bf16.mxu0 0
        %3039 = vmatpush1.bf16.xpose.msra.mxu0 0
        %3040 = vmatprep.subr.bf16.mxu0 0
        %3041 = vmatpush1.bf16.xpose.msra.mxu0 0
        %3042 = vmatprep.subr.bf16.mxu0 0
        %3043 = vmatpush1.bf16.xpose.msra.mxu0 0
        %3044 = vmatprep.subr.bf16.mxu0 0
        %3045 = vmatpush1.bf16.xpose.msra.mxu0 0
        %3046 = vmatprep.subr.bf16.mxu0 0
        %3047 = vmatpush1.bf16.xpose.msra.mxu0 0
        %3048 = vmatprep.subr.bf16.mxu0 0
        %3049 = vmatpush1.bf16.xpose.msra.mxu0 0
        %3050 = vmatprep.subr.bf16.mxu0 0
        %3051 = vmatpush1.bf16.xpose.msra.mxu0 0
        %3052 = vmatprep.mubr.bf16.mxu0 0
        %3053 = vmatmul.mubr.bf16.gmra.mrb[0].mxu0 %v3015
        %v3054 = vpop.f32.mrb[0].mxu0
        %v3055 = vadd.f32 0.0, %v3054
        %v3056 = vpop.f32.mrb[0].mxu0
        %v3057 = vpop.f32.mrb[0].mxu0
        %v3058 = vpop.f32.mrb[0].mxu0
        %3059 = vdwg.mxu0
        %3060 = vrot.lane.b32.xlu0 %v2356, 104
        %v3061 = vpop.permute.xlu0 %3060
        %3062 = vrot.lane.b32.xlu0 %v2264, 104
        %v3063 = vpop.permute.xlu0 %3062
        %v3065 = vsel %vm1109, %v3061, 0
        %v3068 = vsel %vm1109, %v3063, 0
        %3070 = vmatprep.subr.bf16.mxu0 0
        %3071 = vmatpush1.bf16.xpose.msra.mxu0 %v3068
        %3072 = vmatprep.subr.bf16.mxu0 0
        %3073 = vmatpush1.bf16.xpose.msra.mxu0 0
        %3074 = vmatprep.subr.bf16.mxu0 0
        %3075 = vmatpush1.bf16.xpose.msra.mxu0 0
        %3076 = vmatprep.subr.bf16.mxu0 0
        %3077 = vmatpush1.bf16.xpose.msra.mxu0 0
        %3078 = vmatprep.subr.bf16.mxu0 0
        %3079 = vmatpush1.bf16.xpose.msra.mxu0 0
        %3080 = vmatprep.subr.bf16.mxu0 0
        %3081 = vmatpush1.bf16.xpose.msra.mxu0 0
        %3082 = vmatprep.subr.bf16.mxu0 0
        %3083 = vmatpush1.bf16.xpose.msra.mxu0 0
        %3084 = vmatprep.subr.bf16.mxu0 0
        %3085 = vmatpush1.bf16.xpose.msra.mxu0 0
        %3086 = vmatprep.subr.bf16.mxu0 0
        %3087 = vmatpush1.bf16.xpose.msra.mxu0 0
        %3088 = vmatprep.subr.bf16.mxu0 0
        %3089 = vmatpush1.bf16.xpose.msra.mxu0 0
        %3090 = vmatprep.subr.bf16.mxu0 0
        %3091 = vmatpush1.bf16.xpose.msra.mxu0 0
        %3092 = vmatprep.subr.bf16.mxu0 0
        %3093 = vmatpush1.bf16.xpose.msra.mxu0 0
        %3094 = vmatprep.subr.bf16.mxu0 0
        %3095 = vmatpush1.bf16.xpose.msra.mxu0 0
        %3096 = vmatprep.subr.bf16.mxu0 0
        %3097 = vmatpush1.bf16.xpose.msra.mxu0 0
        %3098 = vmatprep.subr.bf16.mxu0 0
        %3099 = vmatpush1.bf16.xpose.msra.mxu0 0
        %3100 = vmatprep.subr.bf16.mxu0 0
        %3101 = vmatpush1.bf16.xpose.msra.mxu0 0
        %3102 = vmatprep.mubr.bf16.mxu0 0
        %3103 = vmatmul.mubr.bf16.gmra.mrb[0].mxu0 %v3065
        %v3104 = vpop.f32.mrb[0].mxu0
        %v3105 = vadd.f32 0.0, %v3104
        %v3106 = vpop.f32.mrb[0].mxu0
        %v3107 = vpop.f32.mrb[0].mxu0
        %v3108 = vpop.f32.mrb[0].mxu0
        %3109 = vdwg.mxu0
        %v3110 = vsel %vm2449, %v3055, -inf
        %3111 = vmax.xlane.f32.xlu0 %v3110
        %v3112 = vpop.xlane.xlu0 %3111
        %v3113 = vsel %vm2449, %v3105, -inf
        %3114 = vmax.xlane.f32.xlu0 %v3113
        %v3115 = vpop.xlane.xlu0 %3114
        %v3116 = vsub.f32 %v3055, %v3112
        %v3117 = vsub.f32 %v3105, %v3115
        %v3118 = vmul.f32 %v3116, 1.442695
        %v3119 = vpow.pop %v3118
        %v3120 = vmul.f32 %v3117, 1.442695
        %v3121 = vpow.pop %v3120
        %v3122 = vsel %vm2449, %v3119, 0.0
        %3123 = vadd.xlane.f32.xlu0 %v3122
        %v3124 = vpop.xlane.xlu0 %3123
        %v3125 = vsel %vm2449, %v3121, 0.0
        %3126 = vadd.xlane.f32.xlu0 %v3125
        %v3127 = vpop.xlane.xlu0 %3126
        %v3128 = vrcp.pop %v3124
        %v3129 = vrcp.pop %v3127
        %v3130 = vmul.f32 %v3119, %v3128
        %v3131 = vmul.f32 %v3121, %v3129
        %v3132 = vpack.c.bf16 %v3130, %v3130
        %v3133 = vpack.c.bf16 %v3131, %v3131
        %3134 = vrot.lane.b32.xlu0 %v2350, 104
        %v3135 = vpop.permute.xlu0 %3134
        %v3138 = vsel %vm2449, %v3132, 0
        %3140 = vmatprep.subr.bf16.mxu0 0
        %3141 = vmatpush1.bf16.msra.mxu0 %v3135
        %3142 = vmatprep.subr.bf16.mxu0 0
        %3143 = vmatpush1.bf16.msra.mxu0 0
        %3144 = vmatprep.subr.bf16.mxu0 0
        %3145 = vmatpush1.bf16.msra.mxu0 0
        %3146 = vmatprep.subr.bf16.mxu0 0
        %3147 = vmatpush1.bf16.msra.mxu0 0
        %3148 = vmatprep.subr.bf16.mxu0 0
        %3149 = vmatpush1.bf16.msra.mxu0 0
        %3150 = vmatprep.subr.bf16.mxu0 0
        %3151 = vmatpush1.bf16.msra.mxu0 0
        %3152 = vmatprep.subr.bf16.mxu0 0
        %3153 = vmatpush1.bf16.msra.mxu0 0
        %3154 = vmatprep.subr.bf16.mxu0 0
        %3155 = vmatpush1.bf16.msra.mxu0 0
        %3156 = vmatprep.subr.bf16.mxu0 0
        %3157 = vmatpush1.bf16.msra.mxu0 0
        %3158 = vmatprep.subr.bf16.mxu0 0
        %3159 = vmatpush1.bf16.msra.mxu0 0
        %3160 = vmatprep.subr.bf16.mxu0 0
        %3161 = vmatpush1.bf16.msra.mxu0 0
        %3162 = vmatprep.subr.bf16.mxu0 0
        %3163 = vmatpush1.bf16.msra.mxu0 0
        %3164 = vmatprep.subr.bf16.mxu0 0
        %3165 = vmatpush1.bf16.msra.mxu0 0
        %3166 = vmatprep.subr.bf16.mxu0 0
        %3167 = vmatpush1.bf16.msra.mxu0 0
        %3168 = vmatprep.subr.bf16.mxu0 0
        %3169 = vmatpush1.bf16.msra.mxu0 0
        %3170 = vmatprep.subr.bf16.mxu0 0
        %3171 = vmatpush1.bf16.msra.mxu0 0
        %3172 = vmatprep.mubr.bf16.mxu0 0
        %3173 = vmatmul.mubr.bf16.gmra.mrb[0].mxu0 %v3138
        %v3174 = vpop.f32.mrb[0].mxu0
        %v3175 = vadd.f32 0.0, %v3174
        %v3176 = vpop.f32.mrb[0].mxu0
        %v3177 = vpop.f32.mrb[0].mxu0
        %v3178 = vpop.f32.mrb[0].mxu0
        %3179 = vdwg.mxu0
        %3180 = vrot.lane.b32.xlu0 %v2351, 104
        %v3181 = vpop.permute.xlu0 %3180
        %v3184 = vsel %vm2449, %v3133, 0
        %3186 = vmatprep.subr.bf16.mxu0 0
        %3187 = vmatpush1.bf16.msra.mxu0 %v3181
        %3188 = vmatprep.subr.bf16.mxu0 0
        %3189 = vmatpush1.bf16.msra.mxu0 0
        %3190 = vmatprep.subr.bf16.mxu0 0
        %3191 = vmatpush1.bf16.msra.mxu0 0
        %3192 = vmatprep.subr.bf16.mxu0 0
        %3193 = vmatpush1.bf16.msra.mxu0 0
        %3194 = vmatprep.subr.bf16.mxu0 0
        %3195 = vmatpush1.bf16.msra.mxu0 0
        %3196 = vmatprep.subr.bf16.mxu0 0
        %3197 = vmatpush1.bf16.msra.mxu0 0
        %3198 = vmatprep.subr.bf16.mxu0 0
        %3199 = vmatpush1.bf16.msra.mxu0 0
        %3200 = vmatprep.subr.bf16.mxu0 0
        %3201 = vmatpush1.bf16.msra.mxu0 0
        %3202 = vmatprep.subr.bf16.mxu0 0
        %3203 = vmatpush1.bf16.msra.mxu0 0
        %3204 = vmatprep.subr.bf16.mxu0 0
        %3205 = vmatpush1.bf16.msra.mxu0 0
        %3206 = vmatprep.subr.bf16.mxu0 0
        %3207 = vmatpush1.bf16.msra.mxu0 0
        %3208 = vmatprep.subr.bf16.mxu0 0
        %3209 = vmatpush1.bf16.msra.mxu0 0
        %3210 = vmatprep.subr.bf16.mxu0 0
        %3211 = vmatpush1.bf16.msra.mxu0 0
        %3212 = vmatprep.subr.bf16.mxu0 0
        %3213 = vmatpush1.bf16.msra.mxu0 0
        %3214 = vmatprep.subr.bf16.mxu0 0
        %3215 = vmatpush1.bf16.msra.mxu0 0
        %3216 = vmatprep.subr.bf16.mxu0 0
        %3217 = vmatpush1.bf16.msra.mxu0 0
        %3218 = vmatprep.mubr.bf16.mxu0 0
        %3219 = vmatmul.mubr.bf16.gmra.mrb[0].mxu0 %v3184
        %v3220 = vpop.f32.mrb[0].mxu0
        %v3221 = vadd.f32 0.0, %v3220
        %v3222 = vpop.f32.mrb[0].mxu0
        %v3223 = vpop.f32.mrb[0].mxu0
        %v3224 = vpop.f32.mrb[0].mxu0
        %3225 = vdwg.mxu0
        %v3226 = vpack.c.bf16 %v3221, %v3175
        %3228 = vrot.lane.b32.xlu0 %v3226, 24
        %v3229 = vpop.permute.xlu0 %3228
        %3231 = vst.msk [vmem:[#allocation2] sm:$0xff] %vm2003, %v3229
        %v3232 = vld [vmem:[#allocation2] sm:$0xff]
        %v3233 = vld [vmem:[%s779] sm:$0xf]
        %v3234 = vld [vmem:[%s779 + $0x4] sm:$0xf]
        %v3235 = vld [vmem:[%s779 + $0x8] sm:$0xf]
        %v3236 = vld [vmem:[%s779 + $0xc] sm:$0xf]
        %v3237 = vlaneseq
        %v3238 = vshrl.u32 %v3237, 7
        %v3239 = vsub.s32 5, %v3238
        %v3240 = vrot.slane %v939, %v3239
        %v3245 = vunpack.c.l.b16 %v3233
        %v3246 = vunpack.c.l.b16 %v3234
        %v3247 = vunpack.c.l.b16 %v3235
        %v3248 = vunpack.c.l.b16 %v3236
        %v3249 = vpack.c.b16 %v3246, %v3245
        %v3250 = vpack.c.b16 %v3248, %v3247
        %v3254 = vsel %vm965, %v3232, 0
        %3256 = vmatprep.subr.bf16.mxu0 0
        %3257 = vmatpush1.bf16.msra.mxu0 %v3249
        %3258 = vmatprep.subr.bf16.mxu0 0
        %3259 = vmatpush1.bf16.msra.mxu0 %v3250
        %3260 = vmatprep.subr.bf16.mxu0 0
        %3261 = vmatpush1.bf16.msra.mxu0 0
        %3262 = vmatprep.subr.bf16.mxu0 0
        %3263 = vmatpush1.bf16.msra.mxu0 0
        %3264 = vmatprep.subr.bf16.mxu0 0
        %3265 = vmatpush1.bf16.msra.mxu0 0
        %3266 = vmatprep.subr.bf16.mxu0 0
        %3267 = vmatpush1.bf16.msra.mxu0 0
        %3268 = vmatprep.subr.bf16.mxu0 0
        %3269 = vmatpush1.bf16.msra.mxu0 0
        %3270 = vmatprep.subr.bf16.mxu0 0
        %3271 = vmatpush1.bf16.msra.mxu0 0
        %3272 = vmatprep.subr.bf16.mxu0 0
        %3273 = vmatpush1.bf16.msra.mxu0 0
        %3274 = vmatprep.subr.bf16.mxu0 0
        %3275 = vmatpush1.bf16.msra.mxu0 0
        %3276 = vmatprep.subr.bf16.mxu0 0
        %3277 = vmatpush1.bf16.msra.mxu0 0
        %3278 = vmatprep.subr.bf16.mxu0 0
        %3279 = vmatpush1.bf16.msra.mxu0 0
        %3280 = vmatprep.subr.bf16.mxu0 0
        %3281 = vmatpush1.bf16.msra.mxu0 0
        %3282 = vmatprep.subr.bf16.mxu0 0
        %3283 = vmatpush1.bf16.msra.mxu0 0
        %3284 = vmatprep.subr.bf16.mxu0 0
        %3285 = vmatpush1.bf16.msra.mxu0 0
        %3286 = vmatprep.subr.bf16.mxu0 0
        %3287 = vmatpush1.bf16.msra.mxu0 0
        %3288 = vmatprep.mubr.bf16.mxu0 0
        %3289 = vmatmul.mubr.bf16.gmra.mrb[0].mxu0 %v3254
        %v3290 = vpop.f32.mrb[0].mxu0
        %v3291 = vadd.f32 %v3240, %v3290
        %v3292 = vpop.f32.mrb[0].mxu0
        %v3293 = vpop.f32.mrb[0].mxu0
        %v3294 = vadd.f32 %v3240, %v3293
        %v3295 = vpop.f32.mrb[0].mxu0
        %3296 = vdwg.mxu0
        %v3297 = vadd.f32 %v2109, %v3291
        %v3298 = vadd.f32 %v2110, %v3294
        %v3299 = vsel %vm965, %v3297, 0.0
        %3300 = vadd.xlane.f32.xlu0 %v3299
        %v3301 = vpop.xlane.xlu0 %3300
        %v3302 = vsel %vm965, %v3298, 0.0
        %3303 = vadd.xlane.f32.xlu0 %v3302
        %v3304 = vpop.xlane.xlu0 %3303
        %v3305 = vmul.f32 %v3301, %v2078
        %v3306 = vmul.f32 %v3304, %v2078
        %v3307 = vsub.f32 %v3297, %v3305
        %v3308 = vsub.f32 %v3298, %v3306
        %v3309 = vmul.f32 %v3307, %v3307
        %v3310 = vmul.f32 %v3308, %v3308
        %v3311 = vsel %vm965, %v3309, 0.0
        %3312 = vadd.xlane.f32.xlu0 %v3311
        %v3313 = vpop.xlane.xlu0 %3312
        %v3314 = vsel %vm965, %v3310, 0.0
        %3315 = vadd.xlane.f32.xlu0 %v3314
        %v3316 = vpop.xlane.xlu0 %3315
        %v3317 = vmul.f32 %v3313, %v2078
        %v3318 = vmul.f32 %v3316, %v2078
        %v3319 = vadd.f32 %v3317, 1e-05
        %v3320 = vadd.f32 %v3318, 1e-05
        %v3321 = vrsqrt.pop %v3319
        %v3322 = vrsqrt.pop %v3320
        %v3323 = vmul.f32 %v3307, %v3321
        %v3324 = vmul.f32 %v3308, %v3322
        %v3325 = vlaneseq
        %v3326 = vshrl.u32 %v3325, 7
        %v3327 = vsub.s32 1, %v3326
        %v3328 = vrot.slane %v940, %v3327
        %v3329 = vmul.f32 %v3323, %v3328
        %v3330 = vmul.f32 %v3324, %v3328
        %v3331 = vlaneseq
        %v3332 = vshrl.u32 %v3331, 7
        %v3333 = vsub.s32 2, %v3332
        %v3334 = vrot.slane %v940, %v3333
        %v3335 = vadd.f32 %v3329, %v3334
        %v3336 = vadd.f32 %v3330, %v3334
        %v3337 = vpack.c.bf16 %v3336, %v3335
        %v3338 = vld [vmem:[%s788] sm:$0xf]
        %v3339 = vld [vmem:[%s788 + $0x4] sm:$0xf]
        %v3340 = vld [vmem:[%s788 + $0x8] sm:$0xf]
        %v3341 = vld [vmem:[%s788 + $0xc] sm:$0xf]
        %v3342 = vld [vmem:[%s910] sm:$0x1]
        %v3344 = vlaneseq
        %v3345 = vshrl.u32 %v3344, 7
        %v3346 = vsub.s32 0, %v3345
        %v3347 = vrot.slane %v3342, %v3346
        %v3353 = vunpack.c.l.b16 %v3338
        %v3354 = vunpack.c.l.b16 %v3339
        %v3355 = vunpack.c.l.b16 %v3340
        %v3356 = vunpack.c.l.b16 %v3341
        %v3357 = vpack.c.b16 %v3354, %v3353
        %v3358 = vpack.c.b16 %v3356, %v3355
        %v3362 = vsel %vm965, %v3337, 0
        %3364 = vmatprep.subr.bf16.mxu0 0
        %3365 = vmatpush1.bf16.msra.mxu0 %v3357
        %3366 = vmatprep.subr.bf16.mxu0 0
        %3367 = vmatpush1.bf16.msra.mxu0 %v3358
        %3368 = vmatprep.subr.bf16.mxu0 0
        %3369 = vmatpush1.bf16.msra.mxu0 0
        %3370 = vmatprep.subr.bf16.mxu0 0
        %3371 = vmatpush1.bf16.msra.mxu0 0
        %3372 = vmatprep.subr.bf16.mxu0 0
        %3373 = vmatpush1.bf16.msra.mxu0 0
        %3374 = vmatprep.subr.bf16.mxu0 0
        %3375 = vmatpush1.bf16.msra.mxu0 0
        %3376 = vmatprep.subr.bf16.mxu0 0
        %3377 = vmatpush1.bf16.msra.mxu0 0
        %3378 = vmatprep.subr.bf16.mxu0 0
        %3379 = vmatpush1.bf16.msra.mxu0 0
        %3380 = vmatprep.subr.bf16.mxu0 0
        %3381 = vmatpush1.bf16.msra.mxu0 0
        %3382 = vmatprep.subr.bf16.mxu0 0
        %3383 = vmatpush1.bf16.msra.mxu0 0
        %3384 = vmatprep.subr.bf16.mxu0 0
        %3385 = vmatpush1.bf16.msra.mxu0 0
        %3386 = vmatprep.subr.bf16.mxu0 0
        %3387 = vmatpush1.bf16.msra.mxu0 0
        %3388 = vmatprep.subr.bf16.mxu0 0
        %3389 = vmatpush1.bf16.msra.mxu0 0
        %3390 = vmatprep.subr.bf16.mxu0 0
        %3391 = vmatpush1.bf16.msra.mxu0 0
        %3392 = vmatprep.subr.bf16.mxu0 0
        %3393 = vmatpush1.bf16.msra.mxu0 0
        %3394 = vmatprep.subr.bf16.mxu0 0
        %3395 = vmatpush1.bf16.msra.mxu0 0
        %3396 = vmatprep.mubr.bf16.mxu0 0
        %3397 = vmatmul.mubr.bf16.gmra.mrb[0].mxu0 %v3362
        %v3398 = vpop.f32.mrb[0].mxu0
        %v3399 = vadd.f32 %v3347, %v3398
        %v3400 = vpop.f32.mrb[0].mxu0
        %v3401 = vpop.f32.mrb[0].mxu0
        %v3402 = vadd.f32 %v3347, %v3401
        %v3403 = vpop.f32.mrb[0].mxu0
        %3404 = vdwg.mxu0
        %v3405 = vmax.f32 %v3399, 0.0
        %v3406 = vmax.f32 %v3402, 0.0
        %v3407 = vpack.c.bf16 %v3406, %v3405
        %v3408 = vld [vmem:[%s915] sm:$0xf]
        %v3409 = vld [vmem:[%s915 + $0x4] sm:$0xf]
        %v3410 = vld [vmem:[%s915 + $0x8] sm:$0xf]
        %v3411 = vld [vmem:[%s915 + $0xc] sm:$0xf]
        %v3412 = vld [vmem:[%s915 + $0x10] sm:$0xf]
        %v3413 = vld [vmem:[%s915 + $0x14] sm:$0xf]
        %v3414 = vld [vmem:[%s915 + $0x18] sm:$0xf]
        %v3415 = vld [vmem:[%s915 + $0x1c] sm:$0xf]
        %v3424 = vunpack.c.l.b16 %v3408
        %v3425 = vunpack.c.l.b16 %v3409
        %v3426 = vunpack.c.l.b16 %v3410
        %v3427 = vunpack.c.l.b16 %v3411
        %v3428 = vunpack.c.l.b16 %v3412
        %v3429 = vunpack.c.l.b16 %v3413
        %v3430 = vunpack.c.l.b16 %v3414
        %v3431 = vunpack.c.l.b16 %v3415
        %v3432 = vpack.c.b16 %v3425, %v3424
        %v3433 = vpack.c.b16 %v3427, %v3426
        %v3434 = vpack.c.b16 %v3429, %v3428
        %v3435 = vpack.c.b16 %v3431, %v3430
        %vm3440 = vcmask 523264
        %v3442 = vsel %vm3440, %v3407, 0
        %3444 = vmatprep.subr.bf16.mxu0 0
        %3445 = vmatpush1.bf16.msra.mxu0 %v3432
        %3446 = vmatprep.subr.bf16.mxu0 0
        %3447 = vmatpush1.bf16.msra.mxu0 %v3433
        %3448 = vmatprep.subr.bf16.mxu0 0
        %3449 = vmatpush1.bf16.msra.mxu0 %v3434
        %3450 = vmatprep.subr.bf16.mxu0 0
        %3451 = vmatpush1.bf16.msra.mxu0 %v3435
        %3452 = vmatprep.subr.bf16.mxu0 0
        %3453 = vmatpush1.bf16.msra.mxu0 0
        %3454 = vmatprep.subr.bf16.mxu0 0
        %3455 = vmatpush1.bf16.msra.mxu0 0
        %3456 = vmatprep.subr.bf16.mxu0 0
        %3457 = vmatpush1.bf16.msra.mxu0 0
        %3458 = vmatprep.subr.bf16.mxu0 0
        %3459 = vmatpush1.bf16.msra.mxu0 0
        %3460 = vmatprep.subr.bf16.mxu0 0
        %3461 = vmatpush1.bf16.msra.mxu0 0
        %3462 = vmatprep.subr.bf16.mxu0 0
        %3463 = vmatpush1.bf16.msra.mxu0 0
        %3464 = vmatprep.subr.bf16.mxu0 0
        %3465 = vmatpush1.bf16.msra.mxu0 0
        %3466 = vmatprep.subr.bf16.mxu0 0
        %3467 = vmatpush1.bf16.msra.mxu0 0
        %3468 = vmatprep.subr.bf16.mxu0 0
        %3469 = vmatpush1.bf16.msra.mxu0 0
        %3470 = vmatprep.subr.bf16.mxu0 0
        %3471 = vmatpush1.bf16.msra.mxu0 0
        %3472 = vmatprep.subr.bf16.mxu0 0
        %3473 = vmatpush1.bf16.msra.mxu0 0
        %3474 = vmatprep.subr.bf16.mxu0 0
        %3475 = vmatpush1.bf16.msra.mxu0 0
        %3476 = vmatprep.mubr.bf16.mxu0 0
        %3477 = vmatmul.mubr.bf16.gmra.mrb[0].mxu0 %v3442
        %v3478 = vpop.f32.mrb[0].mxu0
        %v3479 = vadd.f32 0.0, %v3478
        %v3480 = vpop.f32.mrb[0].mxu0
        %v3481 = vpop.f32.mrb[0].mxu0
        %v3482 = vadd.f32 0.0, %v3481
        %v3483 = vpop.f32.mrb[0].mxu0
        %3484 = vdwg.mxu0
        %v3485 = vadd.f32 %v3335, %v3479
        %v3486 = vadd.f32 %v3336, %v3482
        %v3487 = vlaneseq
        %v3488 = vshrl.u32 %v3487, 7
        %v3489 = vsub.s32 6, %v3488
        %v3490 = vrot.slane %v939, %v3489
        %v3491 = vadd.f32 %v3485, %v3490
        %v3492 = vadd.f32 %v3486, %v3490
        %v3493 = vsel %vm965, %v3491, 0.0
        %3494 = vadd.xlane.f32.xlu0 %v3493
        %v3495 = vpop.xlane.xlu0 %3494
        %v3496 = vsel %vm965, %v3492, 0.0
        %3497 = vadd.xlane.f32.xlu0 %v3496
        %v3498 = vpop.xlane.xlu0 %3497
        %v3499 = vmul.f32 %v3495, %v2078
        %v3500 = vmul.f32 %v3498, %v2078
        %v3501 = vsub.f32 %v3491, %v3499
        %v3502 = vsub.f32 %v3492, %v3500
        %v3503 = vmul.f32 %v3501, %v3501
        %v3504 = vmul.f32 %v3502, %v3502
        %v3505 = vsel %vm965, %v3503, 0.0
        %3506 = vadd.xlane.f32.xlu0 %v3505
        %v3507 = vpop.xlane.xlu0 %3506
        %v3508 = vsel %vm965, %v3504, 0.0
        %3509 = vadd.xlane.f32.xlu0 %v3508
        %v3510 = vpop.xlane.xlu0 %3509
        %v3511 = vmul.f32 %v3507, %v2078
        %v3512 = vmul.f32 %v3510, %v2078
        %v3513 = vadd.f32 %v3511, 1e-05
        %v3514 = vadd.f32 %v3512, 1e-05
        %v3515 = vrsqrt.pop %v3513
        %v3516 = vrsqrt.pop %v3514
        %v3517 = vmul.f32 %v3501, %v3515
        %v3518 = vmul.f32 %v3502, %v3516
        %v3519 = vlaneseq
        %v3520 = vshrl.u32 %v3519, 7
        %v3521 = vsub.s32 3, %v3520
        %v3522 = vrot.slane %v940, %v3521
        %v3523 = vmul.f32 %v3517, %v3522
        %v3524 = vmul.f32 %v3518, %v3522
        %v3525 = vlaneseq
        %v3526 = vshrl.u32 %v3525, 7
        %v3527 = vsub.s32 4, %v3526
        %v3528 = vrot.slane %v940, %v3527
        %v3529 = vadd.f32 %v3523, %v3528
        %v3530 = vadd.f32 %v3524, %v3528
        %p3531 = scmp.ne.s32.totalorder %s36, 1
        // Predicated region
        $region129: #{tpu_custom_call.1} parent=83 // pred_check
          %p3532 = pneg %p3531
        $region130: #{tpu_custom_call.1} parent=83 // pred_check_branch
          %3534 = sbr.rel (%p3532) target = $region132
        $region131: #{tpu_custom_call.1} parent=83 // pred_region
          %3535 = vst.msk [vmem:[#allocation17] sm:$0xff] %vm965, %v3529
          %3536 = vst.msk [vmem:[#allocation17 + $0x8] sm:$0xff] %vm965, %v3530
        $region132: #{tpu_custom_call.1} parent=83 // pred_fallthru
          _
        %p3537 = scmp.eq.s32.totalorder %s36, 1
        // Predicated region
        $region133: #{tpu_custom_call.1} parent=83 // pred_check
          %p3538 = pneg %p3537
        $region134: #{tpu_custom_call.1} parent=83 // pred_check_branch
          %3540 = sbr.rel (%p3538) target = $region136
        $region135: #{tpu_custom_call.1} parent=83 // pred_region
          %v3541 = vld [vmem:[%s4] sm:$0x3]
          %v3542 = vsel %vm965, %v3529, 0.0
          %3543 = vadd.xlane.f32.xlu0 %v3542
          %v3544 = vpop.xlane.xlu0 %3543
          %v3545 = vsel %vm965, %v3530, 0.0
          %3546 = vadd.xlane.f32.xlu0 %v3545
          %v3547 = vpop.xlane.xlu0 %3546
          %v3548 = vmul.f32 %v3544, %v2078
          %v3549 = vmul.f32 %v3547, %v2078
          %v3550 = vsub.f32 %v3529, %v3548
          %v3551 = vsub.f32 %v3530, %v3549
          %v3552 = vmul.f32 %v3550, %v3550
          %v3553 = vmul.f32 %v3551, %v3551
          %v3554 = vsel %vm965, %v3552, 0.0
          %3555 = vadd.xlane.f32.xlu0 %v3554
          %v3556 = vpop.xlane.xlu0 %3555
          %v3557 = vsel %vm965, %v3553, 0.0
          %3558 = vadd.xlane.f32.xlu0 %v3557
          %v3559 = vpop.xlane.xlu0 %3558
          %v3560 = vmul.f32 %v3556, %v2078
          %v3561 = vmul.f32 %v3559, %v2078
          %v3562 = vadd.f32 %v3560, 1e-05
          %v3563 = vadd.f32 %v3561, 1e-05
          %v3564 = vrsqrt.pop %v3562
          %v3565 = vrsqrt.pop %v3563
          %v3566 = vmul.f32 %v3550, %v3564
          %v3567 = vmul.f32 %v3551, %v3565
          %v3568 = vlaneseq
          %v3569 = vshrl.u32 %v3568, 7
          %v3570 = vsub.s32 0, %v3569
          %v3571 = vrot.slane %v3541, %v3570
          %v3572 = vmul.f32 %v3566, %v3571
          %v3573 = vmul.f32 %v3567, %v3571
          %v3574 = vlaneseq
          %v3575 = vshrl.u32 %v3574, 7
          %v3576 = vsub.s32 1, %v3575
          %v3577 = vrot.slane %v3541, %v3576
          %v3578 = vadd.f32 %v3572, %v3577
          %v3579 = vadd.f32 %v3573, %v3577
          %3580 = vst.msk [vmem:[#allocation17] sm:$0xff] %vm965, %v3578
          %3581 = vst.msk [vmem:[#allocation17 + $0x8] sm:$0xff] %vm965, %v3579
        $region136: #{tpu_custom_call.1} parent=83 // pred_fallthru
          _
        // Predicated region
        $region137: #{tpu_custom_call.1} parent=83 // pred_check
          %p3582 = pneg %p472
        $region138: #{tpu_custom_call.1} parent=83 // pred_check_branch
          %3584 = sbr.rel (%p3582) target = $region140
        $region139: #{tpu_custom_call.1} parent=83 // pred_region
          %s3585 = smul.u32 2, %s35
          %s3587 = ssub.s32 256, 256
          %3588 = vsyncadd [#allocation5], %s3587
          %s3589 = smul.addr %s3585, 128
          %s3590 = scalar_lea.hbm %s16, %s3589
          %s3591 = sshll.u32 [#allocation17], 4
          %s3592 = int_to_ptr.vmem [resolvable:$true] %s3591
          %3597 = dma.vmem_to_hbm [thread:$0]  %s3592, 256, %s3590, [#allocation5], 128, 128, 8
        $region140: #{tpu_custom_call.1} parent=83 // pred_fallthru
          _
        // Predicated region
        $region141: #{tpu_custom_call.1} parent=83 // pred_check
          %p3598 = pneg %p472
        $region142: #{tpu_custom_call.1} parent=83 // pred_check_branch
          %3600 = sbr.rel (%p3598) target = $region144
        $region143: #{tpu_custom_call.1} parent=83 // pred_region
          %3601 = dma.done [#allocation5], 256
        $region144: #{tpu_custom_call.1} parent=83 // pred_fallthru
          _
      $region84: #{tpu_custom_call.1} parent=5 // pred_fallthru
        _
      %p3602 = scmp.le.s32.totalorder 2, %s26
      // Predicated region
      $region145: #{tpu_custom_call.1} parent=5 // pred_check
        %p3603 = pneg %p3602
      $region146: #{tpu_custom_call.1} parent=5 // pred_check_branch
        %3605 = sbr.rel (%p3603) target = $region148
      $region147: #{tpu_custom_call.1} parent=5 // pred_region
        %s3606 = ssub.s32 %s26, 2
      $region148: #{tpu_custom_call.1} parent=5 // pred_fallthru
        _
    $region6: #{tpu_custom_call.1} parent=1 // loop_footer
      %s30 = sadd.s32 1, %s26
    $region7: #{tpu_custom_call.1} parent=1 // loop_footer_branch
      %25 = sbr.rel target = $region3
    $region8: #{tpu_custom_call.1} parent=1 // loop_exit
      _
    %3607 = vsyncpa [#allocation4], 1
    %s3608 = scalar_lea.sflag [#allocation4], 1
    %3609 = vsyncpa %s3608, 1
    %3610 = vsyncpa [#allocation7], 1
    %3611 = vsyncpa [#allocation10], 1
    %3612 = vsyncpa [#allocation5], 1
    %s3613 = scalar_lea.sflag [#allocation5], 1
    %3614 = vsyncpa %s3613, 1

</llo_original>
